<compile_context>
chip_gen: v7x
topology: tpu7x:2x2x1
jax: 0.10.0
libtpu: 0.0.40
codegen_flags: <defaults>
</compile_context>

<pallas_src>
import math

import numpy as np

import jax
import jax.numpy as jnp
from jax.experimental import pallas as pl
from jax.experimental.pallas import tpu as pltpu

EPS = 1e-5      # PyTorch BatchNorm1d default eps
KSIZE = 4       # Conv1d kernel size
STRIDE = 2
PAD = 1


def _conv_out_len(l):
    return (l + 2 * PAD - KSIZE) // STRIDE + 1


def _conv_mix_matrix_np(w, l_in, l_out):
    """PyTorch Conv1d weight (Cout, Cin, K) -> dense mixing matrix M of shape
    (l_in*Cin, l_out*Cout).

    For activations stored position-major / channel-minor along lanes
    (a_flat[b, j*Cin + ci] == a[b, ci, j]), the whole stride-2 / pad-1 / k=4
    convolution of the layer is one matmul:  y_flat = a_flat @ M,
    with y_flat[b, q*Cout + co] == y[b, co, q]."""
    w = np.asarray(w, np.float32)
    cout, cin, k = w.shape
    m = np.zeros((l_in * cin, l_out * cout), np.float32)
    for q in range(l_out):
        for kk in range(k):
            j = STRIDE * q - PAD + kk
            if 0 <= j < l_in:
                m[j * cin:(j + 1) * cin, q * cout:(q + 1) * cout] = w[:, :, kk].T
    return m


def _make_fused_kernel(batch, louts, chans):
    """Single fused kernel for static (batch, per-layer lengths, channels)."""
    layers = list(zip(louts, chans))
    l4, c4 = layers[-1]

    def chan_sum(l, c):
        # (l*c, c) 0/1 matrix: column co sums lanes q*c+co over all positions q.
        r = jax.lax.broadcasted_iota(jnp.int32, (l * c, c), 0)
        j = jax.lax.broadcasted_iota(jnp.int32, (l * c, c), 1)
        return jnp.where((r % c) == j, jnp.float32(1.0), jnp.float32(0.0))

    def chan_bcast(l, c):
        # (c, l*c) 0/1 matrix: broadcasts a per-channel scalar back onto every
        # position lane of that channel.
        r = jax.lax.broadcasted_iota(jnp.int32, (c, l * c), 0)
        j = jax.lax.broadcasted_iota(jnp.int32, (c, l * c), 1)
        return jnp.where((j % c) == r, jnp.float32(1.0), jnp.float32(0.0))

    def kernel(x_ref, m1_ref, m2_ref, m3_ref, m4_ref, o_ref):
        a = x_ref[...]                                    # (B, l0) == flattened (B, Cin=1, l0)
        for m_ref, (l_out, c_out) in zip((m1_ref, m2_ref, m3_ref, m4_ref), layers):
            # ---- Conv1d(k=4, s=2, p=1): ONE matmul in the lane-flattened layout ----
            y = jnp.dot(a, m_ref[...],
                        preferred_element_type=jnp.float32)        # (B, l_out*c_out)

            # ---- BatchNorm1d (training-mode batch stats, gamma=1, beta=0) + ReLU ----
            g = chan_sum(l_out, c_out)                             # (l_out*c_out, c_out)
            gt = chan_bcast(l_out, c_out)                          # (c_out, l_out*c_out)
            inv_n = jnp.float32(1.0 / (batch * l_out))
            col = jnp.sum(y, axis=0, keepdims=True)                # (1, l_out*c_out)
            mean_c = jnp.dot(col, g,
                             preferred_element_type=jnp.float32) * inv_n   # (1, c_out)
            mean = jnp.dot(mean_c, gt,
                           preferred_element_type=jnp.float32)     # per-channel mean, bcast
            d = y - mean
            var_c = jnp.dot(jnp.sum(d * d, axis=0, keepdims=True), g,
                            preferred_element_type=jnp.float32) * inv_n    # (1, c_out)
            inv_c = jax.lax.rsqrt(var_c + EPS)                     # EUP
            inv = jnp.dot(inv_c, gt, preferred_element_type=jnp.float32)
            a = jnp.maximum(d * inv, 0.0)                          # (B, l_out*c_out)

        # ---- AdaptiveAvgPool1d(1) + Flatten: per-channel mean over the l4 positions ----
        g4 = chan_sum(l4, c4)
        o_ref[...] = jnp.dot(a, g4,
                             preferred_element_type=jnp.float32) * jnp.float32(1.0 / l4)

    return kernel


def simconv4_prepare(weights, batch, length):
    """One-time (per model / input shape) constant prep with numpy: the four dense
    conv mixing matrices.  No per-forward XLA ops."""
    chans = tuple(int(np.asarray(w).shape[0]) for w in weights)
    louts = []
    l = length
    for _ in range(4):
        l = _conv_out_len(l)
        louts.append(l)
    louts = tuple(louts)

    mats = []
    l_in = length
    for w, l_out in zip(weights, louts):
        mats.append(jnp.asarray(_conv_mix_matrix_np(w, l_in, l_out)))
        l_in = l_out

    return dict(batch=batch, length=length, louts=louts, chans=chans, mats=mats)


def simconv4_apply(x, params):
    """SimConv4.forward: view(B,1,-1) -> 4x(conv,bn,relu) -> avg-pool -> flatten,
    executed as a single fused Pallas kernel (no per-forward host prep)."""
    batch = params["batch"]
    l0 = params["length"]
    c4 = params["chans"][3]

    xf = x.reshape(batch, l0).astype(jnp.float32)   # x.view(B, 1, -1); Cin == 1 so this
                                                    # IS the flattened (B, L*Cin) layout.

    kernel = _make_fused_kernel(batch, params["louts"], params["chans"])
    vmem = pl.BlockSpec(memory_space=pltpu.MemorySpace.VMEM)
    return pl.pallas_call(
        kernel,
        out_shape=jax.ShapeDtypeStruct((batch, c4), jnp.float32),
        in_specs=[vmem] * 5,
        out_specs=vmem,
    )(xf, *params["mats"])


def simconv4_forward(x, weights):
    """Convenience wrapper: prepare constants + apply (prefer prepare-once + jit)."""
    batch = x.shape[0]
    length = int(np.prod(x.shape[1:]))
    return simconv4_apply(x, simconv4_prepare(weights, batch, length))


def reference_forward(x, weights):
    """Pure-JAX reference of the same forward (sanity check)."""
    b = x.shape[0]
    h = x.reshape(b, 1, -1).astype(jnp.float32)
    for w in weights:
        y = jax.lax.conv_general_dilated(
            h, w, window_strides=(STRIDE,), padding=((PAD, PAD),),
            dimension_numbers=("NCH", "OIH", "NCH"))
        mean = jnp.mean(y, axis=(0, 2), keepdims=True)
        var = jnp.mean((y - mean) ** 2, axis=(0, 2), keepdims=True)
        h = jnp.maximum((y - mean) * jax.lax.rsqrt(var + EPS), 0.0)
    return jnp.mean(h, axis=2)


def xavier_normal(key, cout, cin, k):
    fan_in = cin * k
    fan_out = cout * k
    std = math.sqrt(2.0 / (fan_in + fan_out))
    return std * jax.random.normal(key, (cout, cin, k), jnp.float32)


if __name__ == "__main__":
    key = jax.random.PRNGKey(0)
    kx, k1, k2, k3, k4 = jax.random.split(key, 5)

    # Input: batch=2, 64 time-steps (forward views it as (2, 1, 64)).
    x = jax.random.normal(kx, (2, 64), jnp.float32)

    chan = [(1, 8), (8, 16), (16, 32), (32, 64)]
    weights = [xavier_normal(k, co, ci, KSIZE)
               for k, (ci, co) in zip((k1, k2, k3, k4), chan)]

    # Constants (conv mixing matrices) are prepared once and closed over by jit, so
    # the steady-state forward is exactly one pallas_call.
    params = simconv4_prepare(weights, batch=x.shape[0], length=x.shape[1])
    fwd = jax.jit(lambda xx: simconv4_apply(xx, params))

    out = jax.block_until_ready(fwd(x))

    ref = reference_forward(x, weights)
    assert out.shape == (2, 64), out.shape
    assert bool(jnp.all(jnp.isfinite(out)))
    assert bool(jnp.allclose(out, ref, rtol=2e-2, atol=2e-2)), \
        float(jnp.max(jnp.abs(out - ref)))
    print("KERNEL_OK")
    # TODO(synk): BatchNorm running-stat buffer updates (training-mode side effect) are
    # not materialized; they do not affect the returned activations.
</pallas_src>

<mosaic_0001>
module attributes {stable_mosaic.version = 11 : i64} {
  func.func @kernel(%arg0: memref<2x64xf32, #tpu.memory_space<vmem>>, %arg1: memref<64x256xf32, #tpu.memory_space<vmem>>, %arg2: memref<256x256xf32, #tpu.memory_space<vmem>>, %arg3: memref<256x256xf32, #tpu.memory_space<vmem>>, %arg4: memref<256x256xf32, #tpu.memory_space<vmem>>, %arg5: memref<2x64xf32, #tpu.memory_space<vmem>>) attributes {dimension_semantics = [], scalar_prefetch = 0 : i64, scratch_operands = 0 : i64, tpu.core_type = #tpu.core_type<tc>} {
    %c0 = arith.constant 0 : index
    %c0_0 = arith.constant 0 : index
    %0 = vector.load %arg0[%c0, %c0_0] : memref<2x64xf32, #tpu.memory_space<vmem>>, vector<2x64xf32>
    %c0_1 = arith.constant 0 : index
    %c0_2 = arith.constant 0 : index
    %1 = vector.load %arg1[%c0_1, %c0_2] : memref<64x256xf32, #tpu.memory_space<vmem>>, vector<64x256xf32>
    %cst = arith.constant dense<0.000000e+00> : vector<2x256xf32>
    %2 = tpu.matmul %0, %1, %cst {dimension_numbers = #tpu.dot_dimension_numbers<[1], [0], [0], [1], [0, 0, 1, 1], [], []>} : vector<2x64xf32>, vector<64x256xf32>, vector<2x256xf32> -> vector<2x256xf32>
    %3 = tpu.iota {dimensions = array<i32: 0>} : vector<256x8xi32>
    %4 = tpu.iota {dimensions = array<i32: 1>} : vector<256x8xi32>
    %c8_i32 = arith.constant 8 : i32
    %c0_i32 = arith.constant 0 : i32
    %5 = arith.cmpi eq, %c8_i32, %c0_i32 : i32
    %c1_i32 = arith.constant 1 : i32
    %6 = arith.select %5, %c1_i32, %c8_i32 : i32
    %7 = vector.broadcast %6 : i32 to vector<256x8xi32>
    %8 = arith.remsi %3, %7 : vector<256x8xi32>
    %c0_i32_3 = arith.constant 0 : i32
    %9 = vector.broadcast %c0_i32_3 : i32 to vector<256x8xi32>
    %10 = arith.cmpi ne, %8, %9 : vector<256x8xi32>
    %c0_i32_4 = arith.constant 0 : i32
    %11 = vector.broadcast %c0_i32_4 : i32 to vector<256x8xi32>
    %12 = arith.cmpi slt, %8, %11 : vector<256x8xi32>
    %c0_i32_5 = arith.constant 0 : i32
    %13 = arith.cmpi slt, %6, %c0_i32_5 : i32
    %14 = vector.broadcast %13 : i1 to vector<256x8xi1>
    %15 = vector.broadcast %14 : vector<256x8xi1> to vector<256x8xi1>
    %16 = arith.xori %12, %15 : vector<256x8xi1>
    %17 = arith.andi %16, %10 : vector<256x8xi1>
    %18 = vector.broadcast %6 : i32 to vector<256x8xi32>
    %19 = arith.addi %8, %18 : vector<256x8xi32>
    %20 = arith.select %17, %19, %8 : vector<256x8xi1>, vector<256x8xi32>
    %21 = arith.cmpi eq, %20, %4 : vector<256x8xi32>
    %cst_6 = arith.constant 1.000000e+00 : f32
    %cst_7 = arith.constant 0.000000e+00 : f32
    %22 = vector.broadcast %cst_6 : f32 to vector<256x8xf32>
    %23 = vector.broadcast %cst_7 : f32 to vector<256x8xf32>
    %24 = arith.select %21, %22, %23 : vector<256x8xi1>, vector<256x8xf32>
    %25 = tpu.iota {dimensions = array<i32: 0>} : vector<8x256xi32>
    %26 = tpu.iota {dimensions = array<i32: 1>} : vector<8x256xi32>
    %c8_i32_8 = arith.constant 8 : i32
    %c0_i32_9 = arith.constant 0 : i32
    %27 = arith.cmpi eq, %c8_i32_8, %c0_i32_9 : i32
    %c1_i32_10 = arith.constant 1 : i32
    %28 = arith.select %27, %c1_i32_10, %c8_i32_8 : i32
    %29 = vector.broadcast %28 : i32 to vector<8x256xi32>
    %30 = arith.remsi %26, %29 : vector<8x256xi32>
    %c0_i32_11 = arith.constant 0 : i32
    %31 = vector.broadcast %c0_i32_11 : i32 to vector<8x256xi32>
    %32 = arith.cmpi ne, %30, %31 : vector<8x256xi32>
    %c0_i32_12 = arith.constant 0 : i32
    %33 = vector.broadcast %c0_i32_12 : i32 to vector<8x256xi32>
    %34 = arith.cmpi slt, %30, %33 : vector<8x256xi32>
    %c0_i32_13 = arith.constant 0 : i32
    %35 = arith.cmpi slt, %28, %c0_i32_13 : i32
    %36 = vector.broadcast %35 : i1 to vector<8x256xi1>
    %37 = vector.broadcast %36 : vector<8x256xi1> to vector<8x256xi1>
    %38 = arith.xori %34, %37 : vector<8x256xi1>
    %39 = arith.andi %38, %32 : vector<8x256xi1>
    %40 = vector.broadcast %28 : i32 to vector<8x256xi32>
    %41 = arith.addi %30, %40 : vector<8x256xi32>
    %42 = arith.select %39, %41, %30 : vector<8x256xi1>, vector<8x256xi32>
    %43 = arith.cmpi eq, %42, %25 : vector<8x256xi32>
    %cst_14 = arith.constant 1.000000e+00 : f32
    %cst_15 = arith.constant 0.000000e+00 : f32
    %44 = vector.broadcast %cst_14 : f32 to vector<8x256xf32>
    %45 = vector.broadcast %cst_15 : f32 to vector<8x256xf32>
    %46 = arith.select %43, %44, %45 : vector<8x256xi1>, vector<8x256xf32>
    %cst_16 = arith.constant dense<0.000000e+00> : vector<256xf32>
    %47 = vector.multi_reduction <add>, %2, %cst_16 [0] : vector<2x256xf32> to vector<256xf32>
    %48 = vector.shape_cast %47 : vector<256xf32> to vector<1x256xf32>
    %cst_17 = arith.constant dense<0.000000e+00> : vector<1x8xf32>
    %49 = tpu.matmul %48, %24, %cst_17 {dimension_numbers = #tpu.dot_dimension_numbers<[1], [0], [0], [1], [0, 0, 1, 1], [], []>} : vector<1x256xf32>, vector<256x8xf32>, vector<1x8xf32> -> vector<1x8xf32>
    %cst_18 = arith.constant 1.562500e-02 : f32
    %50 = vector.broadcast %cst_18 : f32 to vector<1x8xf32>
    %51 = arith.mulf %49, %50 : vector<1x8xf32>
    %cst_19 = arith.constant dense<0.000000e+00> : vector<1x256xf32>
    %52 = tpu.matmul %51, %46, %cst_19 {dimension_numbers = #tpu.dot_dimension_numbers<[1], [0], [0], [1], [0, 0, 1, 1], [], []>} : vector<1x8xf32>, vector<8x256xf32>, vector<1x256xf32> -> vector<1x256xf32>
    %53 = vector.broadcast %52 : vector<1x256xf32> to vector<2x256xf32>
    %54 = arith.subf %2, %53 : vector<2x256xf32>
    %55 = arith.mulf %54, %54 : vector<2x256xf32>
    %cst_20 = arith.constant dense<0.000000e+00> : vector<256xf32>
    %56 = vector.multi_reduction <add>, %55, %cst_20 [0] : vector<2x256xf32> to vector<256xf32>
    %57 = vector.shape_cast %56 : vector<256xf32> to vector<1x256xf32>
    %cst_21 = arith.constant dense<0.000000e+00> : vector<1x8xf32>
    %58 = tpu.matmul %57, %24, %cst_21 {dimension_numbers = #tpu.dot_dimension_numbers<[1], [0], [0], [1], [0, 0, 1, 1], [], []>} : vector<1x256xf32>, vector<256x8xf32>, vector<1x8xf32> -> vector<1x8xf32>
    %cst_22 = arith.constant 1.562500e-02 : f32
    %59 = vector.broadcast %cst_22 : f32 to vector<1x8xf32>
    %60 = arith.mulf %58, %59 : vector<1x8xf32>
    %cst_23 = arith.constant 9.99999974E-6 : f32
    %61 = vector.broadcast %cst_23 : f32 to vector<1x8xf32>
    %62 = arith.addf %60, %61 : vector<1x8xf32>
    %63 = math.rsqrt %62 : vector<1x8xf32>
    %cst_24 = arith.constant dense<0.000000e+00> : vector<1x256xf32>
    %64 = tpu.matmul %63, %46, %cst_24 {dimension_numbers = #tpu.dot_dimension_numbers<[1], [0], [0], [1], [0, 0, 1, 1], [], []>} : vector<1x8xf32>, vector<8x256xf32>, vector<1x256xf32> -> vector<1x256xf32>
    %65 = vector.broadcast %64 : vector<1x256xf32> to vector<2x256xf32>
    %66 = arith.mulf %54, %65 : vector<2x256xf32>
    %cst_25 = arith.constant 0.000000e+00 : f32
    %67 = vector.broadcast %cst_25 : f32 to vector<2x256xf32>
    %68 = arith.maximumf %66, %67 : vector<2x256xf32>
    %c0_26 = arith.constant 0 : index
    %c0_27 = arith.constant 0 : index
    %69 = vector.load %arg2[%c0_26, %c0_27] : memref<256x256xf32, #tpu.memory_space<vmem>>, vector<256x256xf32>
    %cst_28 = arith.constant dense<0.000000e+00> : vector<2x256xf32>
    %70 = tpu.matmul %68, %69, %cst_28 {dimension_numbers = #tpu.dot_dimension_numbers<[1], [0], [0], [1], [0, 0, 1, 1], [], []>} : vector<2x256xf32>, vector<256x256xf32>, vector<2x256xf32> -> vector<2x256xf32>
    %71 = tpu.iota {dimensions = array<i32: 0>} : vector<256x16xi32>
    %72 = tpu.iota {dimensions = array<i32: 1>} : vector<256x16xi32>
    %c16_i32 = arith.constant 16 : i32
    %c0_i32_29 = arith.constant 0 : i32
    %73 = arith.cmpi eq, %c16_i32, %c0_i32_29 : i32
    %c1_i32_30 = arith.constant 1 : i32
    %74 = arith.select %73, %c1_i32_30, %c16_i32 : i32
    %75 = vector.broadcast %74 : i32 to vector<256x16xi32>
    %76 = arith.remsi %71, %75 : vector<256x16xi32>
    %c0_i32_31 = arith.constant 0 : i32
    %77 = vector.broadcast %c0_i32_31 : i32 to vector<256x16xi32>
    %78 = arith.cmpi ne, %76, %77 : vector<256x16xi32>
    %c0_i32_32 = arith.constant 0 : i32
    %79 = vector.broadcast %c0_i32_32 : i32 to vector<256x16xi32>
    %80 = arith.cmpi slt, %76, %79 : vector<256x16xi32>
    %c0_i32_33 = arith.constant 0 : i32
    %81 = arith.cmpi slt, %74, %c0_i32_33 : i32
    %82 = vector.broadcast %81 : i1 to vector<256x16xi1>
    %83 = vector.broadcast %82 : vector<256x16xi1> to vector<256x16xi1>
    %84 = arith.xori %80, %83 : vector<256x16xi1>
    %85 = arith.andi %84, %78 : vector<256x16xi1>
    %86 = vector.broadcast %74 : i32 to vector<256x16xi32>
    %87 = arith.addi %76, %86 : vector<256x16xi32>
    %88 = arith.select %85, %87, %76 : vector<256x16xi1>, vector<256x16xi32>
    %89 = arith.cmpi eq, %88, %72 : vector<256x16xi32>
    %cst_34 = arith.constant 1.000000e+00 : f32
    %cst_35 = arith.constant 0.000000e+00 : f32
    %90 = vector.broadcast %cst_34 : f32 to vector<256x16xf32>
    %91 = vector.broadcast %cst_35 : f32 to vector<256x16xf32>
    %92 = arith.select %89, %90, %91 : vector<256x16xi1>, vector<256x16xf32>
    %93 = tpu.iota {dimensions = array<i32: 0>} : vector<16x256xi32>
    %94 = tpu.iota {dimensions = array<i32: 1>} : vector<16x256xi32>
    %c16_i32_36 = arith.constant 16 : i32
    %c0_i32_37 = arith.constant 0 : i32
    %95 = arith.cmpi eq, %c16_i32_36, %c0_i32_37 : i32
    %c1_i32_38 = arith.constant 1 : i32
    %96 = arith.select %95, %c1_i32_38, %c16_i32_36 : i32
    %97 = vector.broadcast %96 : i32 to vector<16x256xi32>
    %98 = arith.remsi %94, %97 : vector<16x256xi32>
    %c0_i32_39 = arith.constant 0 : i32
    %99 = vector.broadcast %c0_i32_39 : i32 to vector<16x256xi32>
    %100 = arith.cmpi ne, %98, %99 : vector<16x256xi32>
    %c0_i32_40 = arith.constant 0 : i32
    %101 = vector.broadcast %c0_i32_40 : i32 to vector<16x256xi32>
    %102 = arith.cmpi slt, %98, %101 : vector<16x256xi32>
    %c0_i32_41 = arith.constant 0 : i32
    %103 = arith.cmpi slt, %96, %c0_i32_41 : i32
    %104 = vector.broadcast %103 : i1 to vector<16x256xi1>
    %105 = vector.broadcast %104 : vector<16x256xi1> to vector<16x256xi1>
    %106 = arith.xori %102, %105 : vector<16x256xi1>
    %107 = arith.andi %106, %100 : vector<16x256xi1>
    %108 = vector.broadcast %96 : i32 to vector<16x256xi32>
    %109 = arith.addi %98, %108 : vector<16x256xi32>
    %110 = arith.select %107, %109, %98 : vector<16x256xi1>, vector<16x256xi32>
    %111 = arith.cmpi eq, %110, %93 : vector<16x256xi32>
    %cst_42 = arith.constant 1.000000e+00 : f32
    %cst_43 = arith.constant 0.000000e+00 : f32
    %112 = vector.broadcast %cst_42 : f32 to vector<16x256xf32>
    %113 = vector.broadcast %cst_43 : f32 to vector<16x256xf32>
    %114 = arith.select %111, %112, %113 : vector<16x256xi1>, vector<16x256xf32>
    %cst_44 = arith.constant dense<0.000000e+00> : vector<256xf32>
    %115 = vector.multi_reduction <add>, %70, %cst_44 [0] : vector<2x256xf32> to vector<256xf32>
    %116 = vector.shape_cast %115 : vector<256xf32> to vector<1x256xf32>
    %cst_45 = arith.constant dense<0.000000e+00> : vector<1x16xf32>
    %117 = tpu.matmul %116, %92, %cst_45 {dimension_numbers = #tpu.dot_dimension_numbers<[1], [0], [0], [1], [0, 0, 1, 1], [], []>} : vector<1x256xf32>, vector<256x16xf32>, vector<1x16xf32> -> vector<1x16xf32>
    %cst_46 = arith.constant 3.125000e-02 : f32
    %118 = vector.broadcast %cst_46 : f32 to vector<1x16xf32>
    %119 = arith.mulf %117, %118 : vector<1x16xf32>
    %cst_47 = arith.constant dense<0.000000e+00> : vector<1x256xf32>
    %120 = tpu.matmul %119, %114, %cst_47 {dimension_numbers = #tpu.dot_dimension_numbers<[1], [0], [0], [1], [0, 0, 1, 1], [], []>} : vector<1x16xf32>, vector<16x256xf32>, vector<1x256xf32> -> vector<1x256xf32>
    %121 = vector.broadcast %120 : vector<1x256xf32> to vector<2x256xf32>
    %122 = arith.subf %70, %121 : vector<2x256xf32>
    %123 = arith.mulf %122, %122 : vector<2x256xf32>
    %cst_48 = arith.constant dense<0.000000e+00> : vector<256xf32>
    %124 = vector.multi_reduction <add>, %123, %cst_48 [0] : vector<2x256xf32> to vector<256xf32>
    %125 = vector.shape_cast %124 : vector<256xf32> to vector<1x256xf32>
    %cst_49 = arith.constant dense<0.000000e+00> : vector<1x16xf32>
    %126 = tpu.matmul %125, %92, %cst_49 {dimension_numbers = #tpu.dot_dimension_numbers<[1], [0], [0], [1], [0, 0, 1, 1], [], []>} : vector<1x256xf32>, vector<256x16xf32>, vector<1x16xf32> -> vector<1x16xf32>
    %cst_50 = arith.constant 3.125000e-02 : f32
    %127 = vector.broadcast %cst_50 : f32 to vector<1x16xf32>
    %128 = arith.mulf %126, %127 : vector<1x16xf32>
    %cst_51 = arith.constant 9.99999974E-6 : f32
    %129 = vector.broadcast %cst_51 : f32 to vector<1x16xf32>
    %130 = arith.addf %128, %129 : vector<1x16xf32>
    %131 = math.rsqrt %130 : vector<1x16xf32>
    %cst_52 = arith.constant dense<0.000000e+00> : vector<1x256xf32>
    %132 = tpu.matmul %131, %114, %cst_52 {dimension_numbers = #tpu.dot_dimension_numbers<[1], [0], [0], [1], [0, 0, 1, 1], [], []>} : vector<1x16xf32>, vector<16x256xf32>, vector<1x256xf32> -> vector<1x256xf32>
    %133 = vector.broadcast %132 : vector<1x256xf32> to vector<2x256xf32>
    %134 = arith.mulf %122, %133 : vector<2x256xf32>
    %cst_53 = arith.constant 0.000000e+00 : f32
    %135 = vector.broadcast %cst_53 : f32 to vector<2x256xf32>
    %136 = arith.maximumf %134, %135 : vector<2x256xf32>
    %c0_54 = arith.constant 0 : index
    %c0_55 = arith.constant 0 : index
    %137 = vector.load %arg3[%c0_54, %c0_55] : memref<256x256xf32, #tpu.memory_space<vmem>>, vector<256x256xf32>
    %cst_56 = arith.constant dense<0.000000e+00> : vector<2x256xf32>
    %138 = tpu.matmul %136, %137, %cst_56 {dimension_numbers = #tpu.dot_dimension_numbers<[1], [0], [0], [1], [0, 0, 1, 1], [], []>} : vector<2x256xf32>, vector<256x256xf32>, vector<2x256xf32> -> vector<2x256xf32>
    %139 = tpu.iota {dimensions = array<i32: 0>} : vector<256x32xi32>
    %140 = tpu.iota {dimensions = array<i32: 1>} : vector<256x32xi32>
    %c32_i32 = arith.constant 32 : i32
    %c0_i32_57 = arith.constant 0 : i32
    %141 = arith.cmpi eq, %c32_i32, %c0_i32_57 : i32
    %c1_i32_58 = arith.constant 1 : i32
    %142 = arith.select %141, %c1_i32_58, %c32_i32 : i32
    %143 = vector.broadcast %142 : i32 to vector<256x32xi32>
    %144 = arith.remsi %139, %143 : vector<256x32xi32>
    %c0_i32_59 = arith.constant 0 : i32
    %145 = vector.broadcast %c0_i32_59 : i32 to vector<256x32xi32>
    %146 = arith.cmpi ne, %144, %145 : vector<256x32xi32>
    %c0_i32_60 = arith.constant 0 : i32
    %147 = vector.broadcast %c0_i32_60 : i32 to vector<256x32xi32>
    %148 = arith.cmpi slt, %144, %147 : vector<256x32xi32>
    %c0_i32_61 = arith.constant 0 : i32
    %149 = arith.cmpi slt, %142, %c0_i32_61 : i32
    %150 = vector.broadcast %149 : i1 to vector<256x32xi1>
    %151 = vector.broadcast %150 : vector<256x32xi1> to vector<256x32xi1>
    %152 = arith.xori %148, %151 : vector<256x32xi1>
    %153 = arith.andi %152, %146 : vector<256x32xi1>
    %154 = vector.broadcast %142 : i32 to vector<256x32xi32>
    %155 = arith.addi %144, %154 : vector<256x32xi32>
    %156 = arith.select %153, %155, %144 : vector<256x32xi1>, vector<256x32xi32>
    %157 = arith.cmpi eq, %156, %140 : vector<256x32xi32>
    %cst_62 = arith.constant 1.000000e+00 : f32
    %cst_63 = arith.constant 0.000000e+00 : f32
    %158 = vector.broadcast %cst_62 : f32 to vector<256x32xf32>
    %159 = vector.broadcast %cst_63 : f32 to vector<256x32xf32>
    %160 = arith.select %157, %158, %159 : vector<256x32xi1>, vector<256x32xf32>
    %161 = tpu.iota {dimensions = array<i32: 0>} : vector<32x256xi32>
    %162 = tpu.iota {dimensions = array<i32: 1>} : vector<32x256xi32>
    %c32_i32_64 = arith.constant 32 : i32
    %c0_i32_65 = arith.constant 0 : i32
    %163 = arith.cmpi eq, %c32_i32_64, %c0_i32_65 : i32
    %c1_i32_66 = arith.constant 1 : i32
    %164 = arith.select %163, %c1_i32_66, %c32_i32_64 : i32
    %165 = vector.broadcast %164 : i32 to vector<32x256xi32>
    %166 = arith.remsi %162, %165 : vector<32x256xi32>
    %c0_i32_67 = arith.constant 0 : i32
    %167 = vector.broadcast %c0_i32_67 : i32 to vector<32x256xi32>
    %168 = arith.cmpi ne, %166, %167 : vector<32x256xi32>
    %c0_i32_68 = arith.constant 0 : i32
    %169 = vector.broadcast %c0_i32_68 : i32 to vector<32x256xi32>
    %170 = arith.cmpi slt, %166, %169 : vector<32x256xi32>
    %c0_i32_69 = arith.constant 0 : i32
    %171 = arith.cmpi slt, %164, %c0_i32_69 : i32
    %172 = vector.broadcast %171 : i1 to vector<32x256xi1>
    %173 = vector.broadcast %172 : vector<32x256xi1> to vector<32x256xi1>
    %174 = arith.xori %170, %173 : vector<32x256xi1>
    %175 = arith.andi %174, %168 : vector<32x256xi1>
    %176 = vector.broadcast %164 : i32 to vector<32x256xi32>
    %177 = arith.addi %166, %176 : vector<32x256xi32>
    %178 = arith.select %175, %177, %166 : vector<32x256xi1>, vector<32x256xi32>
    %179 = arith.cmpi eq, %178, %161 : vector<32x256xi32>
    %cst_70 = arith.constant 1.000000e+00 : f32
    %cst_71 = arith.constant 0.000000e+00 : f32
    %180 = vector.broadcast %cst_70 : f32 to vector<32x256xf32>
    %181 = vector.broadcast %cst_71 : f32 to vector<32x256xf32>
    %182 = arith.select %179, %180, %181 : vector<32x256xi1>, vector<32x256xf32>
    %cst_72 = arith.constant dense<0.000000e+00> : vector<256xf32>
    %183 = vector.multi_reduction <add>, %138, %cst_72 [0] : vector<2x256xf32> to vector<256xf32>
    %184 = vector.shape_cast %183 : vector<256xf32> to vector<1x256xf32>
    %cst_73 = arith.constant dense<0.000000e+00> : vector<1x32xf32>
    %185 = tpu.matmul %184, %160, %cst_73 {dimension_numbers = #tpu.dot_dimension_numbers<[1], [0], [0], [1], [0, 0, 1, 1], [], []>} : vector<1x256xf32>, vector<256x32xf32>, vector<1x32xf32> -> vector<1x32xf32>
    %cst_74 = arith.constant 6.250000e-02 : f32
    %186 = vector.broadcast %cst_74 : f32 to vector<1x32xf32>
    %187 = arith.mulf %185, %186 : vector<1x32xf32>
    %cst_75 = arith.constant dense<0.000000e+00> : vector<1x256xf32>
    %188 = tpu.matmul %187, %182, %cst_75 {dimension_numbers = #tpu.dot_dimension_numbers<[1], [0], [0], [1], [0, 0, 1, 1], [], []>} : vector<1x32xf32>, vector<32x256xf32>, vector<1x256xf32> -> vector<1x256xf32>
    %189 = vector.broadcast %188 : vector<1x256xf32> to vector<2x256xf32>
    %190 = arith.subf %138, %189 : vector<2x256xf32>
    %191 = arith.mulf %190, %190 : vector<2x256xf32>
    %cst_76 = arith.constant dense<0.000000e+00> : vector<256xf32>
    %192 = vector.multi_reduction <add>, %191, %cst_76 [0] : vector<2x256xf32> to vector<256xf32>
    %193 = vector.shape_cast %192 : vector<256xf32> to vector<1x256xf32>
    %cst_77 = arith.constant dense<0.000000e+00> : vector<1x32xf32>
    %194 = tpu.matmul %193, %160, %cst_77 {dimension_numbers = #tpu.dot_dimension_numbers<[1], [0], [0], [1], [0, 0, 1, 1], [], []>} : vector<1x256xf32>, vector<256x32xf32>, vector<1x32xf32> -> vector<1x32xf32>
    %cst_78 = arith.constant 6.250000e-02 : f32
    %195 = vector.broadcast %cst_78 : f32 to vector<1x32xf32>
    %196 = arith.mulf %194, %195 : vector<1x32xf32>
    %cst_79 = arith.constant 9.99999974E-6 : f32
    %197 = vector.broadcast %cst_79 : f32 to vector<1x32xf32>
    %198 = arith.addf %196, %197 : vector<1x32xf32>
    %199 = math.rsqrt %198 : vector<1x32xf32>
    %cst_80 = arith.constant dense<0.000000e+00> : vector<1x256xf32>
    %200 = tpu.matmul %199, %182, %cst_80 {dimension_numbers = #tpu.dot_dimension_numbers<[1], [0], [0], [1], [0, 0, 1, 1], [], []>} : vector<1x32xf32>, vector<32x256xf32>, vector<1x256xf32> -> vector<1x256xf32>
    %201 = vector.broadcast %200 : vector<1x256xf32> to vector<2x256xf32>
    %202 = arith.mulf %190, %201 : vector<2x256xf32>
    %cst_81 = arith.constant 0.000000e+00 : f32
    %203 = vector.broadcast %cst_81 : f32 to vector<2x256xf32>
    %204 = arith.maximumf %202, %203 : vector<2x256xf32>
    %c0_82 = arith.constant 0 : index
    %c0_83 = arith.constant 0 : index
    %205 = vector.load %arg4[%c0_82, %c0_83] : memref<256x256xf32, #tpu.memory_space<vmem>>, vector<256x256xf32>
    %cst_84 = arith.constant dense<0.000000e+00> : vector<2x256xf32>
    %206 = tpu.matmul %204, %205, %cst_84 {dimension_numbers = #tpu.dot_dimension_numbers<[1], [0], [0], [1], [0, 0, 1, 1], [], []>} : vector<2x256xf32>, vector<256x256xf32>, vector<2x256xf32> -> vector<2x256xf32>
    %207 = tpu.iota {dimensions = array<i32: 0>} : vector<256x64xi32>
    %208 = tpu.iota {dimensions = array<i32: 1>} : vector<256x64xi32>
    %c64_i32 = arith.constant 64 : i32
    %c0_i32_85 = arith.constant 0 : i32
    %209 = arith.cmpi eq, %c64_i32, %c0_i32_85 : i32
    %c1_i32_86 = arith.constant 1 : i32
    %210 = arith.select %209, %c1_i32_86, %c64_i32 : i32
    %211 = vector.broadcast %210 : i32 to vector<256x64xi32>
    %212 = arith.remsi %207, %211 : vector<256x64xi32>
    %c0_i32_87 = arith.constant 0 : i32
    %213 = vector.broadcast %c0_i32_87 : i32 to vector<256x64xi32>
    %214 = arith.cmpi ne, %212, %213 : vector<256x64xi32>
    %c0_i32_88 = arith.constant 0 : i32
    %215 = vector.broadcast %c0_i32_88 : i32 to vector<256x64xi32>
    %216 = arith.cmpi slt, %212, %215 : vector<256x64xi32>
    %c0_i32_89 = arith.constant 0 : i32
    %217 = arith.cmpi slt, %210, %c0_i32_89 : i32
    %218 = vector.broadcast %217 : i1 to vector<256x64xi1>
    %219 = vector.broadcast %218 : vector<256x64xi1> to vector<256x64xi1>
    %220 = arith.xori %216, %219 : vector<256x64xi1>
    %221 = arith.andi %220, %214 : vector<256x64xi1>
    %222 = vector.broadcast %210 : i32 to vector<256x64xi32>
    %223 = arith.addi %212, %222 : vector<256x64xi32>
    %224 = arith.select %221, %223, %212 : vector<256x64xi1>, vector<256x64xi32>
    %225 = arith.cmpi eq, %224, %208 : vector<256x64xi32>
    %cst_90 = arith.constant 1.000000e+00 : f32
    %cst_91 = arith.constant 0.000000e+00 : f32
    %226 = vector.broadcast %cst_90 : f32 to vector<256x64xf32>
    %227 = vector.broadcast %cst_91 : f32 to vector<256x64xf32>
    %228 = arith.select %225, %226, %227 : vector<256x64xi1>, vector<256x64xf32>
    %229 = tpu.iota {dimensions = array<i32: 0>} : vector<64x256xi32>
    %230 = tpu.iota {dimensions = array<i32: 1>} : vector<64x256xi32>
    %c64_i32_92 = arith.constant 64 : i32
    %c0_i32_93 = arith.constant 0 : i32
    %231 = arith.cmpi eq, %c64_i32_92, %c0_i32_93 : i32
    %c1_i32_94 = arith.constant 1 : i32
    %232 = arith.select %231, %c1_i32_94, %c64_i32_92 : i32
    %233 = vector.broadcast %232 : i32 to vector<64x256xi32>
    %234 = arith.remsi %230, %233 : vector<64x256xi32>
    %c0_i32_95 = arith.constant 0 : i32
    %235 = vector.broadcast %c0_i32_95 : i32 to vector<64x256xi32>
    %236 = arith.cmpi ne, %234, %235 : vector<64x256xi32>
    %c0_i32_96 = arith.constant 0 : i32
    %237 = vector.broadcast %c0_i32_96 : i32 to vector<64x256xi32>
    %238 = arith.cmpi slt, %234, %237 : vector<64x256xi32>
    %c0_i32_97 = arith.constant 0 : i32
    %239 = arith.cmpi slt, %232, %c0_i32_97 : i32
    %240 = vector.broadcast %239 : i1 to vector<64x256xi1>
    %241 = vector.broadcast %240 : vector<64x256xi1> to vector<64x256xi1>
    %242 = arith.xori %238, %241 : vector<64x256xi1>
    %243 = arith.andi %242, %236 : vector<64x256xi1>
    %244 = vector.broadcast %232 : i32 to vector<64x256xi32>
    %245 = arith.addi %234, %244 : vector<64x256xi32>
    %246 = arith.select %243, %245, %234 : vector<64x256xi1>, vector<64x256xi32>
    %247 = arith.cmpi eq, %246, %229 : vector<64x256xi32>
    %cst_98 = arith.constant 1.000000e+00 : f32
    %cst_99 = arith.constant 0.000000e+00 : f32
    %248 = vector.broadcast %cst_98 : f32 to vector<64x256xf32>
    %249 = vector.broadcast %cst_99 : f32 to vector<64x256xf32>
    %250 = arith.select %247, %248, %249 : vector<64x256xi1>, vector<64x256xf32>
    %cst_100 = arith.constant dense<0.000000e+00> : vector<256xf32>
    %251 = vector.multi_reduction <add>, %206, %cst_100 [0] : vector<2x256xf32> to vector<256xf32>
    %252 = vector.shape_cast %251 : vector<256xf32> to vector<1x256xf32>
    %cst_101 = arith.constant dense<0.000000e+00> : vector<1x64xf32>
    %253 = tpu.matmul %252, %228, %cst_101 {dimension_numbers = #tpu.dot_dimension_numbers<[1], [0], [0], [1], [0, 0, 1, 1], [], []>} : vector<1x256xf32>, vector<256x64xf32>, vector<1x64xf32> -> vector<1x64xf32>
    %cst_102 = arith.constant 1.250000e-01 : f32
    %254 = vector.broadcast %cst_102 : f32 to vector<1x64xf32>
    %255 = arith.mulf %253, %254 : vector<1x64xf32>
    %cst_103 = arith.constant dense<0.000000e+00> : vector<1x256xf32>
    %256 = tpu.matmul %255, %250, %cst_103 {dimension_numbers = #tpu.dot_dimension_numbers<[1], [0], [0], [1], [0, 0, 1, 1], [], []>} : vector<1x64xf32>, vector<64x256xf32>, vector<1x256xf32> -> vector<1x256xf32>
    %257 = vector.broadcast %256 : vector<1x256xf32> to vector<2x256xf32>
    %258 = arith.subf %206, %257 : vector<2x256xf32>
    %259 = arith.mulf %258, %258 : vector<2x256xf32>
    %cst_104 = arith.constant dense<0.000000e+00> : vector<256xf32>
    %260 = vector.multi_reduction <add>, %259, %cst_104 [0] : vector<2x256xf32> to vector<256xf32>
    %261 = vector.shape_cast %260 : vector<256xf32> to vector<1x256xf32>
    %cst_105 = arith.constant dense<0.000000e+00> : vector<1x64xf32>
    %262 = tpu.matmul %261, %228, %cst_105 {dimension_numbers = #tpu.dot_dimension_numbers<[1], [0], [0], [1], [0, 0, 1, 1], [], []>} : vector<1x256xf32>, vector<256x64xf32>, vector<1x64xf32> -> vector<1x64xf32>
    %cst_106 = arith.constant 1.250000e-01 : f32
    %263 = vector.broadcast %cst_106 : f32 to vector<1x64xf32>
    %264 = arith.mulf %262, %263 : vector<1x64xf32>
    %cst_107 = arith.constant 9.99999974E-6 : f32
    %265 = vector.broadcast %cst_107 : f32 to vector<1x64xf32>
    %266 = arith.addf %264, %265 : vector<1x64xf32>
    %267 = math.rsqrt %266 : vector<1x64xf32>
    %cst_108 = arith.constant dense<0.000000e+00> : vector<1x256xf32>
    %268 = tpu.matmul %267, %250, %cst_108 {dimension_numbers = #tpu.dot_dimension_numbers<[1], [0], [0], [1], [0, 0, 1, 1], [], []>} : vector<1x64xf32>, vector<64x256xf32>, vector<1x256xf32> -> vector<1x256xf32>
    %269 = vector.broadcast %268 : vector<1x256xf32> to vector<2x256xf32>
    %270 = arith.mulf %258, %269 : vector<2x256xf32>
    %cst_109 = arith.constant 0.000000e+00 : f32
    %271 = vector.broadcast %cst_109 : f32 to vector<2x256xf32>
    %272 = arith.maximumf %270, %271 : vector<2x256xf32>
    %273 = tpu.iota {dimensions = array<i32: 0>} : vector<256x64xi32>
    %274 = tpu.iota {dimensions = array<i32: 1>} : vector<256x64xi32>
    %c64_i32_110 = arith.constant 64 : i32
    %c0_i32_111 = arith.constant 0 : i32
    %275 = arith.cmpi eq, %c64_i32_110, %c0_i32_111 : i32
    %c1_i32_112 = arith.constant 1 : i32
    %276 = arith.select %275, %c1_i32_112, %c64_i32_110 : i32
    %277 = vector.broadcast %276 : i32 to vector<256x64xi32>
    %278 = arith.remsi %273, %277 : vector<256x64xi32>
    %c0_i32_113 = arith.constant 0 : i32
    %279 = vector.broadcast %c0_i32_113 : i32 to vector<256x64xi32>
    %280 = arith.cmpi ne, %278, %279 : vector<256x64xi32>
    %c0_i32_114 = arith.constant 0 : i32
    %281 = vector.broadcast %c0_i32_114 : i32 to vector<256x64xi32>
    %282 = arith.cmpi slt, %278, %281 : vector<256x64xi32>
    %c0_i32_115 = arith.constant 0 : i32
    %283 = arith.cmpi slt, %276, %c0_i32_115 : i32
    %284 = vector.broadcast %283 : i1 to vector<256x64xi1>
    %285 = vector.broadcast %284 : vector<256x64xi1> to vector<256x64xi1>
    %286 = arith.xori %282, %285 : vector<256x64xi1>
    %287 = arith.andi %286, %280 : vector<256x64xi1>
    %288 = vector.broadcast %276 : i32 to vector<256x64xi32>
    %289 = arith.addi %278, %288 : vector<256x64xi32>
    %290 = arith.select %287, %289, %278 : vector<256x64xi1>, vector<256x64xi32>
    %291 = arith.cmpi eq, %290, %274 : vector<256x64xi32>
    %cst_116 = arith.constant 1.000000e+00 : f32
    %cst_117 = arith.constant 0.000000e+00 : f32
    %292 = vector.broadcast %cst_116 : f32 to vector<256x64xf32>
    %293 = vector.broadcast %cst_117 : f32 to vector<256x64xf32>
    %294 = arith.select %291, %292, %293 : vector<256x64xi1>, vector<256x64xf32>
    %cst_118 = arith.constant dense<0.000000e+00> : vector<2x64xf32>
    %295 = tpu.matmul %272, %294, %cst_118 {dimension_numbers = #tpu.dot_dimension_numbers<[1], [0], [0], [1], [0, 0, 1, 1], [], []>} : vector<2x256xf32>, vector<256x64xf32>, vector<2x64xf32> -> vector<2x64xf32>
    %cst_119 = arith.constant 2.500000e-01 : f32
    %296 = vector.broadcast %cst_119 : f32 to vector<2x64xf32>
    %297 = arith.mulf %295, %296 : vector<2x64xf32>
    %c0_120 = arith.constant 0 : index
    %c0_121 = arith.constant 0 : index
    %298 = vector.load %arg5[%c0_120, %c0_121] : memref<2x64xf32, #tpu.memory_space<vmem>>, vector<2x64xf32>
    tpu.vector_store %arg5[%c0_120, %c0_121], %297 {strides = array<i32>} : memref<2x64xf32, #tpu.memory_space<vmem>>, vector<2x64xf32>,
    return
  }
}

</mosaic_0001>

<llo_original>
// kernel: _lambda_.1
$region0: #{_lambda_.1}
  #allocation0 [shape = 'u32[]', space=smem, size = 0x4, offset = 0x4, fixed_abs, tag = 'smem constant byte address 0x4 - core index']
  #allocation1 [shape = 'u32[144,128]{1,0:T(1,128)}', space=vmem, size = 0x12000, scoped, tag = 'internal scratch']
  %s0 = inlined_call_operand.hbm [shape: f32[2,64], index: 0, kind: input, shape index: {}]
  %s1 = inlined_call_operand.hbm [shape: f32[64,256], index: 1, kind: input, shape index: {}]
  %s2 = inlined_call_operand.hbm [shape: f32[256,256], index: 2, kind: input, shape index: {}]
  %s3 = inlined_call_operand.hbm [shape: f32[256,256], index: 3, kind: input, shape index: {}]
  %s4 = inlined_call_operand.hbm [shape: f32[256,256], index: 4, kind: input, shape index: {}]
  %s5 = inlined_call_operand.hbm [shape: f32[2,64], index: 5, kind: output, shape index: {}]
  %s6 = sld [smem:[#allocation0]]
  $region50: #{_lambda_.1} parent=0
    _
  %s8 = ssub.s32 1, %s6
  %s9 = scalar_select 0, %s8, %s6
  $region1: #{_lambda_.1} parent=0
    #allocation2 [shape = 'u8[1024]{0}', space=vmem, size = 0x400, scoped, tag = 'input window, operand 0, single buffered']
    #allocation3 [shape = 's32[1]{0}', space=sflag, size = 0x4, scoped, tag = 'scoped memory for _lambda_.1']
    #allocation4 [shape = 's32[1]{0}', space=sflag, size = 0x4, scoped, tag = 'scoped memory for _lambda_.1']
    #allocation5 [shape = 'u8[65536]{0}', space=vmem, size = 0x10000, scoped, tag = 'input window, operand 1, single buffered']
    #allocation6 [shape = 's32[1]{0}', space=sflag, size = 0x4, scoped, tag = 'scoped memory for _lambda_.1']
    #allocation7 [shape = 'u8[262144]{0}', space=vmem, size = 0x40000, scoped, tag = 'input window, operand 2, single buffered']
    #allocation8 [shape = 'u8[262144]{0}', space=vmem, size = 0x40000, scoped, tag = 'input window, operand 3, single buffered']
    #allocation9 [shape = 's32[1]{0}', space=sflag, size = 0x4, scoped, tag = 'scoped memory for _lambda_.1']
    #allocation10 [shape = 'u8[262144]{0}', space=vmem, size = 0x40000, scoped, tag = 'input window, operand 4, single buffered']
    #allocation11 [shape = 'u8[1024]{0}', space=vmem, size = 0x400, scoped, tag = 'output window, operand 0, single buffered']
    %10 = vsyncpa [#allocation3], 0
    %11 = vsyncpa [#allocation6], 0
    %12 = vsyncpa [#allocation9], 0
    %13 = vsyncpa [#allocation4], 0
    // Predicated region
    $region2: #{_lambda_.1} parent=1 // pred_check
      _
    $region3: #{_lambda_.1} parent=1 // pred_check_branch
      %15 = sbr.rel (0) target = $region5
    $region4: #{_lambda_.1} parent=1 // pred_region
      %s17 = ssub.s32 32, 32
      %18 = vsyncadd [#allocation3], %s17
      %s20 = sshll.u32 [#allocation2], 4
      %s21 = int_to_ptr.vmem [resolvable:$true] %s20
      %23 = dma.hbm_to_vmem [thread:$0]  %s0, 32, %s21, [#allocation3]
    $region5: #{_lambda_.1} parent=1 // pred_fallthru
      _
    // Predicated region
    $region6: #{_lambda_.1} parent=1 // pred_check
      _
    $region7: #{_lambda_.1} parent=1 // pred_check_branch
      %25 = sbr.rel (0) target = $region9
    $region8: #{_lambda_.1} parent=1 // pred_region
      %s27 = ssub.s32 2048, 2048
      %28 = vsyncadd [#allocation6], %s27
      %s29 = sshll.u32 [#allocation5], 4
      %s30 = int_to_ptr.vmem [resolvable:$true] %s29
      %35 = dma.hbm_to_vmem [thread:$0]  %s1, 2048, %s30, [#allocation6], 256, 256, 16
    $region9: #{_lambda_.1} parent=1 // pred_fallthru
      _
    // Predicated region
    $region10: #{_lambda_.1} parent=1 // pred_check
      _
    $region11: #{_lambda_.1} parent=1 // pred_check_branch
      %37 = sbr.rel (0) target = $region13
    $region12: #{_lambda_.1} parent=1 // pred_region
      %s39 = ssub.s32 8192, 8192
      %40 = vsyncadd [#allocation6], %s39
      %s41 = sshll.u32 [#allocation7], 4
      %s42 = int_to_ptr.vmem [resolvable:$true] %s41
      %47 = dma.hbm_to_vmem [thread:$0]  %s2, 8192, %s42, [#allocation6], 256, 256, 16
    $region13: #{_lambda_.1} parent=1 // pred_fallthru
      _
    // Predicated region
    $region14: #{_lambda_.1} parent=1 // pred_check
      _
    $region15: #{_lambda_.1} parent=1 // pred_check_branch
      %49 = sbr.rel (0) target = $region17
    $region16: #{_lambda_.1} parent=1 // pred_region
      %s51 = ssub.s32 8192, 8192
      %52 = vsyncadd [#allocation9], %s51
      %s53 = sshll.u32 [#allocation8], 4
      %s54 = int_to_ptr.vmem [resolvable:$true] %s53
      %59 = dma.hbm_to_vmem [thread:$0]  %s3, 8192, %s54, [#allocation9], 256, 256, 16
    $region17: #{_lambda_.1} parent=1 // pred_fallthru
      _
    // Predicated region
    $region18: #{_lambda_.1} parent=1 // pred_check
      _
    $region19: #{_lambda_.1} parent=1 // pred_check_branch
      %61 = sbr.rel (0) target = $region21
    $region20: #{_lambda_.1} parent=1 // pred_region
      %s63 = ssub.s32 8192, 8192
      %64 = vsyncadd [#allocation9], %s63
      %s65 = sshll.u32 [#allocation10], 4
      %s66 = int_to_ptr.vmem [resolvable:$true] %s65
      %71 = dma.hbm_to_vmem [thread:$0]  %s4, 8192, %s66, [#allocation9], 256, 256, 16
    $region21: #{_lambda_.1} parent=1 // pred_fallthru
      _
    // Predicated region
    $region22: #{_lambda_.1} parent=1 // pred_check
      _
    $region23: #{_lambda_.1} parent=1 // pred_check_branch
      %73 = sbr.rel (0) target = $region25
    $region24: #{_lambda_.1} parent=1 // pred_region
      %74 = dma.done [#allocation3], 32
    $region25: #{_lambda_.1} parent=1 // pred_fallthru
      _
    // Predicated region
    $region26: #{_lambda_.1} parent=1 // pred_check
      _
    $region27: #{_lambda_.1} parent=1 // pred_check_branch
      %76 = sbr.rel (0) target = $region29
    $region28: #{_lambda_.1} parent=1 // pred_region
      %77 = dma.done [#allocation6], 2048
    $region29: #{_lambda_.1} parent=1 // pred_fallthru
      _
    // Predicated region
    $region30: #{_lambda_.1} parent=1 // pred_check
      _
    $region31: #{_lambda_.1} parent=1 // pred_check_branch
      %79 = sbr.rel (0) target = $region33
    $region32: #{_lambda_.1} parent=1 // pred_region
      %80 = dma.done [#allocation6], 8192
    $region33: #{_lambda_.1} parent=1 // pred_fallthru
      _
    // Predicated region
    $region34: #{_lambda_.1} parent=1 // pred_check
      _
    $region35: #{_lambda_.1} parent=1 // pred_check_branch
      %82 = sbr.rel (0) target = $region37
    $region36: #{_lambda_.1} parent=1 // pred_region
      %83 = dma.done [#allocation9], 8192
    $region37: #{_lambda_.1} parent=1 // pred_fallthru
      _
    // Predicated region
    $region38: #{_lambda_.1} parent=1 // pred_check
      _
    $region39: #{_lambda_.1} parent=1 // pred_check_branch
      %85 = sbr.rel (0) target = $region41
    $region40: #{_lambda_.1} parent=1 // pred_region
      %86 = dma.done [#allocation9], 8192
    $region41: #{_lambda_.1} parent=1 // pred_fallthru
      _
    %v87 = vld [vmem:[#allocation2] sm:$0x3]
    %v88 = vld [vmem:[#allocation5] sm:$0xff]
    %v89 = vld [vmem:[#allocation5 + $0x8] sm:$0xff]
    %v90 = vld [vmem:[#allocation5 + $0x10] sm:$0xff]
    %v91 = vld [vmem:[#allocation5 + $0x18] sm:$0xff]
    %v92 = vld [vmem:[#allocation5 + $0x20] sm:$0xff]
    %v93 = vld [vmem:[#allocation5 + $0x28] sm:$0xff]
    %v94 = vld [vmem:[#allocation5 + $0x30] sm:$0xff]
    %v95 = vld [vmem:[#allocation5 + $0x38] sm:$0xff]
    %v96 = vld [vmem:[#allocation5 + $0x40] sm:$0xff]
    %v97 = vld [vmem:[#allocation5 + $0x48] sm:$0xff]
    %v98 = vld [vmem:[#allocation5 + $0x50] sm:$0xff]
    %v99 = vld [vmem:[#allocation5 + $0x58] sm:$0xff]
    %v100 = vld [vmem:[#allocation5 + $0x60] sm:$0xff]
    %v101 = vld [vmem:[#allocation5 + $0x68] sm:$0xff]
    %v102 = vld [vmem:[#allocation5 + $0x70] sm:$0xff]
    %v103 = vld [vmem:[#allocation5 + $0x78] sm:$0xff]
    %vm104 = vcmask 523264
    %v106 = vsel %vm104, %v87, 0
    %108 = vmatprep.subr.mxu0 %v89
    %109 = vmatpush1.msra.mxu0 %v88
    %110 = vmatprep.subr.mxu0 %v91
    %111 = vmatpush1.msra.mxu0 %v90
    %112 = vmatprep.subr.mxu0 %v93
    %113 = vmatpush1.msra.mxu0 %v92
    %114 = vmatprep.subr.mxu0 %v95
    %115 = vmatpush1.msra.mxu0 %v94
    %116 = vmatprep.subr.mxu0 %v97
    %117 = vmatpush1.msra.mxu0 %v96
    %118 = vmatprep.subr.mxu0 %v99
    %119 = vmatpush1.msra.mxu0 %v98
    %120 = vmatprep.subr.mxu0 %v101
    %121 = vmatpush1.msra.mxu0 %v100
    %122 = vmatprep.subr.mxu0 %v103
    %123 = vmatpush1.msra.mxu0 %v102
    %124 = vmatprep.subr.mxu0 0.0
    %125 = vmatpush1.msra.mxu0 0.0
    %126 = vmatprep.subr.mxu0 0.0
    %127 = vmatpush1.msra.mxu0 0.0
    %128 = vmatprep.subr.mxu0 0.0
    %129 = vmatpush1.msra.mxu0 0.0
    %130 = vmatprep.subr.mxu0 0.0
    %131 = vmatpush1.msra.mxu0 0.0
    %132 = vmatprep.subr.mxu0 0.0
    %133 = vmatpush1.msra.mxu0 0.0
    %134 = vmatprep.subr.mxu0 0.0
    %135 = vmatpush1.msra.mxu0 0.0
    %136 = vmatprep.subr.mxu0 0.0
    %137 = vmatpush1.msra.mxu0 0.0
    %138 = vmatprep.subr.mxu0 0.0
    %139 = vmatpush1.msra.mxu0 0.0
    %140 = vmatprep.subr.mxu0 0.0
    %141 = vmatpush1.msra.mxu0 0.0
    %142 = vmatprep.subr.mxu0 0.0
    %143 = vmatpush1.msra.mxu0 0.0
    %144 = vmatprep.subr.mxu0 0.0
    %145 = vmatpush1.msra.mxu0 0.0
    %146 = vmatprep.subr.mxu0 0.0
    %147 = vmatpush1.msra.mxu0 0.0
    %148 = vmatprep.subr.mxu0 0.0
    %149 = vmatpush1.msra.mxu0 0.0
    %150 = vmatprep.subr.mxu0 0.0
    %151 = vmatpush1.msra.mxu0 0.0
    %152 = vmatprep.subr.mxu0 0.0
    %153 = vmatpush1.msra.mxu0 0.0
    %154 = vmatprep.subr.mxu0 0.0
    %155 = vmatpush1.msra.mxu0 0.0
    %156 = vmatprep.subr.mxu0 0.0
    %157 = vmatpush1.msra.mxu0 0.0
    %158 = vmatprep.subr.mxu0 0.0
    %159 = vmatpush1.msra.mxu0 0.0
    %160 = vmatprep.subr.mxu0 0.0
    %161 = vmatpush1.msra.mxu0 0.0
    %162 = vmatprep.subr.mxu0 0.0
    %163 = vmatpush1.msra.mxu0 0.0
    %164 = vmatprep.subr.mxu0 0.0
    %165 = vmatpush1.msra.mxu0 0.0
    %166 = vmatprep.subr.mxu0 0.0
    %167 = vmatpush1.msra.mxu0 0.0
    %168 = vmatprep.subr.mxu0 0.0
    %169 = vmatpush1.msra.mxu0 0.0
    %170 = vmatprep.subr.mxu0 0.0
    %171 = vmatpush1.msra.mxu0 0.0
    %172 = vmatprep.mubr.f32.mxu0 0.0
    %173 = vmatmul.mubr.f32.gmra.mrb[0].mxu0 %v106
    %v174 = vpop.f32.mrb[0].mxu0
    %v175 = vadd.f32 0.0, %v174
    %v176 = vpop.f32.mrb[0].mxu0
    %v177 = vadd.f32 0.0, %v176
    %178 = vdwg.mxu0
    %v179 = vlaneseq
    %v180 = vshrl.u32 %v179, 7
    %v181 = vadd.s32 %v180, 8
    %v182 = vadd.s32 %v180, 16
    %v183 = vadd.s32 %v180, 24
    %v184 = vadd.s32 %v180, 32
    %v185 = vadd.s32 %v180, 40
    %v186 = vadd.s32 %v180, 48
    %v187 = vadd.s32 %v180, 56
    %v188 = vadd.s32 %v180, 64
    %v189 = vadd.s32 %v180, 72
    %v190 = vadd.s32 %v180, 80
    %v191 = vadd.s32 %v180, 88
    %v192 = vadd.s32 %v180, 96
    %v193 = vadd.s32 %v180, 104
    %v194 = vadd.s32 %v180, 112
    %v195 = vadd.s32 %v180, 120
    %v196 = vadd.s32 %v180, 128
    %v197 = vadd.s32 %v180, 136
    %v198 = vadd.s32 %v180, 144
    %v199 = vadd.s32 %v180, 152
    %v200 = vadd.s32 %v180, 160
    %v201 = vadd.s32 %v180, 168
    %v202 = vadd.s32 %v180, 176
    %v203 = vadd.s32 %v180, 184
    %v204 = vadd.s32 %v180, 192
    %v205 = vadd.s32 %v180, 200
    %v206 = vadd.s32 %v180, 208
    %v207 = vadd.s32 %v180, 216
    %v208 = vadd.s32 %v180, 224
    %v209 = vadd.s32 %v180, 232
    %v210 = vadd.s32 %v180, 240
    %v211 = vadd.s32 %v180, 248
    %v212 = vlaneseq
    %v213 = vand.u32 %v212, 127
    %vm214 = vcmp.lt.s32.totalorder %v180, 0
    %v215 = vsub.s32 0, %v180
    %v216 = vsel %vm214, %v215, %v180
    %v217 = vshrl.u32 %v216, 3
    %v218 = vand.u32 %v216, 7
    %v219 = vsub.s32 0, %v218
    %v220 = vsel %vm214, %v219, %v218
    %vm221 = vcmp.lt.s32.totalorder %v181, 0
    %v222 = vsub.s32 0, %v181
    %v223 = vsel %vm221, %v222, %v181
    %v224 = vshrl.u32 %v223, 3
    %v225 = vand.u32 %v223, 7
    %v226 = vsub.s32 0, %v225
    %v227 = vsel %vm221, %v226, %v225
    %vm228 = vcmp.lt.s32.totalorder %v182, 0
    %v229 = vsub.s32 0, %v182
    %v230 = vsel %vm228, %v229, %v182
    %v231 = vshrl.u32 %v230, 3
    %v232 = vand.u32 %v230, 7
    %v233 = vsub.s32 0, %v232
    %v234 = vsel %vm228, %v233, %v232
    %vm235 = vcmp.lt.s32.totalorder %v183, 0
    %v236 = vsub.s32 0, %v183
    %v237 = vsel %vm235, %v236, %v183
    %v238 = vshrl.u32 %v237, 3
    %v239 = vand.u32 %v237, 7
    %v240 = vsub.s32 0, %v239
    %v241 = vsel %vm235, %v240, %v239
    %vm242 = vcmp.lt.s32.totalorder %v184, 0
    %v243 = vsub.s32 0, %v184
    %v244 = vsel %vm242, %v243, %v184
    %v245 = vshrl.u32 %v244, 3
    %v246 = vand.u32 %v244, 7
    %v247 = vsub.s32 0, %v246
    %v248 = vsel %vm242, %v247, %v246
    %vm249 = vcmp.lt.s32.totalorder %v185, 0
    %v250 = vsub.s32 0, %v185
    %v251 = vsel %vm249, %v250, %v185
    %v252 = vshrl.u32 %v251, 3
    %v253 = vand.u32 %v251, 7
    %v254 = vsub.s32 0, %v253
    %v255 = vsel %vm249, %v254, %v253
    %vm256 = vcmp.lt.s32.totalorder %v186, 0
    %v257 = vsub.s32 0, %v186
    %v258 = vsel %vm256, %v257, %v186
    %v259 = vshrl.u32 %v258, 3
    %v260 = vand.u32 %v258, 7
    %v261 = vsub.s32 0, %v260
    %v262 = vsel %vm256, %v261, %v260
    %vm263 = vcmp.lt.s32.totalorder %v187, 0
    %v264 = vsub.s32 0, %v187
    %v265 = vsel %vm263, %v264, %v187
    %v266 = vshrl.u32 %v265, 3
    %v267 = vand.u32 %v265, 7
    %v268 = vsub.s32 0, %v267
    %v269 = vsel %vm263, %v268, %v267
    %vm270 = vcmp.lt.s32.totalorder %v188, 0
    %v271 = vsub.s32 0, %v188
    %v272 = vsel %vm270, %v271, %v188
    %v273 = vshrl.u32 %v272, 3
    %v274 = vand.u32 %v272, 7
    %v275 = vsub.s32 0, %v274
    %v276 = vsel %vm270, %v275, %v274
    %vm277 = vcmp.lt.s32.totalorder %v189, 0
    %v278 = vsub.s32 0, %v189
    %v279 = vsel %vm277, %v278, %v189
    %v280 = vshrl.u32 %v279, 3
    %v281 = vand.u32 %v279, 7
    %v282 = vsub.s32 0, %v281
    %v283 = vsel %vm277, %v282, %v281
    %vm284 = vcmp.lt.s32.totalorder %v190, 0
    %v285 = vsub.s32 0, %v190
    %v286 = vsel %vm284, %v285, %v190
    %v287 = vshrl.u32 %v286, 3
    %v288 = vand.u32 %v286, 7
    %v289 = vsub.s32 0, %v288
    %v290 = vsel %vm284, %v289, %v288
    %vm291 = vcmp.lt.s32.totalorder %v191, 0
    %v292 = vsub.s32 0, %v191
    %v293 = vsel %vm291, %v292, %v191
    %v294 = vshrl.u32 %v293, 3
    %v295 = vand.u32 %v293, 7
    %v296 = vsub.s32 0, %v295
    %v297 = vsel %vm291, %v296, %v295
    %vm298 = vcmp.lt.s32.totalorder %v192, 0
    %v299 = vsub.s32 0, %v192
    %v300 = vsel %vm298, %v299, %v192
    %v301 = vshrl.u32 %v300, 3
    %v302 = vand.u32 %v300, 7
    %v303 = vsub.s32 0, %v302
    %v304 = vsel %vm298, %v303, %v302
    %vm305 = vcmp.lt.s32.totalorder %v193, 0
    %v306 = vsub.s32 0, %v193
    %v307 = vsel %vm305, %v306, %v193
    %v308 = vshrl.u32 %v307, 3
    %v309 = vand.u32 %v307, 7
    %v310 = vsub.s32 0, %v309
    %v311 = vsel %vm305, %v310, %v309
    %vm312 = vcmp.lt.s32.totalorder %v194, 0
    %v313 = vsub.s32 0, %v194
    %v314 = vsel %vm312, %v313, %v194
    %v315 = vshrl.u32 %v314, 3
    %v316 = vand.u32 %v314, 7
    %v317 = vsub.s32 0, %v316
    %v318 = vsel %vm312, %v317, %v316
    %vm319 = vcmp.lt.s32.totalorder %v195, 0
    %v320 = vsub.s32 0, %v195
    %v321 = vsel %vm319, %v320, %v195
    %v322 = vshrl.u32 %v321, 3
    %v323 = vand.u32 %v321, 7
    %v324 = vsub.s32 0, %v323
    %v325 = vsel %vm319, %v324, %v323
    %vm326 = vcmp.lt.s32.totalorder %v196, 0
    %v327 = vsub.s32 0, %v196
    %v328 = vsel %vm326, %v327, %v196
    %v329 = vshrl.u32 %v328, 3
    %v330 = vand.u32 %v328, 7
    %v331 = vsub.s32 0, %v330
    %v332 = vsel %vm326, %v331, %v330
    %vm333 = vcmp.lt.s32.totalorder %v197, 0
    %v334 = vsub.s32 0, %v197
    %v335 = vsel %vm333, %v334, %v197
    %v336 = vshrl.u32 %v335, 3
    %v337 = vand.u32 %v335, 7
    %v338 = vsub.s32 0, %v337
    %v339 = vsel %vm333, %v338, %v337
    %vm340 = vcmp.lt.s32.totalorder %v198, 0
    %v341 = vsub.s32 0, %v198
    %v342 = vsel %vm340, %v341, %v198
    %v343 = vshrl.u32 %v342, 3
    %v344 = vand.u32 %v342, 7
    %v345 = vsub.s32 0, %v344
    %v346 = vsel %vm340, %v345, %v344
    %vm347 = vcmp.lt.s32.totalorder %v199, 0
    %v348 = vsub.s32 0, %v199
    %v349 = vsel %vm347, %v348, %v199
    %v350 = vshrl.u32 %v349, 3
    %v351 = vand.u32 %v349, 7
    %v352 = vsub.s32 0, %v351
    %v353 = vsel %vm347, %v352, %v351
    %vm354 = vcmp.lt.s32.totalorder %v200, 0
    %v355 = vsub.s32 0, %v200
    %v356 = vsel %vm354, %v355, %v200
    %v357 = vshrl.u32 %v356, 3
    %v358 = vand.u32 %v356, 7
    %v359 = vsub.s32 0, %v358
    %v360 = vsel %vm354, %v359, %v358
    %vm361 = vcmp.lt.s32.totalorder %v201, 0
    %v362 = vsub.s32 0, %v201
    %v363 = vsel %vm361, %v362, %v201
    %v364 = vshrl.u32 %v363, 3
    %v365 = vand.u32 %v363, 7
    %v366 = vsub.s32 0, %v365
    %v367 = vsel %vm361, %v366, %v365
    %vm368 = vcmp.lt.s32.totalorder %v202, 0
    %v369 = vsub.s32 0, %v202
    %v370 = vsel %vm368, %v369, %v202
    %v371 = vshrl.u32 %v370, 3
    %v372 = vand.u32 %v370, 7
    %v373 = vsub.s32 0, %v372
    %v374 = vsel %vm368, %v373, %v372
    %vm375 = vcmp.lt.s32.totalorder %v203, 0
    %v376 = vsub.s32 0, %v203
    %v377 = vsel %vm375, %v376, %v203
    %v378 = vshrl.u32 %v377, 3
    %v379 = vand.u32 %v377, 7
    %v380 = vsub.s32 0, %v379
    %v381 = vsel %vm375, %v380, %v379
    %vm382 = vcmp.lt.s32.totalorder %v204, 0
    %v383 = vsub.s32 0, %v204
    %v384 = vsel %vm382, %v383, %v204
    %v385 = vshrl.u32 %v384, 3
    %v386 = vand.u32 %v384, 7
    %v387 = vsub.s32 0, %v386
    %v388 = vsel %vm382, %v387, %v386
    %vm389 = vcmp.lt.s32.totalorder %v205, 0
    %v390 = vsub.s32 0, %v205
    %v391 = vsel %vm389, %v390, %v205
    %v392 = vshrl.u32 %v391, 3
    %v393 = vand.u32 %v391, 7
    %v394 = vsub.s32 0, %v393
    %v395 = vsel %vm389, %v394, %v393
    %vm396 = vcmp.lt.s32.totalorder %v206, 0
    %v397 = vsub.s32 0, %v206
    %v398 = vsel %vm396, %v397, %v206
    %v399 = vshrl.u32 %v398, 3
    %v400 = vand.u32 %v398, 7
    %v401 = vsub.s32 0, %v400
    %v402 = vsel %vm396, %v401, %v400
    %vm403 = vcmp.lt.s32.totalorder %v207, 0
    %v404 = vsub.s32 0, %v207
    %v405 = vsel %vm403, %v404, %v207
    %v406 = vshrl.u32 %v405, 3
    %v407 = vand.u32 %v405, 7
    %v408 = vsub.s32 0, %v407
    %v409 = vsel %vm403, %v408, %v407
    %vm410 = vcmp.lt.s32.totalorder %v208, 0
    %v411 = vsub.s32 0, %v208
    %v412 = vsel %vm410, %v411, %v208
    %v413 = vshrl.u32 %v412, 3
    %v414 = vand.u32 %v412, 7
    %v415 = vsub.s32 0, %v414
    %v416 = vsel %vm410, %v415, %v414
    %vm417 = vcmp.lt.s32.totalorder %v209, 0
    %v418 = vsub.s32 0, %v209
    %v419 = vsel %vm417, %v418, %v209
    %v420 = vshrl.u32 %v419, 3
    %v421 = vand.u32 %v419, 7
    %v422 = vsub.s32 0, %v421
    %v423 = vsel %vm417, %v422, %v421
    %vm424 = vcmp.lt.s32.totalorder %v210, 0
    %v425 = vsub.s32 0, %v210
    %v426 = vsel %vm424, %v425, %v210
    %v427 = vshrl.u32 %v426, 3
    %v428 = vand.u32 %v426, 7
    %v429 = vsub.s32 0, %v428
    %v430 = vsel %vm424, %v429, %v428
    %vm431 = vcmp.lt.s32.totalorder %v211, 0
    %v432 = vsub.s32 0, %v211
    %v433 = vsel %vm431, %v432, %v211
    %v434 = vshrl.u32 %v433, 3
    %v435 = vand.u32 %v433, 7
    %v436 = vsub.s32 0, %v435
    %v437 = vsel %vm431, %v436, %v435
    %vm438 = vcmp.ne.s32.totalorder %v220, 0
    %vm439 = vcmp.ne.s32.totalorder %v227, 0
    %vm440 = vcmp.ne.s32.totalorder %v234, 0
    %vm441 = vcmp.ne.s32.totalorder %v241, 0
    %vm442 = vcmp.ne.s32.totalorder %v248, 0
    %vm443 = vcmp.ne.s32.totalorder %v255, 0
    %vm444 = vcmp.ne.s32.totalorder %v262, 0
    %vm445 = vcmp.ne.s32.totalorder %v269, 0
    %vm446 = vcmp.ne.s32.totalorder %v276, 0
    %vm447 = vcmp.ne.s32.totalorder %v283, 0
    %vm448 = vcmp.ne.s32.totalorder %v290, 0
    %vm449 = vcmp.ne.s32.totalorder %v297, 0
    %vm450 = vcmp.ne.s32.totalorder %v304, 0
    %vm451 = vcmp.ne.s32.totalorder %v311, 0
    %vm452 = vcmp.ne.s32.totalorder %v318, 0
    %vm453 = vcmp.ne.s32.totalorder %v325, 0
    %vm454 = vcmp.ne.s32.totalorder %v332, 0
    %vm455 = vcmp.ne.s32.totalorder %v339, 0
    %vm456 = vcmp.ne.s32.totalorder %v346, 0
    %vm457 = vcmp.ne.s32.totalorder %v353, 0
    %vm458 = vcmp.ne.s32.totalorder %v360, 0
    %vm459 = vcmp.ne.s32.totalorder %v367, 0
    %vm460 = vcmp.ne.s32.totalorder %v374, 0
    %vm461 = vcmp.ne.s32.totalorder %v381, 0
    %vm462 = vcmp.ne.s32.totalorder %v388, 0
    %vm463 = vcmp.ne.s32.totalorder %v395, 0
    %vm464 = vcmp.ne.s32.totalorder %v402, 0
    %vm465 = vcmp.ne.s32.totalorder %v409, 0
    %vm466 = vcmp.ne.s32.totalorder %v416, 0
    %vm467 = vcmp.ne.s32.totalorder %v423, 0
    %vm468 = vcmp.ne.s32.totalorder %v430, 0
    %vm469 = vcmp.ne.s32.totalorder %v437, 0
    %vm470 = vcmp.lt.s32.totalorder %v220, 0
    %vm471 = vcmp.lt.s32.totalorder %v227, 0
    %vm472 = vcmp.lt.s32.totalorder %v234, 0
    %vm473 = vcmp.lt.s32.totalorder %v241, 0
    %vm474 = vcmp.lt.s32.totalorder %v248, 0
    %vm475 = vcmp.lt.s32.totalorder %v255, 0
    %vm476 = vcmp.lt.s32.totalorder %v262, 0
    %vm477 = vcmp.lt.s32.totalorder %v269, 0
    %vm478 = vcmp.lt.s32.totalorder %v276, 0
    %vm479 = vcmp.lt.s32.totalorder %v283, 0
    %vm480 = vcmp.lt.s32.totalorder %v290, 0
    %vm481 = vcmp.lt.s32.totalorder %v297, 0
    %vm482 = vcmp.lt.s32.totalorder %v304, 0
    %vm483 = vcmp.lt.s32.totalorder %v311, 0
    %vm484 = vcmp.lt.s32.totalorder %v318, 0
    %vm485 = vcmp.lt.s32.totalorder %v325, 0
    %vm486 = vcmp.lt.s32.totalorder %v332, 0
    %vm487 = vcmp.lt.s32.totalorder %v339, 0
    %vm488 = vcmp.lt.s32.totalorder %v346, 0
    %vm489 = vcmp.lt.s32.totalorder %v353, 0
    %vm490 = vcmp.lt.s32.totalorder %v360, 0
    %vm491 = vcmp.lt.s32.totalorder %v367, 0
    %vm492 = vcmp.lt.s32.totalorder %v374, 0
    %vm493 = vcmp.lt.s32.totalorder %v381, 0
    %vm494 = vcmp.lt.s32.totalorder %v388, 0
    %vm495 = vcmp.lt.s32.totalorder %v395, 0
    %vm496 = vcmp.lt.s32.totalorder %v402, 0
    %vm497 = vcmp.lt.s32.totalorder %v409, 0
    %vm498 = vcmp.lt.s32.totalorder %v416, 0
    %vm499 = vcmp.lt.s32.totalorder %v423, 0
    %vm500 = vcmp.lt.s32.totalorder %v430, 0
    %vm501 = vcmp.lt.s32.totalorder %v437, 0
    %vm502 = vmand %vm470, %vm438
    %vm503 = vmand %vm471, %vm439
    %vm504 = vmand %vm472, %vm440
    %vm505 = vmand %vm473, %vm441
    %vm506 = vmand %vm474, %vm442
    %vm507 = vmand %vm475, %vm443
    %vm508 = vmand %vm476, %vm444
    %vm509 = vmand %vm477, %vm445
    %vm510 = vmand %vm478, %vm446
    %vm511 = vmand %vm479, %vm447
    %vm512 = vmand %vm480, %vm448
    %vm513 = vmand %vm481, %vm449
    %vm514 = vmand %vm482, %vm450
    %vm515 = vmand %vm483, %vm451
    %vm516 = vmand %vm484, %vm452
    %vm517 = vmand %vm485, %vm453
    %vm518 = vmand %vm486, %vm454
    %vm519 = vmand %vm487, %vm455
    %vm520 = vmand %vm488, %vm456
    %vm521 = vmand %vm489, %vm457
    %vm522 = vmand %vm490, %vm458
    %vm523 = vmand %vm491, %vm459
    %vm524 = vmand %vm492, %vm460
    %vm525 = vmand %vm493, %vm461
    %vm526 = vmand %vm494, %vm462
    %vm527 = vmand %vm495, %vm463
    %vm528 = vmand %vm496, %vm464
    %vm529 = vmand %vm497, %vm465
    %vm530 = vmand %vm498, %vm466
    %vm531 = vmand %vm499, %vm467
    %vm532 = vmand %vm500, %vm468
    %vm533 = vmand %vm501, %vm469
    %v534 = vadd.s32 %v220, 8
    %v535 = vadd.s32 %v227, 8
    %v536 = vadd.s32 %v234, 8
    %v537 = vadd.s32 %v241, 8
    %v538 = vadd.s32 %v248, 8
    %v539 = vadd.s32 %v255, 8
    %v540 = vadd.s32 %v262, 8
    %v541 = vadd.s32 %v269, 8
    %v542 = vadd.s32 %v276, 8
    %v543 = vadd.s32 %v283, 8
    %v544 = vadd.s32 %v290, 8
    %v545 = vadd.s32 %v297, 8
    %v546 = vadd.s32 %v304, 8
    %v547 = vadd.s32 %v311, 8
    %v548 = vadd.s32 %v318, 8
    %v549 = vadd.s32 %v325, 8
    %v550 = vadd.s32 %v332, 8
    %v551 = vadd.s32 %v339, 8
    %v552 = vadd.s32 %v346, 8
    %v553 = vadd.s32 %v353, 8
    %v554 = vadd.s32 %v360, 8
    %v555 = vadd.s32 %v367, 8
    %v556 = vadd.s32 %v374, 8
    %v557 = vadd.s32 %v381, 8
    %v558 = vadd.s32 %v388, 8
    %v559 = vadd.s32 %v395, 8
    %v560 = vadd.s32 %v402, 8
    %v561 = vadd.s32 %v409, 8
    %v562 = vadd.s32 %v416, 8
    %v563 = vadd.s32 %v423, 8
    %v564 = vadd.s32 %v430, 8
    %v565 = vadd.s32 %v437, 8
    %v566 = vsel %vm502, %v534, %v220
    %v567 = vsel %vm503, %v535, %v227
    %v568 = vsel %vm504, %v536, %v234
    %v569 = vsel %vm505, %v537, %v241
    %v570 = vsel %vm506, %v538, %v248
    %v571 = vsel %vm507, %v539, %v255
    %v572 = vsel %vm508, %v540, %v262
    %v573 = vsel %vm509, %v541, %v269
    %v574 = vsel %vm510, %v542, %v276
    %v575 = vsel %vm511, %v543, %v283
    %v576 = vsel %vm512, %v544, %v290
    %v577 = vsel %vm513, %v545, %v297
    %v578 = vsel %vm514, %v546, %v304
    %v579 = vsel %vm515, %v547, %v311
    %v580 = vsel %vm516, %v548, %v318
    %v581 = vsel %vm517, %v549, %v325
    %v582 = vsel %vm518, %v550, %v332
    %v583 = vsel %vm519, %v551, %v339
    %v584 = vsel %vm520, %v552, %v346
    %v585 = vsel %vm521, %v553, %v353
    %v586 = vsel %vm522, %v554, %v360
    %v587 = vsel %vm523, %v555, %v367
    %v588 = vsel %vm524, %v556, %v374
    %v589 = vsel %vm525, %v557, %v381
    %v590 = vsel %vm526, %v558, %v388
    %v591 = vsel %vm527, %v559, %v395
    %v592 = vsel %vm528, %v560, %v402
    %v593 = vsel %vm529, %v561, %v409
    %v594 = vsel %vm530, %v562, %v416
    %v595 = vsel %vm531, %v563, %v423
    %v596 = vsel %vm532, %v564, %v430
    %v597 = vsel %vm533, %v565, %v437
    %vm598 = vcmp.eq.s32.totalorder %v566, %v213
    %vm599 = vcmp.eq.s32.totalorder %v567, %v213
    %vm600 = vcmp.eq.s32.totalorder %v568, %v213
    %vm601 = vcmp.eq.s32.totalorder %v569, %v213
    %vm602 = vcmp.eq.s32.totalorder %v570, %v213
    %vm603 = vcmp.eq.s32.totalorder %v571, %v213
    %vm604 = vcmp.eq.s32.totalorder %v572, %v213
    %vm605 = vcmp.eq.s32.totalorder %v573, %v213
    %vm606 = vcmp.eq.s32.totalorder %v574, %v213
    %vm607 = vcmp.eq.s32.totalorder %v575, %v213
    %vm608 = vcmp.eq.s32.totalorder %v576, %v213
    %vm609 = vcmp.eq.s32.totalorder %v577, %v213
    %vm610 = vcmp.eq.s32.totalorder %v578, %v213
    %vm611 = vcmp.eq.s32.totalorder %v579, %v213
    %vm612 = vcmp.eq.s32.totalorder %v580, %v213
    %vm613 = vcmp.eq.s32.totalorder %v581, %v213
    %vm614 = vcmp.eq.s32.totalorder %v582, %v213
    %vm615 = vcmp.eq.s32.totalorder %v583, %v213
    %vm616 = vcmp.eq.s32.totalorder %v584, %v213
    %vm617 = vcmp.eq.s32.totalorder %v585, %v213
    %vm618 = vcmp.eq.s32.totalorder %v586, %v213
    %vm619 = vcmp.eq.s32.totalorder %v587, %v213
    %vm620 = vcmp.eq.s32.totalorder %v588, %v213
    %vm621 = vcmp.eq.s32.totalorder %v589, %v213
    %vm622 = vcmp.eq.s32.totalorder %v590, %v213
    %vm623 = vcmp.eq.s32.totalorder %v591, %v213
    %vm624 = vcmp.eq.s32.totalorder %v592, %v213
    %vm625 = vcmp.eq.s32.totalorder %v593, %v213
    %vm626 = vcmp.eq.s32.totalorder %v594, %v213
    %vm627 = vcmp.eq.s32.totalorder %v595, %v213
    %vm628 = vcmp.eq.s32.totalorder %v596, %v213
    %vm629 = vcmp.eq.s32.totalorder %v597, %v213
    %v630 = vsel %vm598, 1.0, 0.0
    %v631 = vsel %vm599, 1.0, 0.0
    %v632 = vsel %vm600, 1.0, 0.0
    %v633 = vsel %vm601, 1.0, 0.0
    %v634 = vsel %vm602, 1.0, 0.0
    %v635 = vsel %vm603, 1.0, 0.0
    %v636 = vsel %vm604, 1.0, 0.0
    %v637 = vsel %vm605, 1.0, 0.0
    %v638 = vsel %vm606, 1.0, 0.0
    %v639 = vsel %vm607, 1.0, 0.0
    %v640 = vsel %vm608, 1.0, 0.0
    %v641 = vsel %vm609, 1.0, 0.0
    %v642 = vsel %vm610, 1.0, 0.0
    %v643 = vsel %vm611, 1.0, 0.0
    %v644 = vsel %vm612, 1.0, 0.0
    %v645 = vsel %vm613, 1.0, 0.0
    %v646 = vsel %vm614, 1.0, 0.0
    %v647 = vsel %vm615, 1.0, 0.0
    %v648 = vsel %vm616, 1.0, 0.0
    %v649 = vsel %vm617, 1.0, 0.0
    %v650 = vsel %vm618, 1.0, 0.0
    %v651 = vsel %vm619, 1.0, 0.0
    %v652 = vsel %vm620, 1.0, 0.0
    %v653 = vsel %vm621, 1.0, 0.0
    %v654 = vsel %vm622, 1.0, 0.0
    %v655 = vsel %vm623, 1.0, 0.0
    %v656 = vsel %vm624, 1.0, 0.0
    %v657 = vsel %vm625, 1.0, 0.0
    %v658 = vsel %vm626, 1.0, 0.0
    %v659 = vsel %vm627, 1.0, 0.0
    %v660 = vsel %vm628, 1.0, 0.0
    %v661 = vsel %vm629, 1.0, 0.0
    %v662 = vadd.s32 %v213, 128
    %vm663 = vcmp.lt.s32.totalorder %v213, 0
    %v664 = vsub.s32 0, %v213
    %v665 = vsel %vm663, %v664, %v213
    %v666 = vshrl.u32 %v665, 3
    %v667 = vand.u32 %v665, 7
    %v668 = vsub.s32 0, %v667
    %v669 = vsel %vm663, %v668, %v667
    %vm670 = vcmp.lt.s32.totalorder %v662, 0
    %v671 = vsub.s32 0, %v662
    %v672 = vsel %vm670, %v671, %v662
    %v673 = vshrl.u32 %v672, 3
    %v674 = vand.u32 %v672, 7
    %v675 = vsub.s32 0, %v674
    %v676 = vsel %vm670, %v675, %v674
    %vm677 = vcmp.ne.s32.totalorder %v669, 0
    %vm678 = vcmp.ne.s32.totalorder %v676, 0
    %vm679 = vcmp.lt.s32.totalorder %v669, 0
    %vm680 = vcmp.lt.s32.totalorder %v676, 0
    %vm681 = vmand %vm679, %vm677
    %vm682 = vmand %vm680, %vm678
    %v683 = vadd.s32 %v669, 8
    %v684 = vadd.s32 %v676, 8
    %v685 = vsel %vm681, %v683, %v669
    %v686 = vsel %vm682, %v684, %v676
    %vm687 = vcmp.eq.s32.totalorder %v685, %v180
    %vm688 = vcmp.eq.s32.totalorder %v686, %v180
    %v689 = vsel %vm687, 1.0, 0.0
    %v690 = vsel %vm688, 1.0, 0.0
    %vm691 = vcmask 1041408
    %v692 = vsel %vm691, %v175, 0.0
    %v693 = vrot.slane %v692, 4
    %v694 = vadd.f32 %v692, %v693
    %v695 = vrot.slane %v694, 2
    %v696 = vadd.f32 %v694, %v695
    %v697 = vrot.slane %v696, 1
    %v698 = vadd.f32 %v696, %v697
    %v699 = vsel %vm691, %v177, 0.0
    %v700 = vrot.slane %v699, 4
    %v701 = vadd.f32 %v699, %v700
    %v702 = vrot.slane %v701, 2
    %v703 = vadd.f32 %v701, %v702
    %v704 = vrot.slane %v703, 1
    %v705 = vadd.f32 %v703, %v704
    %706 = vmatprep.subr.mxu0 0.0
    %707 = vmatpush1.msra.mxu0 %v630
    %708 = vmatprep.subr.mxu0 0.0
    %709 = vmatpush1.msra.mxu0 %v631
    %710 = vmatprep.subr.mxu0 0.0
    %711 = vmatpush1.msra.mxu0 %v632
    %712 = vmatprep.subr.mxu0 0.0
    %713 = vmatpush1.msra.mxu0 %v633
    %714 = vmatprep.subr.mxu0 0.0
    %715 = vmatpush1.msra.mxu0 %v634
    %716 = vmatprep.subr.mxu0 0.0
    %717 = vmatpush1.msra.mxu0 %v635
    %718 = vmatprep.subr.mxu0 0.0
    %719 = vmatpush1.msra.mxu0 %v636
    %720 = vmatprep.subr.mxu0 0.0
    %721 = vmatpush1.msra.mxu0 %v637
    %722 = vmatprep.subr.mxu0 0.0
    %723 = vmatpush1.msra.mxu0 %v638
    %724 = vmatprep.subr.mxu0 0.0
    %725 = vmatpush1.msra.mxu0 %v639
    %726 = vmatprep.subr.mxu0 0.0
    %727 = vmatpush1.msra.mxu0 %v640
    %728 = vmatprep.subr.mxu0 0.0
    %729 = vmatpush1.msra.mxu0 %v641
    %730 = vmatprep.subr.mxu0 0.0
    %731 = vmatpush1.msra.mxu0 %v642
    %732 = vmatprep.subr.mxu0 0.0
    %733 = vmatpush1.msra.mxu0 %v643
    %734 = vmatprep.subr.mxu0 0.0
    %735 = vmatpush1.msra.mxu0 %v644
    %736 = vmatprep.subr.mxu0 0.0
    %737 = vmatpush1.msra.mxu0 %v645
    %738 = vmatprep.subr.mxu0 0.0
    %739 = vmatpush1.msra.mxu0 %v646
    %740 = vmatprep.subr.mxu0 0.0
    %741 = vmatpush1.msra.mxu0 %v647
    %742 = vmatprep.subr.mxu0 0.0
    %743 = vmatpush1.msra.mxu0 %v648
    %744 = vmatprep.subr.mxu0 0.0
    %745 = vmatpush1.msra.mxu0 %v649
    %746 = vmatprep.subr.mxu0 0.0
    %747 = vmatpush1.msra.mxu0 %v650
    %748 = vmatprep.subr.mxu0 0.0
    %749 = vmatpush1.msra.mxu0 %v651
    %750 = vmatprep.subr.mxu0 0.0
    %751 = vmatpush1.msra.mxu0 %v652
    %752 = vmatprep.subr.mxu0 0.0
    %753 = vmatpush1.msra.mxu0 %v653
    %754 = vmatprep.subr.mxu0 0.0
    %755 = vmatpush1.msra.mxu0 %v654
    %756 = vmatprep.subr.mxu0 0.0
    %757 = vmatpush1.msra.mxu0 %v655
    %758 = vmatprep.subr.mxu0 0.0
    %759 = vmatpush1.msra.mxu0 %v656
    %760 = vmatprep.subr.mxu0 0.0
    %761 = vmatpush1.msra.mxu0 %v657
    %762 = vmatprep.subr.mxu0 0.0
    %763 = vmatpush1.msra.mxu0 %v658
    %764 = vmatprep.subr.mxu0 0.0
    %765 = vmatpush1.msra.mxu0 %v659
    %766 = vmatprep.subr.mxu0 0.0
    %767 = vmatpush1.msra.mxu0 %v660
    %768 = vmatprep.subr.mxu0 0.0
    %769 = vmatpush1.msra.mxu0 %v661
    %770 = vmatprep.mubr.f32.mxu0 %v705
    %771 = vmatmul.mubr.f32.gmra.mrb[0].mxu0 %v698
    %v772 = vpop.f32.mrb[0].mxu0
    %v773 = vadd.f32 0.0, %v772
    %v774 = vpop.f32.mrb[0].mxu0
    %775 = vdwg.mxu0
    %v776 = vmul.f32 %v773, 0.015625
    %vm777 = vcmask 64512
    %v779 = vsel %vm777, %v776, 0
    %781 = vmatprep.subr.mxu0 %v690
    %782 = vmatpush1.msra.mxu0 %v689
    %783 = vmatprep.subr.mxu0 0.0
    %784 = vmatpush1.msra.mxu0 0.0
    %785 = vmatprep.subr.mxu0 0.0
    %786 = vmatpush1.msra.mxu0 0.0
    %787 = vmatprep.subr.mxu0 0.0
    %788 = vmatpush1.msra.mxu0 0.0
    %789 = vmatprep.subr.mxu0 0.0
    %790 = vmatpush1.msra.mxu0 0.0
    %791 = vmatprep.subr.mxu0 0.0
    %792 = vmatpush1.msra.mxu0 0.0
    %793 = vmatprep.subr.mxu0 0.0
    %794 = vmatpush1.msra.mxu0 0.0
    %795 = vmatprep.subr.mxu0 0.0
    %796 = vmatpush1.msra.mxu0 0.0
    %797 = vmatprep.subr.mxu0 0.0
    %798 = vmatpush1.msra.mxu0 0.0
    %799 = vmatprep.subr.mxu0 0.0
    %800 = vmatpush1.msra.mxu0 0.0
    %801 = vmatprep.subr.mxu0 0.0
    %802 = vmatpush1.msra.mxu0 0.0
    %803 = vmatprep.subr.mxu0 0.0
    %804 = vmatpush1.msra.mxu0 0.0
    %805 = vmatprep.subr.mxu0 0.0
    %806 = vmatpush1.msra.mxu0 0.0
    %807 = vmatprep.subr.mxu0 0.0
    %808 = vmatpush1.msra.mxu0 0.0
    %809 = vmatprep.subr.mxu0 0.0
    %810 = vmatpush1.msra.mxu0 0.0
    %811 = vmatprep.subr.mxu0 0.0
    %812 = vmatpush1.msra.mxu0 0.0
    %813 = vmatprep.subr.mxu0 0.0
    %814 = vmatpush1.msra.mxu0 0.0
    %815 = vmatprep.subr.mxu0 0.0
    %816 = vmatpush1.msra.mxu0 0.0
    %817 = vmatprep.subr.mxu0 0.0
    %818 = vmatpush1.msra.mxu0 0.0
    %819 = vmatprep.subr.mxu0 0.0
    %820 = vmatpush1.msra.mxu0 0.0
    %821 = vmatprep.subr.mxu0 0.0
    %822 = vmatpush1.msra.mxu0 0.0
    %823 = vmatprep.subr.mxu0 0.0
    %824 = vmatpush1.msra.mxu0 0.0
    %825 = vmatprep.subr.mxu0 0.0
    %826 = vmatpush1.msra.mxu0 0.0
    %827 = vmatprep.subr.mxu0 0.0
    %828 = vmatpush1.msra.mxu0 0.0
    %829 = vmatprep.subr.mxu0 0.0
    %830 = vmatpush1.msra.mxu0 0.0
    %831 = vmatprep.subr.mxu0 0.0
    %832 = vmatpush1.msra.mxu0 0.0
    %833 = vmatprep.subr.mxu0 0.0
    %834 = vmatpush1.msra.mxu0 0.0
    %835 = vmatprep.subr.mxu0 0.0
    %836 = vmatpush1.msra.mxu0 0.0
    %837 = vmatprep.subr.mxu0 0.0
    %838 = vmatpush1.msra.mxu0 0.0
    %839 = vmatprep.subr.mxu0 0.0
    %840 = vmatpush1.msra.mxu0 0.0
    %841 = vmatprep.subr.mxu0 0.0
    %842 = vmatpush1.msra.mxu0 0.0
    %843 = vmatprep.subr.mxu0 0.0
    %844 = vmatpush1.msra.mxu0 0.0
    %845 = vmatprep.mubr.f32.mxu0 0.0
    %846 = vmatmul.mubr.f32.gmra.mrb[0].mxu0 %v779
    %v847 = vpop.f32.mrb[0].mxu0
    %v848 = vadd.f32 0.0, %v847
    %v849 = vpop.f32.mrb[0].mxu0
    %v850 = vadd.f32 0.0, %v849
    %851 = vdwg.mxu0
    %v852 = vlaneseq
    %v853 = vshrl.u32 %v852, 7
    %v854 = vsub.s32 0, %v853
    %v855 = vrot.slane %v848, %v854
    %v856 = vlaneseq
    %v857 = vshrl.u32 %v856, 7
    %v858 = vsub.s32 0, %v857
    %v859 = vrot.slane %v850, %v858
    %v860 = vsub.f32 %v175, %v855
    %v861 = vsub.f32 %v177, %v859
    %v862 = vmul.f32 %v860, %v860
    %v863 = vmul.f32 %v861, %v861
    %v864 = vsel %vm691, %v862, 0.0
    %v865 = vrot.slane %v864, 4
    %v866 = vadd.f32 %v864, %v865
    %v867 = vrot.slane %v866, 2
    %v868 = vadd.f32 %v866, %v867
    %v869 = vrot.slane %v868, 1
    %v870 = vadd.f32 %v868, %v869
    %v871 = vsel %vm691, %v863, 0.0
    %v872 = vrot.slane %v871, 4
    %v873 = vadd.f32 %v871, %v872
    %v874 = vrot.slane %v873, 2
    %v875 = vadd.f32 %v873, %v874
    %v876 = vrot.slane %v875, 1
    %v877 = vadd.f32 %v875, %v876
    %878 = vmatprep.subr.mxu0 0.0
    %879 = vmatpush1.msra.mxu0 %v630
    %880 = vmatprep.subr.mxu0 0.0
    %881 = vmatpush1.msra.mxu0 %v631
    %882 = vmatprep.subr.mxu0 0.0
    %883 = vmatpush1.msra.mxu0 %v632
    %884 = vmatprep.subr.mxu0 0.0
    %885 = vmatpush1.msra.mxu0 %v633
    %886 = vmatprep.subr.mxu0 0.0
    %887 = vmatpush1.msra.mxu0 %v634
    %888 = vmatprep.subr.mxu0 0.0
    %889 = vmatpush1.msra.mxu0 %v635
    %890 = vmatprep.subr.mxu0 0.0
    %891 = vmatpush1.msra.mxu0 %v636
    %892 = vmatprep.subr.mxu0 0.0
    %893 = vmatpush1.msra.mxu0 %v637
    %894 = vmatprep.subr.mxu0 0.0
    %895 = vmatpush1.msra.mxu0 %v638
    %896 = vmatprep.subr.mxu0 0.0
    %897 = vmatpush1.msra.mxu0 %v639
    %898 = vmatprep.subr.mxu0 0.0
    %899 = vmatpush1.msra.mxu0 %v640
    %900 = vmatprep.subr.mxu0 0.0
    %901 = vmatpush1.msra.mxu0 %v641
    %902 = vmatprep.subr.mxu0 0.0
    %903 = vmatpush1.msra.mxu0 %v642
    %904 = vmatprep.subr.mxu0 0.0
    %905 = vmatpush1.msra.mxu0 %v643
    %906 = vmatprep.subr.mxu0 0.0
    %907 = vmatpush1.msra.mxu0 %v644
    %908 = vmatprep.subr.mxu0 0.0
    %909 = vmatpush1.msra.mxu0 %v645
    %910 = vmatprep.subr.mxu0 0.0
    %911 = vmatpush1.msra.mxu0 %v646
    %912 = vmatprep.subr.mxu0 0.0
    %913 = vmatpush1.msra.mxu0 %v647
    %914 = vmatprep.subr.mxu0 0.0
    %915 = vmatpush1.msra.mxu0 %v648
    %916 = vmatprep.subr.mxu0 0.0
    %917 = vmatpush1.msra.mxu0 %v649
    %918 = vmatprep.subr.mxu0 0.0
    %919 = vmatpush1.msra.mxu0 %v650
    %920 = vmatprep.subr.mxu0 0.0
    %921 = vmatpush1.msra.mxu0 %v651
    %922 = vmatprep.subr.mxu0 0.0
    %923 = vmatpush1.msra.mxu0 %v652
    %924 = vmatprep.subr.mxu0 0.0
    %925 = vmatpush1.msra.mxu0 %v653
    %926 = vmatprep.subr.mxu0 0.0
    %927 = vmatpush1.msra.mxu0 %v654
    %928 = vmatprep.subr.mxu0 0.0
    %929 = vmatpush1.msra.mxu0 %v655
    %930 = vmatprep.subr.mxu0 0.0
    %931 = vmatpush1.msra.mxu0 %v656
    %932 = vmatprep.subr.mxu0 0.0
    %933 = vmatpush1.msra.mxu0 %v657
    %934 = vmatprep.subr.mxu0 0.0
    %935 = vmatpush1.msra.mxu0 %v658
    %936 = vmatprep.subr.mxu0 0.0
    %937 = vmatpush1.msra.mxu0 %v659
    %938 = vmatprep.subr.mxu0 0.0
    %939 = vmatpush1.msra.mxu0 %v660
    %940 = vmatprep.subr.mxu0 0.0
    %941 = vmatpush1.msra.mxu0 %v661
    %942 = vmatprep.mubr.f32.mxu0 %v877
    %943 = vmatmul.mubr.f32.gmra.mrb[0].mxu0 %v870
    %v944 = vpop.f32.mrb[0].mxu0
    %v945 = vadd.f32 0.0, %v944
    %v946 = vpop.f32.mrb[0].mxu0
    %947 = vdwg.mxu0
    %v948 = vmul.f32 %v945, 0.015625
    %v949 = vadd.f32 %v948, 1e-05
    %v950 = vrsqrt.pop %v949
    %v952 = vsel %vm777, %v950, 0
    %954 = vmatprep.subr.mxu0 %v690
    %955 = vmatpush1.msra.mxu0 %v689
    %956 = vmatprep.subr.mxu0 0.0
    %957 = vmatpush1.msra.mxu0 0.0
    %958 = vmatprep.subr.mxu0 0.0
    %959 = vmatpush1.msra.mxu0 0.0
    %960 = vmatprep.subr.mxu0 0.0
    %961 = vmatpush1.msra.mxu0 0.0
    %962 = vmatprep.subr.mxu0 0.0
    %963 = vmatpush1.msra.mxu0 0.0
    %964 = vmatprep.subr.mxu0 0.0
    %965 = vmatpush1.msra.mxu0 0.0
    %966 = vmatprep.subr.mxu0 0.0
    %967 = vmatpush1.msra.mxu0 0.0
    %968 = vmatprep.subr.mxu0 0.0
    %969 = vmatpush1.msra.mxu0 0.0
    %970 = vmatprep.subr.mxu0 0.0
    %971 = vmatpush1.msra.mxu0 0.0
    %972 = vmatprep.subr.mxu0 0.0
    %973 = vmatpush1.msra.mxu0 0.0
    %974 = vmatprep.subr.mxu0 0.0
    %975 = vmatpush1.msra.mxu0 0.0
    %976 = vmatprep.subr.mxu0 0.0
    %977 = vmatpush1.msra.mxu0 0.0
    %978 = vmatprep.subr.mxu0 0.0
    %979 = vmatpush1.msra.mxu0 0.0
    %980 = vmatprep.subr.mxu0 0.0
    %981 = vmatpush1.msra.mxu0 0.0
    %982 = vmatprep.subr.mxu0 0.0
    %983 = vmatpush1.msra.mxu0 0.0
    %984 = vmatprep.subr.mxu0 0.0
    %985 = vmatpush1.msra.mxu0 0.0
    %986 = vmatprep.subr.mxu0 0.0
    %987 = vmatpush1.msra.mxu0 0.0
    %988 = vmatprep.subr.mxu0 0.0
    %989 = vmatpush1.msra.mxu0 0.0
    %990 = vmatprep.subr.mxu0 0.0
    %991 = vmatpush1.msra.mxu0 0.0
    %992 = vmatprep.subr.mxu0 0.0
    %993 = vmatpush1.msra.mxu0 0.0
    %994 = vmatprep.subr.mxu0 0.0
    %995 = vmatpush1.msra.mxu0 0.0
    %996 = vmatprep.subr.mxu0 0.0
    %997 = vmatpush1.msra.mxu0 0.0
    %998 = vmatprep.subr.mxu0 0.0
    %999 = vmatpush1.msra.mxu0 0.0
    %1000 = vmatprep.subr.mxu0 0.0
    %1001 = vmatpush1.msra.mxu0 0.0
    %1002 = vmatprep.subr.mxu0 0.0
    %1003 = vmatpush1.msra.mxu0 0.0
    %1004 = vmatprep.subr.mxu0 0.0
    %1005 = vmatpush1.msra.mxu0 0.0
    %1006 = vmatprep.subr.mxu0 0.0
    %1007 = vmatpush1.msra.mxu0 0.0
    %1008 = vmatprep.subr.mxu0 0.0
    %1009 = vmatpush1.msra.mxu0 0.0
    %1010 = vmatprep.subr.mxu0 0.0
    %1011 = vmatpush1.msra.mxu0 0.0
    %1012 = vmatprep.subr.mxu0 0.0
    %1013 = vmatpush1.msra.mxu0 0.0
    %1014 = vmatprep.subr.mxu0 0.0
    %1015 = vmatpush1.msra.mxu0 0.0
    %1016 = vmatprep.subr.mxu0 0.0
    %1017 = vmatpush1.msra.mxu0 0.0
    %1018 = vmatprep.mubr.f32.mxu0 0.0
    %1019 = vmatmul.mubr.f32.gmra.mrb[0].mxu0 %v952
    %v1020 = vpop.f32.mrb[0].mxu0
    %v1021 = vadd.f32 0.0, %v1020
    %v1022 = vpop.f32.mrb[0].mxu0
    %v1023 = vadd.f32 0.0, %v1022
    %1024 = vdwg.mxu0
    %v1025 = vlaneseq
    %v1026 = vshrl.u32 %v1025, 7
    %v1027 = vsub.s32 0, %v1026
    %v1028 = vrot.slane %v1021, %v1027
    %v1029 = vlaneseq
    %v1030 = vshrl.u32 %v1029, 7
    %v1031 = vsub.s32 0, %v1030
    %v1032 = vrot.slane %v1023, %v1031
    %v1033 = vmul.f32 %v860, %v1028
    %v1034 = vmul.f32 %v861, %v1032
    %v1035 = vmax.f32 %v1033, 0.0
    %v1036 = vmax.f32 %v1034, 0.0
    %v1037 = vld [vmem:[#allocation7] sm:$0xff]
    %v1038 = vld [vmem:[#allocation7 + $0x8] sm:$0xff]
    %v1039 = vld [vmem:[#allocation7 + $0x10] sm:$0xff]
    %v1040 = vld [vmem:[#allocation7 + $0x18] sm:$0xff]
    %v1041 = vld [vmem:[#allocation7 + $0x20] sm:$0xff]
    %v1042 = vld [vmem:[#allocation7 + $0x28] sm:$0xff]
    %v1043 = vld [vmem:[#allocation7 + $0x30] sm:$0xff]
    %v1044 = vld [vmem:[#allocation7 + $0x38] sm:$0xff]
    %v1045 = vld [vmem:[#allocation7 + $0x40] sm:$0xff]
    %v1046 = vld [vmem:[#allocation7 + $0x48] sm:$0xff]
    %v1047 = vld [vmem:[#allocation7 + $0x50] sm:$0xff]
    %v1048 = vld [vmem:[#allocation7 + $0x58] sm:$0xff]
    %v1049 = vld [vmem:[#allocation7 + $0x60] sm:$0xff]
    %v1050 = vld [vmem:[#allocation7 + $0x68] sm:$0xff]
    %v1051 = vld [vmem:[#allocation7 + $0x70] sm:$0xff]
    %v1052 = vld [vmem:[#allocation7 + $0x78] sm:$0xff]
    %v1053 = vld [vmem:[#allocation7 + $0x80] sm:$0xff]
    %v1054 = vld [vmem:[#allocation7 + $0x88] sm:$0xff]
    %v1055 = vld [vmem:[#allocation7 + $0x90] sm:$0xff]
    %v1056 = vld [vmem:[#allocation7 + $0x98] sm:$0xff]
    %v1057 = vld [vmem:[#allocation7 + $0xa0] sm:$0xff]
    %v1058 = vld [vmem:[#allocation7 + $0xa8] sm:$0xff]
    %v1059 = vld [vmem:[#allocation7 + $0xb0] sm:$0xff]
    %v1060 = vld [vmem:[#allocation7 + $0xb8] sm:$0xff]
    %v1061 = vld [vmem:[#allocation7 + $0xc0] sm:$0xff]
    %v1062 = vld [vmem:[#allocation7 + $0xc8] sm:$0xff]
    %v1063 = vld [vmem:[#allocation7 + $0xd0] sm:$0xff]
    %v1064 = vld [vmem:[#allocation7 + $0xd8] sm:$0xff]
    %v1065 = vld [vmem:[#allocation7 + $0xe0] sm:$0xff]
    %v1066 = vld [vmem:[#allocation7 + $0xe8] sm:$0xff]
    %v1067 = vld [vmem:[#allocation7 + $0xf0] sm:$0xff]
    %v1068 = vld [vmem:[#allocation7 + $0xf8] sm:$0xff]
    %v1069 = vld [vmem:[#allocation7 + $0x100] sm:$0xff]
    %v1070 = vld [vmem:[#allocation7 + $0x108] sm:$0xff]
    %v1071 = vld [vmem:[#allocation7 + $0x110] sm:$0xff]
    %v1072 = vld [vmem:[#allocation7 + $0x118] sm:$0xff]
    %v1073 = vld [vmem:[#allocation7 + $0x120] sm:$0xff]
    %v1074 = vld [vmem:[#allocation7 + $0x128] sm:$0xff]
    %v1075 = vld [vmem:[#allocation7 + $0x130] sm:$0xff]
    %v1076 = vld [vmem:[#allocation7 + $0x138] sm:$0xff]
    %v1077 = vld [vmem:[#allocation7 + $0x140] sm:$0xff]
    %v1078 = vld [vmem:[#allocation7 + $0x148] sm:$0xff]
    %v1079 = vld [vmem:[#allocation7 + $0x150] sm:$0xff]
    %v1080 = vld [vmem:[#allocation7 + $0x158] sm:$0xff]
    %v1081 = vld [vmem:[#allocation7 + $0x160] sm:$0xff]
    %v1082 = vld [vmem:[#allocation7 + $0x168] sm:$0xff]
    %v1083 = vld [vmem:[#allocation7 + $0x170] sm:$0xff]
    %v1084 = vld [vmem:[#allocation7 + $0x178] sm:$0xff]
    %v1085 = vld [vmem:[#allocation7 + $0x180] sm:$0xff]
    %v1086 = vld [vmem:[#allocation7 + $0x188] sm:$0xff]
    %v1087 = vld [vmem:[#allocation7 + $0x190] sm:$0xff]
    %v1088 = vld [vmem:[#allocation7 + $0x198] sm:$0xff]
    %v1089 = vld [vmem:[#allocation7 + $0x1a0] sm:$0xff]
    %v1090 = vld [vmem:[#allocation7 + $0x1a8] sm:$0xff]
    %v1091 = vld [vmem:[#allocation7 + $0x1b0] sm:$0xff]
    %v1092 = vld [vmem:[#allocation7 + $0x1b8] sm:$0xff]
    %v1093 = vld [vmem:[#allocation7 + $0x1c0] sm:$0xff]
    %v1094 = vld [vmem:[#allocation7 + $0x1c8] sm:$0xff]
    %v1095 = vld [vmem:[#allocation7 + $0x1d0] sm:$0xff]
    %v1096 = vld [vmem:[#allocation7 + $0x1d8] sm:$0xff]
    %v1097 = vld [vmem:[#allocation7 + $0x1e0] sm:$0xff]
    %v1098 = vld [vmem:[#allocation7 + $0x1e8] sm:$0xff]
    %v1099 = vld [vmem:[#allocation7 + $0x1f0] sm:$0xff]
    %v1100 = vld [vmem:[#allocation7 + $0x1f8] sm:$0xff]
    %1101 = vmatprep.subr.mxu0 %v1038
    %1102 = vmatpush1.msra.mxu0 %v1037
    %1103 = vmatprep.subr.mxu0 %v1040
    %1104 = vmatpush1.msra.mxu0 %v1039
    %1105 = vmatprep.subr.mxu0 %v1042
    %1106 = vmatpush1.msra.mxu0 %v1041
    %1107 = vmatprep.subr.mxu0 %v1044
    %1108 = vmatpush1.msra.mxu0 %v1043
    %1109 = vmatprep.subr.mxu0 %v1046
    %1110 = vmatpush1.msra.mxu0 %v1045
    %1111 = vmatprep.subr.mxu0 %v1048
    %1112 = vmatpush1.msra.mxu0 %v1047
    %1113 = vmatprep.subr.mxu0 %v1050
    %1114 = vmatpush1.msra.mxu0 %v1049
    %1115 = vmatprep.subr.mxu0 %v1052
    %1116 = vmatpush1.msra.mxu0 %v1051
    %1117 = vmatprep.subr.mxu0 %v1054
    %1118 = vmatpush1.msra.mxu0 %v1053
    %1119 = vmatprep.subr.mxu0 %v1056
    %1120 = vmatpush1.msra.mxu0 %v1055
    %1121 = vmatprep.subr.mxu0 %v1058
    %1122 = vmatpush1.msra.mxu0 %v1057
    %1123 = vmatprep.subr.mxu0 %v1060
    %1124 = vmatpush1.msra.mxu0 %v1059
    %1125 = vmatprep.subr.mxu0 %v1062
    %1126 = vmatpush1.msra.mxu0 %v1061
    %1127 = vmatprep.subr.mxu0 %v1064
    %1128 = vmatpush1.msra.mxu0 %v1063
    %1129 = vmatprep.subr.mxu0 %v1066
    %1130 = vmatpush1.msra.mxu0 %v1065
    %1131 = vmatprep.subr.mxu0 %v1068
    %1132 = vmatpush1.msra.mxu0 %v1067
    %1133 = vmatprep.subr.mxu0 %v1070
    %1134 = vmatpush1.msra.mxu0 %v1069
    %1135 = vmatprep.subr.mxu0 %v1072
    %1136 = vmatpush1.msra.mxu0 %v1071
    %1137 = vmatprep.subr.mxu0 %v1074
    %1138 = vmatpush1.msra.mxu0 %v1073
    %1139 = vmatprep.subr.mxu0 %v1076
    %1140 = vmatpush1.msra.mxu0 %v1075
    %1141 = vmatprep.subr.mxu0 %v1078
    %1142 = vmatpush1.msra.mxu0 %v1077
    %1143 = vmatprep.subr.mxu0 %v1080
    %1144 = vmatpush1.msra.mxu0 %v1079
    %1145 = vmatprep.subr.mxu0 %v1082
    %1146 = vmatpush1.msra.mxu0 %v1081
    %1147 = vmatprep.subr.mxu0 %v1084
    %1148 = vmatpush1.msra.mxu0 %v1083
    %1149 = vmatprep.subr.mxu0 %v1086
    %1150 = vmatpush1.msra.mxu0 %v1085
    %1151 = vmatprep.subr.mxu0 %v1088
    %1152 = vmatpush1.msra.mxu0 %v1087
    %1153 = vmatprep.subr.mxu0 %v1090
    %1154 = vmatpush1.msra.mxu0 %v1089
    %1155 = vmatprep.subr.mxu0 %v1092
    %1156 = vmatpush1.msra.mxu0 %v1091
    %1157 = vmatprep.subr.mxu0 %v1094
    %1158 = vmatpush1.msra.mxu0 %v1093
    %1159 = vmatprep.subr.mxu0 %v1096
    %1160 = vmatpush1.msra.mxu0 %v1095
    %1161 = vmatprep.subr.mxu0 %v1098
    %1162 = vmatpush1.msra.mxu0 %v1097
    %1163 = vmatprep.subr.mxu0 %v1100
    %1164 = vmatpush1.msra.mxu0 %v1099
    %1165 = vmatprep.mubr.f32.mxu0 %v1036
    %1166 = vmatmul.mubr.f32.gmra.mrb[0].mxu0 %v1035
    %v1167 = vpop.f32.mrb[0].mxu0
    %v1168 = vadd.f32 0.0, %v1167
    %v1169 = vpop.f32.mrb[0].mxu0
    %v1170 = vadd.f32 0.0, %v1169
    %1171 = vdwg.mxu0
    %vm1172 = vcmp.lt.s32.totalorder %v180, 0
    %v1173 = vsub.s32 0, %v180
    %v1174 = vsel %vm1172, %v1173, %v180
    %v1175 = vshrl.u32 %v1174, 4
    %v1176 = vand.u32 %v1174, 15
    %v1177 = vsub.s32 0, %v1176
    %v1178 = vsel %vm1172, %v1177, %v1176
    %vm1179 = vcmp.lt.s32.totalorder %v181, 0
    %v1180 = vsub.s32 0, %v181
    %v1181 = vsel %vm1179, %v1180, %v181
    %v1182 = vshrl.u32 %v1181, 4
    %v1183 = vand.u32 %v1181, 15
    %v1184 = vsub.s32 0, %v1183
    %v1185 = vsel %vm1179, %v1184, %v1183
    %vm1186 = vcmp.lt.s32.totalorder %v182, 0
    %v1187 = vsub.s32 0, %v182
    %v1188 = vsel %vm1186, %v1187, %v182
    %v1189 = vshrl.u32 %v1188, 4
    %v1190 = vand.u32 %v1188, 15
    %v1191 = vsub.s32 0, %v1190
    %v1192 = vsel %vm1186, %v1191, %v1190
    %vm1193 = vcmp.lt.s32.totalorder %v183, 0
    %v1194 = vsub.s32 0, %v183
    %v1195 = vsel %vm1193, %v1194, %v183
    %v1196 = vshrl.u32 %v1195, 4
    %v1197 = vand.u32 %v1195, 15
    %v1198 = vsub.s32 0, %v1197
    %v1199 = vsel %vm1193, %v1198, %v1197
    %vm1200 = vcmp.lt.s32.totalorder %v184, 0
    %v1201 = vsub.s32 0, %v184
    %v1202 = vsel %vm1200, %v1201, %v184
    %v1203 = vshrl.u32 %v1202, 4
    %v1204 = vand.u32 %v1202, 15
    %v1205 = vsub.s32 0, %v1204
    %v1206 = vsel %vm1200, %v1205, %v1204
    %vm1207 = vcmp.lt.s32.totalorder %v185, 0
    %v1208 = vsub.s32 0, %v185
    %v1209 = vsel %vm1207, %v1208, %v185
    %v1210 = vshrl.u32 %v1209, 4
    %v1211 = vand.u32 %v1209, 15
    %v1212 = vsub.s32 0, %v1211
    %v1213 = vsel %vm1207, %v1212, %v1211
    %vm1214 = vcmp.lt.s32.totalorder %v186, 0
    %v1215 = vsub.s32 0, %v186
    %v1216 = vsel %vm1214, %v1215, %v186
    %v1217 = vshrl.u32 %v1216, 4
    %v1218 = vand.u32 %v1216, 15
    %v1219 = vsub.s32 0, %v1218
    %v1220 = vsel %vm1214, %v1219, %v1218
    %vm1221 = vcmp.lt.s32.totalorder %v187, 0
    %v1222 = vsub.s32 0, %v187
    %v1223 = vsel %vm1221, %v1222, %v187
    %v1224 = vshrl.u32 %v1223, 4
    %v1225 = vand.u32 %v1223, 15
    %v1226 = vsub.s32 0, %v1225
    %v1227 = vsel %vm1221, %v1226, %v1225
    %vm1228 = vcmp.lt.s32.totalorder %v188, 0
    %v1229 = vsub.s32 0, %v188
    %v1230 = vsel %vm1228, %v1229, %v188
    %v1231 = vshrl.u32 %v1230, 4
    %v1232 = vand.u32 %v1230, 15
    %v1233 = vsub.s32 0, %v1232
    %v1234 = vsel %vm1228, %v1233, %v1232
    %vm1235 = vcmp.lt.s32.totalorder %v189, 0
    %v1236 = vsub.s32 0, %v189
    %v1237 = vsel %vm1235, %v1236, %v189
    %v1238 = vshrl.u32 %v1237, 4
    %v1239 = vand.u32 %v1237, 15
    %v1240 = vsub.s32 0, %v1239
    %v1241 = vsel %vm1235, %v1240, %v1239
    %vm1242 = vcmp.lt.s32.totalorder %v190, 0
    %v1243 = vsub.s32 0, %v190
    %v1244 = vsel %vm1242, %v1243, %v190
    %v1245 = vshrl.u32 %v1244, 4
    %v1246 = vand.u32 %v1244, 15
    %v1247 = vsub.s32 0, %v1246
    %v1248 = vsel %vm1242, %v1247, %v1246
    %vm1249 = vcmp.lt.s32.totalorder %v191, 0
    %v1250 = vsub.s32 0, %v191
    %v1251 = vsel %vm1249, %v1250, %v191
    %v1252 = vshrl.u32 %v1251, 4
    %v1253 = vand.u32 %v1251, 15
    %v1254 = vsub.s32 0, %v1253
    %v1255 = vsel %vm1249, %v1254, %v1253
    %vm1256 = vcmp.lt.s32.totalorder %v192, 0
    %v1257 = vsub.s32 0, %v192
    %v1258 = vsel %vm1256, %v1257, %v192
    %v1259 = vshrl.u32 %v1258, 4
    %v1260 = vand.u32 %v1258, 15
    %v1261 = vsub.s32 0, %v1260
    %v1262 = vsel %vm1256, %v1261, %v1260
    %vm1263 = vcmp.lt.s32.totalorder %v193, 0
    %v1264 = vsub.s32 0, %v193
    %v1265 = vsel %vm1263, %v1264, %v193
    %v1266 = vshrl.u32 %v1265, 4
    %v1267 = vand.u32 %v1265, 15
    %v1268 = vsub.s32 0, %v1267
    %v1269 = vsel %vm1263, %v1268, %v1267
    %vm1270 = vcmp.lt.s32.totalorder %v194, 0
    %v1271 = vsub.s32 0, %v194
    %v1272 = vsel %vm1270, %v1271, %v194
    %v1273 = vshrl.u32 %v1272, 4
    %v1274 = vand.u32 %v1272, 15
    %v1275 = vsub.s32 0, %v1274
    %v1276 = vsel %vm1270, %v1275, %v1274
    %vm1277 = vcmp.lt.s32.totalorder %v195, 0
    %v1278 = vsub.s32 0, %v195
    %v1279 = vsel %vm1277, %v1278, %v195
    %v1280 = vshrl.u32 %v1279, 4
    %v1281 = vand.u32 %v1279, 15
    %v1282 = vsub.s32 0, %v1281
    %v1283 = vsel %vm1277, %v1282, %v1281
    %vm1284 = vcmp.lt.s32.totalorder %v196, 0
    %v1285 = vsub.s32 0, %v196
    %v1286 = vsel %vm1284, %v1285, %v196
    %v1287 = vshrl.u32 %v1286, 4
    %v1288 = vand.u32 %v1286, 15
    %v1289 = vsub.s32 0, %v1288
    %v1290 = vsel %vm1284, %v1289, %v1288
    %vm1291 = vcmp.lt.s32.totalorder %v197, 0
    %v1292 = vsub.s32 0, %v197
    %v1293 = vsel %vm1291, %v1292, %v197
    %v1294 = vshrl.u32 %v1293, 4
    %v1295 = vand.u32 %v1293, 15
    %v1296 = vsub.s32 0, %v1295
    %v1297 = vsel %vm1291, %v1296, %v1295
    %vm1298 = vcmp.lt.s32.totalorder %v198, 0
    %v1299 = vsub.s32 0, %v198
    %v1300 = vsel %vm1298, %v1299, %v198
    %v1301 = vshrl.u32 %v1300, 4
    %v1302 = vand.u32 %v1300, 15
    %v1303 = vsub.s32 0, %v1302
    %v1304 = vsel %vm1298, %v1303, %v1302
    %vm1305 = vcmp.lt.s32.totalorder %v199, 0
    %v1306 = vsub.s32 0, %v199
    %v1307 = vsel %vm1305, %v1306, %v199
    %v1308 = vshrl.u32 %v1307, 4
    %v1309 = vand.u32 %v1307, 15
    %v1310 = vsub.s32 0, %v1309
    %v1311 = vsel %vm1305, %v1310, %v1309
    %vm1312 = vcmp.lt.s32.totalorder %v200, 0
    %v1313 = vsub.s32 0, %v200
    %v1314 = vsel %vm1312, %v1313, %v200
    %v1315 = vshrl.u32 %v1314, 4
    %v1316 = vand.u32 %v1314, 15
    %v1317 = vsub.s32 0, %v1316
    %v1318 = vsel %vm1312, %v1317, %v1316
    %vm1319 = vcmp.lt.s32.totalorder %v201, 0
    %v1320 = vsub.s32 0, %v201
    %v1321 = vsel %vm1319, %v1320, %v201
    %v1322 = vshrl.u32 %v1321, 4
    %v1323 = vand.u32 %v1321, 15
    %v1324 = vsub.s32 0, %v1323
    %v1325 = vsel %vm1319, %v1324, %v1323
    %vm1326 = vcmp.lt.s32.totalorder %v202, 0
    %v1327 = vsub.s32 0, %v202
    %v1328 = vsel %vm1326, %v1327, %v202
    %v1329 = vshrl.u32 %v1328, 4
    %v1330 = vand.u32 %v1328, 15
    %v1331 = vsub.s32 0, %v1330
    %v1332 = vsel %vm1326, %v1331, %v1330
    %vm1333 = vcmp.lt.s32.totalorder %v203, 0
    %v1334 = vsub.s32 0, %v203
    %v1335 = vsel %vm1333, %v1334, %v203
    %v1336 = vshrl.u32 %v1335, 4
    %v1337 = vand.u32 %v1335, 15
    %v1338 = vsub.s32 0, %v1337
    %v1339 = vsel %vm1333, %v1338, %v1337
    %vm1340 = vcmp.lt.s32.totalorder %v204, 0
    %v1341 = vsub.s32 0, %v204
    %v1342 = vsel %vm1340, %v1341, %v204
    %v1343 = vshrl.u32 %v1342, 4
    %v1344 = vand.u32 %v1342, 15
    %v1345 = vsub.s32 0, %v1344
    %v1346 = vsel %vm1340, %v1345, %v1344
    %vm1347 = vcmp.lt.s32.totalorder %v205, 0
    %v1348 = vsub.s32 0, %v205
    %v1349 = vsel %vm1347, %v1348, %v205
    %v1350 = vshrl.u32 %v1349, 4
    %v1351 = vand.u32 %v1349, 15
    %v1352 = vsub.s32 0, %v1351
    %v1353 = vsel %vm1347, %v1352, %v1351
    %vm1354 = vcmp.lt.s32.totalorder %v206, 0
    %v1355 = vsub.s32 0, %v206
    %v1356 = vsel %vm1354, %v1355, %v206
    %v1357 = vshrl.u32 %v1356, 4
    %v1358 = vand.u32 %v1356, 15
    %v1359 = vsub.s32 0, %v1358
    %v1360 = vsel %vm1354, %v1359, %v1358
    %vm1361 = vcmp.lt.s32.totalorder %v207, 0
    %v1362 = vsub.s32 0, %v207
    %v1363 = vsel %vm1361, %v1362, %v207
    %v1364 = vshrl.u32 %v1363, 4
    %v1365 = vand.u32 %v1363, 15
    %v1366 = vsub.s32 0, %v1365
    %v1367 = vsel %vm1361, %v1366, %v1365
    %vm1368 = vcmp.lt.s32.totalorder %v208, 0
    %v1369 = vsub.s32 0, %v208
    %v1370 = vsel %vm1368, %v1369, %v208
    %v1371 = vshrl.u32 %v1370, 4
    %v1372 = vand.u32 %v1370, 15
    %v1373 = vsub.s32 0, %v1372
    %v1374 = vsel %vm1368, %v1373, %v1372
    %vm1375 = vcmp.lt.s32.totalorder %v209, 0
    %v1376 = vsub.s32 0, %v209
    %v1377 = vsel %vm1375, %v1376, %v209
    %v1378 = vshrl.u32 %v1377, 4
    %v1379 = vand.u32 %v1377, 15
    %v1380 = vsub.s32 0, %v1379
    %v1381 = vsel %vm1375, %v1380, %v1379
    %vm1382 = vcmp.lt.s32.totalorder %v210, 0
    %v1383 = vsub.s32 0, %v210
    %v1384 = vsel %vm1382, %v1383, %v210
    %v1385 = vshrl.u32 %v1384, 4
    %v1386 = vand.u32 %v1384, 15
    %v1387 = vsub.s32 0, %v1386
    %v1388 = vsel %vm1382, %v1387, %v1386
    %vm1389 = vcmp.lt.s32.totalorder %v211, 0
    %v1390 = vsub.s32 0, %v211
    %v1391 = vsel %vm1389, %v1390, %v211
    %v1392 = vshrl.u32 %v1391, 4
    %v1393 = vand.u32 %v1391, 15
    %v1394 = vsub.s32 0, %v1393
    %v1395 = vsel %vm1389, %v1394, %v1393
    %vm1396 = vcmp.ne.s32.totalorder %v1178, 0
    %vm1397 = vcmp.ne.s32.totalorder %v1185, 0
    %vm1398 = vcmp.ne.s32.totalorder %v1192, 0
    %vm1399 = vcmp.ne.s32.totalorder %v1199, 0
    %vm1400 = vcmp.ne.s32.totalorder %v1206, 0
    %vm1401 = vcmp.ne.s32.totalorder %v1213, 0
    %vm1402 = vcmp.ne.s32.totalorder %v1220, 0
    %vm1403 = vcmp.ne.s32.totalorder %v1227, 0
    %vm1404 = vcmp.ne.s32.totalorder %v1234, 0
    %vm1405 = vcmp.ne.s32.totalorder %v1241, 0
    %vm1406 = vcmp.ne.s32.totalorder %v1248, 0
    %vm1407 = vcmp.ne.s32.totalorder %v1255, 0
    %vm1408 = vcmp.ne.s32.totalorder %v1262, 0
    %vm1409 = vcmp.ne.s32.totalorder %v1269, 0
    %vm1410 = vcmp.ne.s32.totalorder %v1276, 0
    %vm1411 = vcmp.ne.s32.totalorder %v1283, 0
    %vm1412 = vcmp.ne.s32.totalorder %v1290, 0
    %vm1413 = vcmp.ne.s32.totalorder %v1297, 0
    %vm1414 = vcmp.ne.s32.totalorder %v1304, 0
    %vm1415 = vcmp.ne.s32.totalorder %v1311, 0
    %vm1416 = vcmp.ne.s32.totalorder %v1318, 0
    %vm1417 = vcmp.ne.s32.totalorder %v1325, 0
    %vm1418 = vcmp.ne.s32.totalorder %v1332, 0
    %vm1419 = vcmp.ne.s32.totalorder %v1339, 0
    %vm1420 = vcmp.ne.s32.totalorder %v1346, 0
    %vm1421 = vcmp.ne.s32.totalorder %v1353, 0
    %vm1422 = vcmp.ne.s32.totalorder %v1360, 0
    %vm1423 = vcmp.ne.s32.totalorder %v1367, 0
    %vm1424 = vcmp.ne.s32.totalorder %v1374, 0
    %vm1425 = vcmp.ne.s32.totalorder %v1381, 0
    %vm1426 = vcmp.ne.s32.totalorder %v1388, 0
    %vm1427 = vcmp.ne.s32.totalorder %v1395, 0
    %vm1428 = vcmp.lt.s32.totalorder %v1178, 0
    %vm1429 = vcmp.lt.s32.totalorder %v1185, 0
    %vm1430 = vcmp.lt.s32.totalorder %v1192, 0
    %vm1431 = vcmp.lt.s32.totalorder %v1199, 0
    %vm1432 = vcmp.lt.s32.totalorder %v1206, 0
    %vm1433 = vcmp.lt.s32.totalorder %v1213, 0
    %vm1434 = vcmp.lt.s32.totalorder %v1220, 0
    %vm1435 = vcmp.lt.s32.totalorder %v1227, 0
    %vm1436 = vcmp.lt.s32.totalorder %v1234, 0
    %vm1437 = vcmp.lt.s32.totalorder %v1241, 0
    %vm1438 = vcmp.lt.s32.totalorder %v1248, 0
    %vm1439 = vcmp.lt.s32.totalorder %v1255, 0
    %vm1440 = vcmp.lt.s32.totalorder %v1262, 0
    %vm1441 = vcmp.lt.s32.totalorder %v1269, 0
    %vm1442 = vcmp.lt.s32.totalorder %v1276, 0
    %vm1443 = vcmp.lt.s32.totalorder %v1283, 0
    %vm1444 = vcmp.lt.s32.totalorder %v1290, 0
    %vm1445 = vcmp.lt.s32.totalorder %v1297, 0
    %vm1446 = vcmp.lt.s32.totalorder %v1304, 0
    %vm1447 = vcmp.lt.s32.totalorder %v1311, 0
    %vm1448 = vcmp.lt.s32.totalorder %v1318, 0
    %vm1449 = vcmp.lt.s32.totalorder %v1325, 0
    %vm1450 = vcmp.lt.s32.totalorder %v1332, 0
    %vm1451 = vcmp.lt.s32.totalorder %v1339, 0
    %vm1452 = vcmp.lt.s32.totalorder %v1346, 0
    %vm1453 = vcmp.lt.s32.totalorder %v1353, 0
    %vm1454 = vcmp.lt.s32.totalorder %v1360, 0
    %vm1455 = vcmp.lt.s32.totalorder %v1367, 0
    %vm1456 = vcmp.lt.s32.totalorder %v1374, 0
    %vm1457 = vcmp.lt.s32.totalorder %v1381, 0
    %vm1458 = vcmp.lt.s32.totalorder %v1388, 0
    %vm1459 = vcmp.lt.s32.totalorder %v1395, 0
    %vm1460 = vmand %vm1428, %vm1396
    %vm1461 = vmand %vm1429, %vm1397
    %vm1462 = vmand %vm1430, %vm1398
    %vm1463 = vmand %vm1431, %vm1399
    %vm1464 = vmand %vm1432, %vm1400
    %vm1465 = vmand %vm1433, %vm1401
    %vm1466 = vmand %vm1434, %vm1402
    %vm1467 = vmand %vm1435, %vm1403
    %vm1468 = vmand %vm1436, %vm1404
    %vm1469 = vmand %vm1437, %vm1405
    %vm1470 = vmand %vm1438, %vm1406
    %vm1471 = vmand %vm1439, %vm1407
    %vm1472 = vmand %vm1440, %vm1408
    %vm1473 = vmand %vm1441, %vm1409
    %vm1474 = vmand %vm1442, %vm1410
    %vm1475 = vmand %vm1443, %vm1411
    %vm1476 = vmand %vm1444, %vm1412
    %vm1477 = vmand %vm1445, %vm1413
    %vm1478 = vmand %vm1446, %vm1414
    %vm1479 = vmand %vm1447, %vm1415
    %vm1480 = vmand %vm1448, %vm1416
    %vm1481 = vmand %vm1449, %vm1417
    %vm1482 = vmand %vm1450, %vm1418
    %vm1483 = vmand %vm1451, %vm1419
    %vm1484 = vmand %vm1452, %vm1420
    %vm1485 = vmand %vm1453, %vm1421
    %vm1486 = vmand %vm1454, %vm1422
    %vm1487 = vmand %vm1455, %vm1423
    %vm1488 = vmand %vm1456, %vm1424
    %vm1489 = vmand %vm1457, %vm1425
    %vm1490 = vmand %vm1458, %vm1426
    %vm1491 = vmand %vm1459, %vm1427
    %v1492 = vadd.s32 %v1178, 16
    %v1493 = vadd.s32 %v1185, 16
    %v1494 = vadd.s32 %v1192, 16
    %v1495 = vadd.s32 %v1199, 16
    %v1496 = vadd.s32 %v1206, 16
    %v1497 = vadd.s32 %v1213, 16
    %v1498 = vadd.s32 %v1220, 16
    %v1499 = vadd.s32 %v1227, 16
    %v1500 = vadd.s32 %v1234, 16
    %v1501 = vadd.s32 %v1241, 16
    %v1502 = vadd.s32 %v1248, 16
    %v1503 = vadd.s32 %v1255, 16
    %v1504 = vadd.s32 %v1262, 16
    %v1505 = vadd.s32 %v1269, 16
    %v1506 = vadd.s32 %v1276, 16
    %v1507 = vadd.s32 %v1283, 16
    %v1508 = vadd.s32 %v1290, 16
    %v1509 = vadd.s32 %v1297, 16
    %v1510 = vadd.s32 %v1304, 16
    %v1511 = vadd.s32 %v1311, 16
    %v1512 = vadd.s32 %v1318, 16
    %v1513 = vadd.s32 %v1325, 16
    %v1514 = vadd.s32 %v1332, 16
    %v1515 = vadd.s32 %v1339, 16
    %v1516 = vadd.s32 %v1346, 16
    %v1517 = vadd.s32 %v1353, 16
    %v1518 = vadd.s32 %v1360, 16
    %v1519 = vadd.s32 %v1367, 16
    %v1520 = vadd.s32 %v1374, 16
    %v1521 = vadd.s32 %v1381, 16
    %v1522 = vadd.s32 %v1388, 16
    %v1523 = vadd.s32 %v1395, 16
    %v1524 = vsel %vm1460, %v1492, %v1178
    %v1525 = vsel %vm1461, %v1493, %v1185
    %v1526 = vsel %vm1462, %v1494, %v1192
    %v1527 = vsel %vm1463, %v1495, %v1199
    %v1528 = vsel %vm1464, %v1496, %v1206
    %v1529 = vsel %vm1465, %v1497, %v1213
    %v1530 = vsel %vm1466, %v1498, %v1220
    %v1531 = vsel %vm1467, %v1499, %v1227
    %v1532 = vsel %vm1468, %v1500, %v1234
    %v1533 = vsel %vm1469, %v1501, %v1241
    %v1534 = vsel %vm1470, %v1502, %v1248
    %v1535 = vsel %vm1471, %v1503, %v1255
    %v1536 = vsel %vm1472, %v1504, %v1262
    %v1537 = vsel %vm1473, %v1505, %v1269
    %v1538 = vsel %vm1474, %v1506, %v1276
    %v1539 = vsel %vm1475, %v1507, %v1283
    %v1540 = vsel %vm1476, %v1508, %v1290
    %v1541 = vsel %vm1477, %v1509, %v1297
    %v1542 = vsel %vm1478, %v1510, %v1304
    %v1543 = vsel %vm1479, %v1511, %v1311
    %v1544 = vsel %vm1480, %v1512, %v1318
    %v1545 = vsel %vm1481, %v1513, %v1325
    %v1546 = vsel %vm1482, %v1514, %v1332
    %v1547 = vsel %vm1483, %v1515, %v1339
    %v1548 = vsel %vm1484, %v1516, %v1346
    %v1549 = vsel %vm1485, %v1517, %v1353
    %v1550 = vsel %vm1486, %v1518, %v1360
    %v1551 = vsel %vm1487, %v1519, %v1367
    %v1552 = vsel %vm1488, %v1520, %v1374
    %v1553 = vsel %vm1489, %v1521, %v1381
    %v1554 = vsel %vm1490, %v1522, %v1388
    %v1555 = vsel %vm1491, %v1523, %v1395
    %vm1556 = vcmp.eq.s32.totalorder %v1524, %v213
    %vm1557 = vcmp.eq.s32.totalorder %v1525, %v213
    %vm1558 = vcmp.eq.s32.totalorder %v1526, %v213
    %vm1559 = vcmp.eq.s32.totalorder %v1527, %v213
    %vm1560 = vcmp.eq.s32.totalorder %v1528, %v213
    %vm1561 = vcmp.eq.s32.totalorder %v1529, %v213
    %vm1562 = vcmp.eq.s32.totalorder %v1530, %v213
    %vm1563 = vcmp.eq.s32.totalorder %v1531, %v213
    %vm1564 = vcmp.eq.s32.totalorder %v1532, %v213
    %vm1565 = vcmp.eq.s32.totalorder %v1533, %v213
    %vm1566 = vcmp.eq.s32.totalorder %v1534, %v213
    %vm1567 = vcmp.eq.s32.totalorder %v1535, %v213
    %vm1568 = vcmp.eq.s32.totalorder %v1536, %v213
    %vm1569 = vcmp.eq.s32.totalorder %v1537, %v213
    %vm1570 = vcmp.eq.s32.totalorder %v1538, %v213
    %vm1571 = vcmp.eq.s32.totalorder %v1539, %v213
    %vm1572 = vcmp.eq.s32.totalorder %v1540, %v213
    %vm1573 = vcmp.eq.s32.totalorder %v1541, %v213
    %vm1574 = vcmp.eq.s32.totalorder %v1542, %v213
    %vm1575 = vcmp.eq.s32.totalorder %v1543, %v213
    %vm1576 = vcmp.eq.s32.totalorder %v1544, %v213
    %vm1577 = vcmp.eq.s32.totalorder %v1545, %v213
    %vm1578 = vcmp.eq.s32.totalorder %v1546, %v213
    %vm1579 = vcmp.eq.s32.totalorder %v1547, %v213
    %vm1580 = vcmp.eq.s32.totalorder %v1548, %v213
    %vm1581 = vcmp.eq.s32.totalorder %v1549, %v213
    %vm1582 = vcmp.eq.s32.totalorder %v1550, %v213
    %vm1583 = vcmp.eq.s32.totalorder %v1551, %v213
    %vm1584 = vcmp.eq.s32.totalorder %v1552, %v213
    %vm1585 = vcmp.eq.s32.totalorder %v1553, %v213
    %vm1586 = vcmp.eq.s32.totalorder %v1554, %v213
    %vm1587 = vcmp.eq.s32.totalorder %v1555, %v213
    %v1588 = vsel %vm1556, 1.0, 0.0
    %v1589 = vsel %vm1557, 1.0, 0.0
    %v1590 = vsel %vm1558, 1.0, 0.0
    %v1591 = vsel %vm1559, 1.0, 0.0
    %v1592 = vsel %vm1560, 1.0, 0.0
    %v1593 = vsel %vm1561, 1.0, 0.0
    %v1594 = vsel %vm1562, 1.0, 0.0
    %v1595 = vsel %vm1563, 1.0, 0.0
    %v1596 = vsel %vm1564, 1.0, 0.0
    %v1597 = vsel %vm1565, 1.0, 0.0
    %v1598 = vsel %vm1566, 1.0, 0.0
    %v1599 = vsel %vm1567, 1.0, 0.0
    %v1600 = vsel %vm1568, 1.0, 0.0
    %v1601 = vsel %vm1569, 1.0, 0.0
    %v1602 = vsel %vm1570, 1.0, 0.0
    %v1603 = vsel %vm1571, 1.0, 0.0
    %v1604 = vsel %vm1572, 1.0, 0.0
    %v1605 = vsel %vm1573, 1.0, 0.0
    %v1606 = vsel %vm1574, 1.0, 0.0
    %v1607 = vsel %vm1575, 1.0, 0.0
    %v1608 = vsel %vm1576, 1.0, 0.0
    %v1609 = vsel %vm1577, 1.0, 0.0
    %v1610 = vsel %vm1578, 1.0, 0.0
    %v1611 = vsel %vm1579, 1.0, 0.0
    %v1612 = vsel %vm1580, 1.0, 0.0
    %v1613 = vsel %vm1581, 1.0, 0.0
    %v1614 = vsel %vm1582, 1.0, 0.0
    %v1615 = vsel %vm1583, 1.0, 0.0
    %v1616 = vsel %vm1584, 1.0, 0.0
    %v1617 = vsel %vm1585, 1.0, 0.0
    %v1618 = vsel %vm1586, 1.0, 0.0
    %v1619 = vsel %vm1587, 1.0, 0.0
    %vm1620 = vcmp.lt.s32.totalorder %v213, 0
    %v1621 = vsub.s32 0, %v213
    %v1622 = vsel %vm1620, %v1621, %v213
    %v1623 = vshrl.u32 %v1622, 4
    %v1624 = vand.u32 %v1622, 15
    %v1625 = vsub.s32 0, %v1624
    %v1626 = vsel %vm1620, %v1625, %v1624
    %vm1627 = vcmp.lt.s32.totalorder %v662, 0
    %v1628 = vsub.s32 0, %v662
    %v1629 = vsel %vm1627, %v1628, %v662
    %v1630 = vshrl.u32 %v1629, 4
    %v1631 = vand.u32 %v1629, 15
    %v1632 = vsub.s32 0, %v1631
    %v1633 = vsel %vm1627, %v1632, %v1631
    %vm1634 = vcmp.ne.s32.totalorder %v1626, 0
    %vm1635 = vcmp.ne.s32.totalorder %v1633, 0
    %vm1636 = vcmp.lt.s32.totalorder %v1626, 0
    %vm1637 = vcmp.lt.s32.totalorder %v1633, 0
    %vm1638 = vmand %vm1636, %vm1634
    %vm1639 = vmand %vm1637, %vm1635
    %v1640 = vadd.s32 %v1626, 16
    %v1641 = vadd.s32 %v1633, 16
    %v1642 = vsel %vm1638, %v1640, %v1626
    %v1643 = vsel %vm1639, %v1641, %v1633
    %vm1644 = vcmp.eq.s32.totalorder %v1642, %v180
    %vm1645 = vcmp.eq.s32.totalorder %v1643, %v180
    %vm1646 = vcmp.eq.s32.totalorder %v1642, %v181
    %vm1647 = vcmp.eq.s32.totalorder %v1643, %v181
    %v1648 = vsel %vm1644, 1.0, 0.0
    %v1649 = vsel %vm1645, 1.0, 0.0
    %v1650 = vsel %vm1646, 1.0, 0.0
    %v1651 = vsel %vm1647, 1.0, 0.0
    %v1652 = vsel %vm691, %v1168, 0.0
    %v1653 = vrot.slane %v1652, 4
    %v1654 = vadd.f32 %v1652, %v1653
    %v1655 = vrot.slane %v1654, 2
    %v1656 = vadd.f32 %v1654, %v1655
    %v1657 = vrot.slane %v1656, 1
    %v1658 = vadd.f32 %v1656, %v1657
    %v1659 = vsel %vm691, %v1170, 0.0
    %v1660 = vrot.slane %v1659, 4
    %v1661 = vadd.f32 %v1659, %v1660
    %v1662 = vrot.slane %v1661, 2
    %v1663 = vadd.f32 %v1661, %v1662
    %v1664 = vrot.slane %v1663, 1
    %v1665 = vadd.f32 %v1663, %v1664
    %1666 = vmatprep.subr.mxu0 0.0
    %1667 = vmatpush1.msra.mxu0 %v1588
    %1668 = vmatprep.subr.mxu0 0.0
    %1669 = vmatpush1.msra.mxu0 %v1589
    %1670 = vmatprep.subr.mxu0 0.0
    %1671 = vmatpush1.msra.mxu0 %v1590
    %1672 = vmatprep.subr.mxu0 0.0
    %1673 = vmatpush1.msra.mxu0 %v1591
    %1674 = vmatprep.subr.mxu0 0.0
    %1675 = vmatpush1.msra.mxu0 %v1592
    %1676 = vmatprep.subr.mxu0 0.0
    %1677 = vmatpush1.msra.mxu0 %v1593
    %1678 = vmatprep.subr.mxu0 0.0
    %1679 = vmatpush1.msra.mxu0 %v1594
    %1680 = vmatprep.subr.mxu0 0.0
    %1681 = vmatpush1.msra.mxu0 %v1595
    %1682 = vmatprep.subr.mxu0 0.0
    %1683 = vmatpush1.msra.mxu0 %v1596
    %1684 = vmatprep.subr.mxu0 0.0
    %1685 = vmatpush1.msra.mxu0 %v1597
    %1686 = vmatprep.subr.mxu0 0.0
    %1687 = vmatpush1.msra.mxu0 %v1598
    %1688 = vmatprep.subr.mxu0 0.0
    %1689 = vmatpush1.msra.mxu0 %v1599
    %1690 = vmatprep.subr.mxu0 0.0
    %1691 = vmatpush1.msra.mxu0 %v1600
    %1692 = vmatprep.subr.mxu0 0.0
    %1693 = vmatpush1.msra.mxu0 %v1601
    %1694 = vmatprep.subr.mxu0 0.0
    %1695 = vmatpush1.msra.mxu0 %v1602
    %1696 = vmatprep.subr.mxu0 0.0
    %1697 = vmatpush1.msra.mxu0 %v1603
    %1698 = vmatprep.subr.mxu0 0.0
    %1699 = vmatpush1.msra.mxu0 %v1604
    %1700 = vmatprep.subr.mxu0 0.0
    %1701 = vmatpush1.msra.mxu0 %v1605
    %1702 = vmatprep.subr.mxu0 0.0
    %1703 = vmatpush1.msra.mxu0 %v1606
    %1704 = vmatprep.subr.mxu0 0.0
    %1705 = vmatpush1.msra.mxu0 %v1607
    %1706 = vmatprep.subr.mxu0 0.0
    %1707 = vmatpush1.msra.mxu0 %v1608
    %1708 = vmatprep.subr.mxu0 0.0
    %1709 = vmatpush1.msra.mxu0 %v1609
    %1710 = vmatprep.subr.mxu0 0.0
    %1711 = vmatpush1.msra.mxu0 %v1610
    %1712 = vmatprep.subr.mxu0 0.0
    %1713 = vmatpush1.msra.mxu0 %v1611
    %1714 = vmatprep.subr.mxu0 0.0
    %1715 = vmatpush1.msra.mxu0 %v1612
    %1716 = vmatprep.subr.mxu0 0.0
    %1717 = vmatpush1.msra.mxu0 %v1613
    %1718 = vmatprep.subr.mxu0 0.0
    %1719 = vmatpush1.msra.mxu0 %v1614
    %1720 = vmatprep.subr.mxu0 0.0
    %1721 = vmatpush1.msra.mxu0 %v1615
    %1722 = vmatprep.subr.mxu0 0.0
    %1723 = vmatpush1.msra.mxu0 %v1616
    %1724 = vmatprep.subr.mxu0 0.0
    %1725 = vmatpush1.msra.mxu0 %v1617
    %1726 = vmatprep.subr.mxu0 0.0
    %1727 = vmatpush1.msra.mxu0 %v1618
    %1728 = vmatprep.subr.mxu0 0.0
    %1729 = vmatpush1.msra.mxu0 %v1619
    %1730 = vmatprep.mubr.f32.mxu0 %v1665
    %1731 = vmatmul.mubr.f32.gmra.mrb[0].mxu0 %v1658
    %v1732 = vpop.f32.mrb[0].mxu0
    %v1733 = vadd.f32 0.0, %v1732
    %v1734 = vpop.f32.mrb[0].mxu0
    %1735 = vdwg.mxu0
    %v1736 = vmul.f32 %v1733, 0.03125
    %vm1737 = vcmask 130048
    %v1739 = vsel %vm1737, %v1736, 0
    %1741 = vmatprep.subr.mxu0 %v1649
    %1742 = vmatpush1.msra.mxu0 %v1648
    %1743 = vmatprep.subr.mxu0 %v1651
    %1744 = vmatpush1.msra.mxu0 %v1650
    %1745 = vmatprep.subr.mxu0 0.0
    %1746 = vmatpush1.msra.mxu0 0.0
    %1747 = vmatprep.subr.mxu0 0.0
    %1748 = vmatpush1.msra.mxu0 0.0
    %1749 = vmatprep.subr.mxu0 0.0
    %1750 = vmatpush1.msra.mxu0 0.0
    %1751 = vmatprep.subr.mxu0 0.0
    %1752 = vmatpush1.msra.mxu0 0.0
    %1753 = vmatprep.subr.mxu0 0.0
    %1754 = vmatpush1.msra.mxu0 0.0
    %1755 = vmatprep.subr.mxu0 0.0
    %1756 = vmatpush1.msra.mxu0 0.0
    %1757 = vmatprep.subr.mxu0 0.0
    %1758 = vmatpush1.msra.mxu0 0.0
    %1759 = vmatprep.subr.mxu0 0.0
    %1760 = vmatpush1.msra.mxu0 0.0
    %1761 = vmatprep.subr.mxu0 0.0
    %1762 = vmatpush1.msra.mxu0 0.0
    %1763 = vmatprep.subr.mxu0 0.0
    %1764 = vmatpush1.msra.mxu0 0.0
    %1765 = vmatprep.subr.mxu0 0.0
    %1766 = vmatpush1.msra.mxu0 0.0
    %1767 = vmatprep.subr.mxu0 0.0
    %1768 = vmatpush1.msra.mxu0 0.0
    %1769 = vmatprep.subr.mxu0 0.0
    %1770 = vmatpush1.msra.mxu0 0.0
    %1771 = vmatprep.subr.mxu0 0.0
    %1772 = vmatpush1.msra.mxu0 0.0
    %1773 = vmatprep.subr.mxu0 0.0
    %1774 = vmatpush1.msra.mxu0 0.0
    %1775 = vmatprep.subr.mxu0 0.0
    %1776 = vmatpush1.msra.mxu0 0.0
    %1777 = vmatprep.subr.mxu0 0.0
    %1778 = vmatpush1.msra.mxu0 0.0
    %1779 = vmatprep.subr.mxu0 0.0
    %1780 = vmatpush1.msra.mxu0 0.0
    %1781 = vmatprep.subr.mxu0 0.0
    %1782 = vmatpush1.msra.mxu0 0.0
    %1783 = vmatprep.subr.mxu0 0.0
    %1784 = vmatpush1.msra.mxu0 0.0
    %1785 = vmatprep.subr.mxu0 0.0
    %1786 = vmatpush1.msra.mxu0 0.0
    %1787 = vmatprep.subr.mxu0 0.0
    %1788 = vmatpush1.msra.mxu0 0.0
    %1789 = vmatprep.subr.mxu0 0.0
    %1790 = vmatpush1.msra.mxu0 0.0
    %1791 = vmatprep.subr.mxu0 0.0
    %1792 = vmatpush1.msra.mxu0 0.0
    %1793 = vmatprep.subr.mxu0 0.0
    %1794 = vmatpush1.msra.mxu0 0.0
    %1795 = vmatprep.subr.mxu0 0.0
    %1796 = vmatpush1.msra.mxu0 0.0
    %1797 = vmatprep.subr.mxu0 0.0
    %1798 = vmatpush1.msra.mxu0 0.0
    %1799 = vmatprep.subr.mxu0 0.0
    %1800 = vmatpush1.msra.mxu0 0.0
    %1801 = vmatprep.subr.mxu0 0.0
    %1802 = vmatpush1.msra.mxu0 0.0
    %1803 = vmatprep.subr.mxu0 0.0
    %1804 = vmatpush1.msra.mxu0 0.0
    %1805 = vmatprep.mubr.f32.mxu0 0.0
    %1806 = vmatmul.mubr.f32.gmra.mrb[0].mxu0 %v1739
    %v1807 = vpop.f32.mrb[0].mxu0
    %v1808 = vadd.f32 0.0, %v1807
    %v1809 = vpop.f32.mrb[0].mxu0
    %v1810 = vadd.f32 0.0, %v1809
    %1811 = vdwg.mxu0
    %v1812 = vlaneseq
    %v1813 = vshrl.u32 %v1812, 7
    %v1814 = vsub.s32 0, %v1813
    %v1815 = vrot.slane %v1808, %v1814
    %v1816 = vlaneseq
    %v1817 = vshrl.u32 %v1816, 7
    %v1818 = vsub.s32 0, %v1817
    %v1819 = vrot.slane %v1810, %v1818
    %v1820 = vsub.f32 %v1168, %v1815
    %v1821 = vsub.f32 %v1170, %v1819
    %v1822 = vmul.f32 %v1820, %v1820
    %v1823 = vmul.f32 %v1821, %v1821
    %v1824 = vsel %vm691, %v1822, 0.0
    %v1825 = vrot.slane %v1824, 4
    %v1826 = vadd.f32 %v1824, %v1825
    %v1827 = vrot.slane %v1826, 2
    %v1828 = vadd.f32 %v1826, %v1827
    %v1829 = vrot.slane %v1828, 1
    %v1830 = vadd.f32 %v1828, %v1829
    %v1831 = vsel %vm691, %v1823, 0.0
    %v1832 = vrot.slane %v1831, 4
    %v1833 = vadd.f32 %v1831, %v1832
    %v1834 = vrot.slane %v1833, 2
    %v1835 = vadd.f32 %v1833, %v1834
    %v1836 = vrot.slane %v1835, 1
    %v1837 = vadd.f32 %v1835, %v1836
    %1838 = vmatprep.subr.mxu0 0.0
    %1839 = vmatpush1.msra.mxu0 %v1588
    %1840 = vmatprep.subr.mxu0 0.0
    %1841 = vmatpush1.msra.mxu0 %v1589
    %1842 = vmatprep.subr.mxu0 0.0
    %1843 = vmatpush1.msra.mxu0 %v1590
    %1844 = vmatprep.subr.mxu0 0.0
    %1845 = vmatpush1.msra.mxu0 %v1591
    %1846 = vmatprep.subr.mxu0 0.0
    %1847 = vmatpush1.msra.mxu0 %v1592
    %1848 = vmatprep.subr.mxu0 0.0
    %1849 = vmatpush1.msra.mxu0 %v1593
    %1850 = vmatprep.subr.mxu0 0.0
    %1851 = vmatpush1.msra.mxu0 %v1594
    %1852 = vmatprep.subr.mxu0 0.0
    %1853 = vmatpush1.msra.mxu0 %v1595
    %1854 = vmatprep.subr.mxu0 0.0
    %1855 = vmatpush1.msra.mxu0 %v1596
    %1856 = vmatprep.subr.mxu0 0.0
    %1857 = vmatpush1.msra.mxu0 %v1597
    %1858 = vmatprep.subr.mxu0 0.0
    %1859 = vmatpush1.msra.mxu0 %v1598
    %1860 = vmatprep.subr.mxu0 0.0
    %1861 = vmatpush1.msra.mxu0 %v1599
    %1862 = vmatprep.subr.mxu0 0.0
    %1863 = vmatpush1.msra.mxu0 %v1600
    %1864 = vmatprep.subr.mxu0 0.0
    %1865 = vmatpush1.msra.mxu0 %v1601
    %1866 = vmatprep.subr.mxu0 0.0
    %1867 = vmatpush1.msra.mxu0 %v1602
    %1868 = vmatprep.subr.mxu0 0.0
    %1869 = vmatpush1.msra.mxu0 %v1603
    %1870 = vmatprep.subr.mxu0 0.0
    %1871 = vmatpush1.msra.mxu0 %v1604
    %1872 = vmatprep.subr.mxu0 0.0
    %1873 = vmatpush1.msra.mxu0 %v1605
    %1874 = vmatprep.subr.mxu0 0.0
    %1875 = vmatpush1.msra.mxu0 %v1606
    %1876 = vmatprep.subr.mxu0 0.0
    %1877 = vmatpush1.msra.mxu0 %v1607
    %1878 = vmatprep.subr.mxu0 0.0
    %1879 = vmatpush1.msra.mxu0 %v1608
    %1880 = vmatprep.subr.mxu0 0.0
    %1881 = vmatpush1.msra.mxu0 %v1609
    %1882 = vmatprep.subr.mxu0 0.0
    %1883 = vmatpush1.msra.mxu0 %v1610
    %1884 = vmatprep.subr.mxu0 0.0
    %1885 = vmatpush1.msra.mxu0 %v1611
    %1886 = vmatprep.subr.mxu0 0.0
    %1887 = vmatpush1.msra.mxu0 %v1612
    %1888 = vmatprep.subr.mxu0 0.0
    %1889 = vmatpush1.msra.mxu0 %v1613
    %1890 = vmatprep.subr.mxu0 0.0
    %1891 = vmatpush1.msra.mxu0 %v1614
    %1892 = vmatprep.subr.mxu0 0.0
    %1893 = vmatpush1.msra.mxu0 %v1615
    %1894 = vmatprep.subr.mxu0 0.0
    %1895 = vmatpush1.msra.mxu0 %v1616
    %1896 = vmatprep.subr.mxu0 0.0
    %1897 = vmatpush1.msra.mxu0 %v1617
    %1898 = vmatprep.subr.mxu0 0.0
    %1899 = vmatpush1.msra.mxu0 %v1618
    %1900 = vmatprep.subr.mxu0 0.0
    %1901 = vmatpush1.msra.mxu0 %v1619
    %1902 = vmatprep.mubr.f32.mxu0 %v1837
    %1903 = vmatmul.mubr.f32.gmra.mrb[0].mxu0 %v1830
    %v1904 = vpop.f32.mrb[0].mxu0
    %v1905 = vadd.f32 0.0, %v1904
    %v1906 = vpop.f32.mrb[0].mxu0
    %1907 = vdwg.mxu0
    %v1908 = vmul.f32 %v1905, 0.03125
    %v1909 = vadd.f32 %v1908, 1e-05
    %v1910 = vrsqrt.pop %v1909
    %v1912 = vsel %vm1737, %v1910, 0
    %1914 = vmatprep.subr.mxu0 %v1649
    %1915 = vmatpush1.msra.mxu0 %v1648
    %1916 = vmatprep.subr.mxu0 %v1651
    %1917 = vmatpush1.msra.mxu0 %v1650
    %1918 = vmatprep.subr.mxu0 0.0
    %1919 = vmatpush1.msra.mxu0 0.0
    %1920 = vmatprep.subr.mxu0 0.0
    %1921 = vmatpush1.msra.mxu0 0.0
    %1922 = vmatprep.subr.mxu0 0.0
    %1923 = vmatpush1.msra.mxu0 0.0
    %1924 = vmatprep.subr.mxu0 0.0
    %1925 = vmatpush1.msra.mxu0 0.0
    %1926 = vmatprep.subr.mxu0 0.0
    %1927 = vmatpush1.msra.mxu0 0.0
    %1928 = vmatprep.subr.mxu0 0.0
    %1929 = vmatpush1.msra.mxu0 0.0
    %1930 = vmatprep.subr.mxu0 0.0
    %1931 = vmatpush1.msra.mxu0 0.0
    %1932 = vmatprep.subr.mxu0 0.0
    %1933 = vmatpush1.msra.mxu0 0.0
    %1934 = vmatprep.subr.mxu0 0.0
    %1935 = vmatpush1.msra.mxu0 0.0
    %1936 = vmatprep.subr.mxu0 0.0
    %1937 = vmatpush1.msra.mxu0 0.0
    %1938 = vmatprep.subr.mxu0 0.0
    %1939 = vmatpush1.msra.mxu0 0.0
    %1940 = vmatprep.subr.mxu0 0.0
    %1941 = vmatpush1.msra.mxu0 0.0
    %1942 = vmatprep.subr.mxu0 0.0
    %1943 = vmatpush1.msra.mxu0 0.0
    %1944 = vmatprep.subr.mxu0 0.0
    %1945 = vmatpush1.msra.mxu0 0.0
    %1946 = vmatprep.subr.mxu0 0.0
    %1947 = vmatpush1.msra.mxu0 0.0
    %1948 = vmatprep.subr.mxu0 0.0
    %1949 = vmatpush1.msra.mxu0 0.0
    %1950 = vmatprep.subr.mxu0 0.0
    %1951 = vmatpush1.msra.mxu0 0.0
    %1952 = vmatprep.subr.mxu0 0.0
    %1953 = vmatpush1.msra.mxu0 0.0
    %1954 = vmatprep.subr.mxu0 0.0
    %1955 = vmatpush1.msra.mxu0 0.0
    %1956 = vmatprep.subr.mxu0 0.0
    %1957 = vmatpush1.msra.mxu0 0.0
    %1958 = vmatprep.subr.mxu0 0.0
    %1959 = vmatpush1.msra.mxu0 0.0
    %1960 = vmatprep.subr.mxu0 0.0
    %1961 = vmatpush1.msra.mxu0 0.0
    %1962 = vmatprep.subr.mxu0 0.0
    %1963 = vmatpush1.msra.mxu0 0.0
    %1964 = vmatprep.subr.mxu0 0.0
    %1965 = vmatpush1.msra.mxu0 0.0
    %1966 = vmatprep.subr.mxu0 0.0
    %1967 = vmatpush1.msra.mxu0 0.0
    %1968 = vmatprep.subr.mxu0 0.0
    %1969 = vmatpush1.msra.mxu0 0.0
    %1970 = vmatprep.subr.mxu0 0.0
    %1971 = vmatpush1.msra.mxu0 0.0
    %1972 = vmatprep.subr.mxu0 0.0
    %1973 = vmatpush1.msra.mxu0 0.0
    %1974 = vmatprep.subr.mxu0 0.0
    %1975 = vmatpush1.msra.mxu0 0.0
    %1976 = vmatprep.subr.mxu0 0.0
    %1977 = vmatpush1.msra.mxu0 0.0
    %1978 = vmatprep.mubr.f32.mxu0 0.0
    %1979 = vmatmul.mubr.f32.gmra.mrb[0].mxu0 %v1912
    %v1980 = vpop.f32.mrb[0].mxu0
    %v1981 = vadd.f32 0.0, %v1980
    %v1982 = vpop.f32.mrb[0].mxu0
    %v1983 = vadd.f32 0.0, %v1982
    %1984 = vdwg.mxu0
    %v1985 = vlaneseq
    %v1986 = vshrl.u32 %v1985, 7
    %v1987 = vsub.s32 0, %v1986
    %v1988 = vrot.slane %v1981, %v1987
    %v1989 = vlaneseq
    %v1990 = vshrl.u32 %v1989, 7
    %v1991 = vsub.s32 0, %v1990
    %v1992 = vrot.slane %v1983, %v1991
    %v1993 = vmul.f32 %v1820, %v1988
    %v1994 = vmul.f32 %v1821, %v1992
    %v1995 = vmax.f32 %v1993, 0.0
    %v1996 = vmax.f32 %v1994, 0.0
    %v1997 = vld [vmem:[#allocation8] sm:$0xff]
    %v1998 = vld [vmem:[#allocation8 + $0x8] sm:$0xff]
    %v1999 = vld [vmem:[#allocation8 + $0x10] sm:$0xff]
    %v2000 = vld [vmem:[#allocation8 + $0x18] sm:$0xff]
    %v2001 = vld [vmem:[#allocation8 + $0x20] sm:$0xff]
    %v2002 = vld [vmem:[#allocation8 + $0x28] sm:$0xff]
    %v2003 = vld [vmem:[#allocation8 + $0x30] sm:$0xff]
    %v2004 = vld [vmem:[#allocation8 + $0x38] sm:$0xff]
    %v2005 = vld [vmem:[#allocation8 + $0x40] sm:$0xff]
    %v2006 = vld [vmem:[#allocation8 + $0x48] sm:$0xff]
    %v2007 = vld [vmem:[#allocation8 + $0x50] sm:$0xff]
    %v2008 = vld [vmem:[#allocation8 + $0x58] sm:$0xff]
    %v2009 = vld [vmem:[#allocation8 + $0x60] sm:$0xff]
    %v2010 = vld [vmem:[#allocation8 + $0x68] sm:$0xff]
    %v2011 = vld [vmem:[#allocation8 + $0x70] sm:$0xff]
    %v2012 = vld [vmem:[#allocation8 + $0x78] sm:$0xff]
    %v2013 = vld [vmem:[#allocation8 + $0x80] sm:$0xff]
    %v2014 = vld [vmem:[#allocation8 + $0x88] sm:$0xff]
    %v2015 = vld [vmem:[#allocation8 + $0x90] sm:$0xff]
    %v2016 = vld [vmem:[#allocation8 + $0x98] sm:$0xff]
    %v2017 = vld [vmem:[#allocation8 + $0xa0] sm:$0xff]
    %v2018 = vld [vmem:[#allocation8 + $0xa8] sm:$0xff]
    %v2019 = vld [vmem:[#allocation8 + $0xb0] sm:$0xff]
    %v2020 = vld [vmem:[#allocation8 + $0xb8] sm:$0xff]
    %v2021 = vld [vmem:[#allocation8 + $0xc0] sm:$0xff]
    %v2022 = vld [vmem:[#allocation8 + $0xc8] sm:$0xff]
    %v2023 = vld [vmem:[#allocation8 + $0xd0] sm:$0xff]
    %v2024 = vld [vmem:[#allocation8 + $0xd8] sm:$0xff]
    %v2025 = vld [vmem:[#allocation8 + $0xe0] sm:$0xff]
    %v2026 = vld [vmem:[#allocation8 + $0xe8] sm:$0xff]
    %v2027 = vld [vmem:[#allocation8 + $0xf0] sm:$0xff]
    %v2028 = vld [vmem:[#allocation8 + $0xf8] sm:$0xff]
    %v2029 = vld [vmem:[#allocation8 + $0x100] sm:$0xff]
    %v2030 = vld [vmem:[#allocation8 + $0x108] sm:$0xff]
    %v2031 = vld [vmem:[#allocation8 + $0x110] sm:$0xff]
    %v2032 = vld [vmem:[#allocation8 + $0x118] sm:$0xff]
    %v2033 = vld [vmem:[#allocation8 + $0x120] sm:$0xff]
    %v2034 = vld [vmem:[#allocation8 + $0x128] sm:$0xff]
    %v2035 = vld [vmem:[#allocation8 + $0x130] sm:$0xff]
    %v2036 = vld [vmem:[#allocation8 + $0x138] sm:$0xff]
    %v2037 = vld [vmem:[#allocation8 + $0x140] sm:$0xff]
    %v2038 = vld [vmem:[#allocation8 + $0x148] sm:$0xff]
    %v2039 = vld [vmem:[#allocation8 + $0x150] sm:$0xff]
    %v2040 = vld [vmem:[#allocation8 + $0x158] sm:$0xff]
    %v2041 = vld [vmem:[#allocation8 + $0x160] sm:$0xff]
    %v2042 = vld [vmem:[#allocation8 + $0x168] sm:$0xff]
    %v2043 = vld [vmem:[#allocation8 + $0x170] sm:$0xff]
    %v2044 = vld [vmem:[#allocation8 + $0x178] sm:$0xff]
    %v2045 = vld [vmem:[#allocation8 + $0x180] sm:$0xff]
    %v2046 = vld [vmem:[#allocation8 + $0x188] sm:$0xff]
    %v2047 = vld [vmem:[#allocation8 + $0x190] sm:$0xff]
    %v2048 = vld [vmem:[#allocation8 + $0x198] sm:$0xff]
    %v2049 = vld [vmem:[#allocation8 + $0x1a0] sm:$0xff]
    %v2050 = vld [vmem:[#allocation8 + $0x1a8] sm:$0xff]
    %v2051 = vld [vmem:[#allocation8 + $0x1b0] sm:$0xff]
    %v2052 = vld [vmem:[#allocation8 + $0x1b8] sm:$0xff]
    %v2053 = vld [vmem:[#allocation8 + $0x1c0] sm:$0xff]
    %v2054 = vld [vmem:[#allocation8 + $0x1c8] sm:$0xff]
    %v2055 = vld [vmem:[#allocation8 + $0x1d0] sm:$0xff]
    %v2056 = vld [vmem:[#allocation8 + $0x1d8] sm:$0xff]
    %v2057 = vld [vmem:[#allocation8 + $0x1e0] sm:$0xff]
    %v2058 = vld [vmem:[#allocation8 + $0x1e8] sm:$0xff]
    %v2059 = vld [vmem:[#allocation8 + $0x1f0] sm:$0xff]
    %v2060 = vld [vmem:[#allocation8 + $0x1f8] sm:$0xff]
    %2061 = vmatprep.subr.mxu0 %v1998
    %2062 = vmatpush1.msra.mxu0 %v1997
    %2063 = vmatprep.subr.mxu0 %v2000
    %2064 = vmatpush1.msra.mxu0 %v1999
    %2065 = vmatprep.subr.mxu0 %v2002
    %2066 = vmatpush1.msra.mxu0 %v2001
    %2067 = vmatprep.subr.mxu0 %v2004
    %2068 = vmatpush1.msra.mxu0 %v2003
    %2069 = vmatprep.subr.mxu0 %v2006
    %2070 = vmatpush1.msra.mxu0 %v2005
    %2071 = vmatprep.subr.mxu0 %v2008
    %2072 = vmatpush1.msra.mxu0 %v2007
    %2073 = vmatprep.subr.mxu0 %v2010
    %2074 = vmatpush1.msra.mxu0 %v2009
    %2075 = vmatprep.subr.mxu0 %v2012
    %2076 = vmatpush1.msra.mxu0 %v2011
    %2077 = vmatprep.subr.mxu0 %v2014
    %2078 = vmatpush1.msra.mxu0 %v2013
    %2079 = vmatprep.subr.mxu0 %v2016
    %2080 = vmatpush1.msra.mxu0 %v2015
    %2081 = vmatprep.subr.mxu0 %v2018
    %2082 = vmatpush1.msra.mxu0 %v2017
    %2083 = vmatprep.subr.mxu0 %v2020
    %2084 = vmatpush1.msra.mxu0 %v2019
    %2085 = vmatprep.subr.mxu0 %v2022
    %2086 = vmatpush1.msra.mxu0 %v2021
    %2087 = vmatprep.subr.mxu0 %v2024
    %2088 = vmatpush1.msra.mxu0 %v2023
    %2089 = vmatprep.subr.mxu0 %v2026
    %2090 = vmatpush1.msra.mxu0 %v2025
    %2091 = vmatprep.subr.mxu0 %v2028
    %2092 = vmatpush1.msra.mxu0 %v2027
    %2093 = vmatprep.subr.mxu0 %v2030
    %2094 = vmatpush1.msra.mxu0 %v2029
    %2095 = vmatprep.subr.mxu0 %v2032
    %2096 = vmatpush1.msra.mxu0 %v2031
    %2097 = vmatprep.subr.mxu0 %v2034
    %2098 = vmatpush1.msra.mxu0 %v2033
    %2099 = vmatprep.subr.mxu0 %v2036
    %2100 = vmatpush1.msra.mxu0 %v2035
    %2101 = vmatprep.subr.mxu0 %v2038
    %2102 = vmatpush1.msra.mxu0 %v2037
    %2103 = vmatprep.subr.mxu0 %v2040
    %2104 = vmatpush1.msra.mxu0 %v2039
    %2105 = vmatprep.subr.mxu0 %v2042
    %2106 = vmatpush1.msra.mxu0 %v2041
    %2107 = vmatprep.subr.mxu0 %v2044
    %2108 = vmatpush1.msra.mxu0 %v2043
    %2109 = vmatprep.subr.mxu0 %v2046
    %2110 = vmatpush1.msra.mxu0 %v2045
    %2111 = vmatprep.subr.mxu0 %v2048
    %2112 = vmatpush1.msra.mxu0 %v2047
    %2113 = vmatprep.subr.mxu0 %v2050
    %2114 = vmatpush1.msra.mxu0 %v2049
    %2115 = vmatprep.subr.mxu0 %v2052
    %2116 = vmatpush1.msra.mxu0 %v2051
    %2117 = vmatprep.subr.mxu0 %v2054
    %2118 = vmatpush1.msra.mxu0 %v2053
    %2119 = vmatprep.subr.mxu0 %v2056
    %2120 = vmatpush1.msra.mxu0 %v2055
    %2121 = vmatprep.subr.mxu0 %v2058
    %2122 = vmatpush1.msra.mxu0 %v2057
    %2123 = vmatprep.subr.mxu0 %v2060
    %2124 = vmatpush1.msra.mxu0 %v2059
    %2125 = vmatprep.mubr.f32.mxu0 %v1996
    %2126 = vmatmul.mubr.f32.gmra.mrb[0].mxu0 %v1995
    %v2127 = vpop.f32.mrb[0].mxu0
    %v2128 = vadd.f32 0.0, %v2127
    %v2129 = vpop.f32.mrb[0].mxu0
    %v2130 = vadd.f32 0.0, %v2129
    %2131 = vdwg.mxu0
    %vm2132 = vcmp.lt.s32.totalorder %v180, 0
    %v2133 = vsub.s32 0, %v180
    %v2134 = vsel %vm2132, %v2133, %v180
    %v2135 = vshrl.u32 %v2134, 5
    %v2136 = vand.u32 %v2134, 31
    %v2137 = vsub.s32 0, %v2136
    %v2138 = vsel %vm2132, %v2137, %v2136
    %vm2139 = vcmp.lt.s32.totalorder %v181, 0
    %v2140 = vsub.s32 0, %v181
    %v2141 = vsel %vm2139, %v2140, %v181
    %v2142 = vshrl.u32 %v2141, 5
    %v2143 = vand.u32 %v2141, 31
    %v2144 = vsub.s32 0, %v2143
    %v2145 = vsel %vm2139, %v2144, %v2143
    %vm2146 = vcmp.lt.s32.totalorder %v182, 0
    %v2147 = vsub.s32 0, %v182
    %v2148 = vsel %vm2146, %v2147, %v182
    %v2149 = vshrl.u32 %v2148, 5
    %v2150 = vand.u32 %v2148, 31
    %v2151 = vsub.s32 0, %v2150
    %v2152 = vsel %vm2146, %v2151, %v2150
    %vm2153 = vcmp.lt.s32.totalorder %v183, 0
    %v2154 = vsub.s32 0, %v183
    %v2155 = vsel %vm2153, %v2154, %v183
    %v2156 = vshrl.u32 %v2155, 5
    %v2157 = vand.u32 %v2155, 31
    %v2158 = vsub.s32 0, %v2157
    %v2159 = vsel %vm2153, %v2158, %v2157
    %vm2160 = vcmp.lt.s32.totalorder %v184, 0
    %v2161 = vsub.s32 0, %v184
    %v2162 = vsel %vm2160, %v2161, %v184
    %v2163 = vshrl.u32 %v2162, 5
    %v2164 = vand.u32 %v2162, 31
    %v2165 = vsub.s32 0, %v2164
    %v2166 = vsel %vm2160, %v2165, %v2164
    %vm2167 = vcmp.lt.s32.totalorder %v185, 0
    %v2168 = vsub.s32 0, %v185
    %v2169 = vsel %vm2167, %v2168, %v185
    %v2170 = vshrl.u32 %v2169, 5
    %v2171 = vand.u32 %v2169, 31
    %v2172 = vsub.s32 0, %v2171
    %v2173 = vsel %vm2167, %v2172, %v2171
    %vm2174 = vcmp.lt.s32.totalorder %v186, 0
    %v2175 = vsub.s32 0, %v186
    %v2176 = vsel %vm2174, %v2175, %v186
    %v2177 = vshrl.u32 %v2176, 5
    %v2178 = vand.u32 %v2176, 31
    %v2179 = vsub.s32 0, %v2178
    %v2180 = vsel %vm2174, %v2179, %v2178
    %vm2181 = vcmp.lt.s32.totalorder %v187, 0
    %v2182 = vsub.s32 0, %v187
    %v2183 = vsel %vm2181, %v2182, %v187
    %v2184 = vshrl.u32 %v2183, 5
    %v2185 = vand.u32 %v2183, 31
    %v2186 = vsub.s32 0, %v2185
    %v2187 = vsel %vm2181, %v2186, %v2185
    %vm2188 = vcmp.lt.s32.totalorder %v188, 0
    %v2189 = vsub.s32 0, %v188
    %v2190 = vsel %vm2188, %v2189, %v188
    %v2191 = vshrl.u32 %v2190, 5
    %v2192 = vand.u32 %v2190, 31
    %v2193 = vsub.s32 0, %v2192
    %v2194 = vsel %vm2188, %v2193, %v2192
    %vm2195 = vcmp.lt.s32.totalorder %v189, 0
    %v2196 = vsub.s32 0, %v189
    %v2197 = vsel %vm2195, %v2196, %v189
    %v2198 = vshrl.u32 %v2197, 5
    %v2199 = vand.u32 %v2197, 31
    %v2200 = vsub.s32 0, %v2199
    %v2201 = vsel %vm2195, %v2200, %v2199
    %vm2202 = vcmp.lt.s32.totalorder %v190, 0
    %v2203 = vsub.s32 0, %v190
    %v2204 = vsel %vm2202, %v2203, %v190
    %v2205 = vshrl.u32 %v2204, 5
    %v2206 = vand.u32 %v2204, 31
    %v2207 = vsub.s32 0, %v2206
    %v2208 = vsel %vm2202, %v2207, %v2206
    %vm2209 = vcmp.lt.s32.totalorder %v191, 0
    %v2210 = vsub.s32 0, %v191
    %v2211 = vsel %vm2209, %v2210, %v191
    %v2212 = vshrl.u32 %v2211, 5
    %v2213 = vand.u32 %v2211, 31
    %v2214 = vsub.s32 0, %v2213
    %v2215 = vsel %vm2209, %v2214, %v2213
    %vm2216 = vcmp.lt.s32.totalorder %v192, 0
    %v2217 = vsub.s32 0, %v192
    %v2218 = vsel %vm2216, %v2217, %v192
    %v2219 = vshrl.u32 %v2218, 5
    %v2220 = vand.u32 %v2218, 31
    %v2221 = vsub.s32 0, %v2220
    %v2222 = vsel %vm2216, %v2221, %v2220
    %vm2223 = vcmp.lt.s32.totalorder %v193, 0
    %v2224 = vsub.s32 0, %v193
    %v2225 = vsel %vm2223, %v2224, %v193
    %v2226 = vshrl.u32 %v2225, 5
    %v2227 = vand.u32 %v2225, 31
    %v2228 = vsub.s32 0, %v2227
    %v2229 = vsel %vm2223, %v2228, %v2227
    %vm2230 = vcmp.lt.s32.totalorder %v194, 0
    %v2231 = vsub.s32 0, %v194
    %v2232 = vsel %vm2230, %v2231, %v194
    %v2233 = vshrl.u32 %v2232, 5
    %v2234 = vand.u32 %v2232, 31
    %v2235 = vsub.s32 0, %v2234
    %v2236 = vsel %vm2230, %v2235, %v2234
    %vm2237 = vcmp.lt.s32.totalorder %v195, 0
    %v2238 = vsub.s32 0, %v195
    %v2239 = vsel %vm2237, %v2238, %v195
    %v2240 = vshrl.u32 %v2239, 5
    %v2241 = vand.u32 %v2239, 31
    %v2242 = vsub.s32 0, %v2241
    %v2243 = vsel %vm2237, %v2242, %v2241
    %vm2244 = vcmp.lt.s32.totalorder %v196, 0
    %v2245 = vsub.s32 0, %v196
    %v2246 = vsel %vm2244, %v2245, %v196
    %v2247 = vshrl.u32 %v2246, 5
    %v2248 = vand.u32 %v2246, 31
    %v2249 = vsub.s32 0, %v2248
    %v2250 = vsel %vm2244, %v2249, %v2248
    %vm2251 = vcmp.lt.s32.totalorder %v197, 0
    %v2252 = vsub.s32 0, %v197
    %v2253 = vsel %vm2251, %v2252, %v197
    %v2254 = vshrl.u32 %v2253, 5
    %v2255 = vand.u32 %v2253, 31
    %v2256 = vsub.s32 0, %v2255
    %v2257 = vsel %vm2251, %v2256, %v2255
    %vm2258 = vcmp.lt.s32.totalorder %v198, 0
    %v2259 = vsub.s32 0, %v198
    %v2260 = vsel %vm2258, %v2259, %v198
    %v2261 = vshrl.u32 %v2260, 5
    %v2262 = vand.u32 %v2260, 31
    %v2263 = vsub.s32 0, %v2262
    %v2264 = vsel %vm2258, %v2263, %v2262
    %vm2265 = vcmp.lt.s32.totalorder %v199, 0
    %v2266 = vsub.s32 0, %v199
    %v2267 = vsel %vm2265, %v2266, %v199
    %v2268 = vshrl.u32 %v2267, 5
    %v2269 = vand.u32 %v2267, 31
    %v2270 = vsub.s32 0, %v2269
    %v2271 = vsel %vm2265, %v2270, %v2269
    %vm2272 = vcmp.lt.s32.totalorder %v200, 0
    %v2273 = vsub.s32 0, %v200
    %v2274 = vsel %vm2272, %v2273, %v200
    %v2275 = vshrl.u32 %v2274, 5
    %v2276 = vand.u32 %v2274, 31
    %v2277 = vsub.s32 0, %v2276
    %v2278 = vsel %vm2272, %v2277, %v2276
    %vm2279 = vcmp.lt.s32.totalorder %v201, 0
    %v2280 = vsub.s32 0, %v201
    %v2281 = vsel %vm2279, %v2280, %v201
    %v2282 = vshrl.u32 %v2281, 5
    %v2283 = vand.u32 %v2281, 31
    %v2284 = vsub.s32 0, %v2283
    %v2285 = vsel %vm2279, %v2284, %v2283
    %vm2286 = vcmp.lt.s32.totalorder %v202, 0
    %v2287 = vsub.s32 0, %v202
    %v2288 = vsel %vm2286, %v2287, %v202
    %v2289 = vshrl.u32 %v2288, 5
    %v2290 = vand.u32 %v2288, 31
    %v2291 = vsub.s32 0, %v2290
    %v2292 = vsel %vm2286, %v2291, %v2290
    %vm2293 = vcmp.lt.s32.totalorder %v203, 0
    %v2294 = vsub.s32 0, %v203
    %v2295 = vsel %vm2293, %v2294, %v203
    %v2296 = vshrl.u32 %v2295, 5
    %v2297 = vand.u32 %v2295, 31
    %v2298 = vsub.s32 0, %v2297
    %v2299 = vsel %vm2293, %v2298, %v2297
    %vm2300 = vcmp.lt.s32.totalorder %v204, 0
    %v2301 = vsub.s32 0, %v204
    %v2302 = vsel %vm2300, %v2301, %v204
    %v2303 = vshrl.u32 %v2302, 5
    %v2304 = vand.u32 %v2302, 31
    %v2305 = vsub.s32 0, %v2304
    %v2306 = vsel %vm2300, %v2305, %v2304
    %vm2307 = vcmp.lt.s32.totalorder %v205, 0
    %v2308 = vsub.s32 0, %v205
    %v2309 = vsel %vm2307, %v2308, %v205
    %v2310 = vshrl.u32 %v2309, 5
    %v2311 = vand.u32 %v2309, 31
    %v2312 = vsub.s32 0, %v2311
    %v2313 = vsel %vm2307, %v2312, %v2311
    %vm2314 = vcmp.lt.s32.totalorder %v206, 0
    %v2315 = vsub.s32 0, %v206
    %v2316 = vsel %vm2314, %v2315, %v206
    %v2317 = vshrl.u32 %v2316, 5
    %v2318 = vand.u32 %v2316, 31
    %v2319 = vsub.s32 0, %v2318
    %v2320 = vsel %vm2314, %v2319, %v2318
    %vm2321 = vcmp.lt.s32.totalorder %v207, 0
    %v2322 = vsub.s32 0, %v207
    %v2323 = vsel %vm2321, %v2322, %v207
    %v2324 = vshrl.u32 %v2323, 5
    %v2325 = vand.u32 %v2323, 31
    %v2326 = vsub.s32 0, %v2325
    %v2327 = vsel %vm2321, %v2326, %v2325
    %vm2328 = vcmp.lt.s32.totalorder %v208, 0
    %v2329 = vsub.s32 0, %v208
    %v2330 = vsel %vm2328, %v2329, %v208
    %v2331 = vshrl.u32 %v2330, 5
    %v2332 = vand.u32 %v2330, 31
    %v2333 = vsub.s32 0, %v2332
    %v2334 = vsel %vm2328, %v2333, %v2332
    %vm2335 = vcmp.lt.s32.totalorder %v209, 0
    %v2336 = vsub.s32 0, %v209
    %v2337 = vsel %vm2335, %v2336, %v209
    %v2338 = vshrl.u32 %v2337, 5
    %v2339 = vand.u32 %v2337, 31
    %v2340 = vsub.s32 0, %v2339
    %v2341 = vsel %vm2335, %v2340, %v2339
    %vm2342 = vcmp.lt.s32.totalorder %v210, 0
    %v2343 = vsub.s32 0, %v210
    %v2344 = vsel %vm2342, %v2343, %v210
    %v2345 = vshrl.u32 %v2344, 5
    %v2346 = vand.u32 %v2344, 31
    %v2347 = vsub.s32 0, %v2346
    %v2348 = vsel %vm2342, %v2347, %v2346
    %vm2349 = vcmp.lt.s32.totalorder %v211, 0
    %v2350 = vsub.s32 0, %v211
    %v2351 = vsel %vm2349, %v2350, %v211
    %v2352 = vshrl.u32 %v2351, 5
    %v2353 = vand.u32 %v2351, 31
    %v2354 = vsub.s32 0, %v2353
    %v2355 = vsel %vm2349, %v2354, %v2353
    %vm2356 = vcmp.ne.s32.totalorder %v2138, 0
    %vm2357 = vcmp.ne.s32.totalorder %v2145, 0
    %vm2358 = vcmp.ne.s32.totalorder %v2152, 0
    %vm2359 = vcmp.ne.s32.totalorder %v2159, 0
    %vm2360 = vcmp.ne.s32.totalorder %v2166, 0
    %vm2361 = vcmp.ne.s32.totalorder %v2173, 0
    %vm2362 = vcmp.ne.s32.totalorder %v2180, 0
    %vm2363 = vcmp.ne.s32.totalorder %v2187, 0
    %vm2364 = vcmp.ne.s32.totalorder %v2194, 0
    %vm2365 = vcmp.ne.s32.totalorder %v2201, 0
    %vm2366 = vcmp.ne.s32.totalorder %v2208, 0
    %vm2367 = vcmp.ne.s32.totalorder %v2215, 0
    %vm2368 = vcmp.ne.s32.totalorder %v2222, 0
    %vm2369 = vcmp.ne.s32.totalorder %v2229, 0
    %vm2370 = vcmp.ne.s32.totalorder %v2236, 0
    %vm2371 = vcmp.ne.s32.totalorder %v2243, 0
    %vm2372 = vcmp.ne.s32.totalorder %v2250, 0
    %vm2373 = vcmp.ne.s32.totalorder %v2257, 0
    %vm2374 = vcmp.ne.s32.totalorder %v2264, 0
    %vm2375 = vcmp.ne.s32.totalorder %v2271, 0
    %vm2376 = vcmp.ne.s32.totalorder %v2278, 0
    %vm2377 = vcmp.ne.s32.totalorder %v2285, 0
    %vm2378 = vcmp.ne.s32.totalorder %v2292, 0
    %vm2379 = vcmp.ne.s32.totalorder %v2299, 0
    %vm2380 = vcmp.ne.s32.totalorder %v2306, 0
    %vm2381 = vcmp.ne.s32.totalorder %v2313, 0
    %vm2382 = vcmp.ne.s32.totalorder %v2320, 0
    %vm2383 = vcmp.ne.s32.totalorder %v2327, 0
    %vm2384 = vcmp.ne.s32.totalorder %v2334, 0
    %vm2385 = vcmp.ne.s32.totalorder %v2341, 0
    %vm2386 = vcmp.ne.s32.totalorder %v2348, 0
    %vm2387 = vcmp.ne.s32.totalorder %v2355, 0
    %vm2388 = vcmp.lt.s32.totalorder %v2138, 0
    %vm2389 = vcmp.lt.s32.totalorder %v2145, 0
    %vm2390 = vcmp.lt.s32.totalorder %v2152, 0
    %vm2391 = vcmp.lt.s32.totalorder %v2159, 0
    %vm2392 = vcmp.lt.s32.totalorder %v2166, 0
    %vm2393 = vcmp.lt.s32.totalorder %v2173, 0
    %vm2394 = vcmp.lt.s32.totalorder %v2180, 0
    %vm2395 = vcmp.lt.s32.totalorder %v2187, 0
    %vm2396 = vcmp.lt.s32.totalorder %v2194, 0
    %vm2397 = vcmp.lt.s32.totalorder %v2201, 0
    %vm2398 = vcmp.lt.s32.totalorder %v2208, 0
    %vm2399 = vcmp.lt.s32.totalorder %v2215, 0
    %vm2400 = vcmp.lt.s32.totalorder %v2222, 0
    %vm2401 = vcmp.lt.s32.totalorder %v2229, 0
    %vm2402 = vcmp.lt.s32.totalorder %v2236, 0
    %vm2403 = vcmp.lt.s32.totalorder %v2243, 0
    %vm2404 = vcmp.lt.s32.totalorder %v2250, 0
    %vm2405 = vcmp.lt.s32.totalorder %v2257, 0
    %vm2406 = vcmp.lt.s32.totalorder %v2264, 0
    %vm2407 = vcmp.lt.s32.totalorder %v2271, 0
    %vm2408 = vcmp.lt.s32.totalorder %v2278, 0
    %vm2409 = vcmp.lt.s32.totalorder %v2285, 0
    %vm2410 = vcmp.lt.s32.totalorder %v2292, 0
    %vm2411 = vcmp.lt.s32.totalorder %v2299, 0
    %vm2412 = vcmp.lt.s32.totalorder %v2306, 0
    %vm2413 = vcmp.lt.s32.totalorder %v2313, 0
    %vm2414 = vcmp.lt.s32.totalorder %v2320, 0
    %vm2415 = vcmp.lt.s32.totalorder %v2327, 0
    %vm2416 = vcmp.lt.s32.totalorder %v2334, 0
    %vm2417 = vcmp.lt.s32.totalorder %v2341, 0
    %vm2418 = vcmp.lt.s32.totalorder %v2348, 0
    %vm2419 = vcmp.lt.s32.totalorder %v2355, 0
    %vm2420 = vmand %vm2388, %vm2356
    %vm2421 = vmand %vm2389, %vm2357
    %vm2422 = vmand %vm2390, %vm2358
    %vm2423 = vmand %vm2391, %vm2359
    %vm2424 = vmand %vm2392, %vm2360
    %vm2425 = vmand %vm2393, %vm2361
    %vm2426 = vmand %vm2394, %vm2362
    %vm2427 = vmand %vm2395, %vm2363
    %vm2428 = vmand %vm2396, %vm2364
    %vm2429 = vmand %vm2397, %vm2365
    %vm2430 = vmand %vm2398, %vm2366
    %vm2431 = vmand %vm2399, %vm2367
    %vm2432 = vmand %vm2400, %vm2368
    %vm2433 = vmand %vm2401, %vm2369
    %vm2434 = vmand %vm2402, %vm2370
    %vm2435 = vmand %vm2403, %vm2371
    %vm2436 = vmand %vm2404, %vm2372
    %vm2437 = vmand %vm2405, %vm2373
    %vm2438 = vmand %vm2406, %vm2374
    %vm2439 = vmand %vm2407, %vm2375
    %vm2440 = vmand %vm2408, %vm2376
    %vm2441 = vmand %vm2409, %vm2377
    %vm2442 = vmand %vm2410, %vm2378
    %vm2443 = vmand %vm2411, %vm2379
    %vm2444 = vmand %vm2412, %vm2380
    %vm2445 = vmand %vm2413, %vm2381
    %vm2446 = vmand %vm2414, %vm2382
    %vm2447 = vmand %vm2415, %vm2383
    %vm2448 = vmand %vm2416, %vm2384
    %vm2449 = vmand %vm2417, %vm2385
    %vm2450 = vmand %vm2418, %vm2386
    %vm2451 = vmand %vm2419, %vm2387
    %v2452 = vadd.s32 %v2138, 32
    %v2453 = vadd.s32 %v2145, 32
    %v2454 = vadd.s32 %v2152, 32
    %v2455 = vadd.s32 %v2159, 32
    %v2456 = vadd.s32 %v2166, 32
    %v2457 = vadd.s32 %v2173, 32
    %v2458 = vadd.s32 %v2180, 32
    %v2459 = vadd.s32 %v2187, 32
    %v2460 = vadd.s32 %v2194, 32
    %v2461 = vadd.s32 %v2201, 32
    %v2462 = vadd.s32 %v2208, 32
    %v2463 = vadd.s32 %v2215, 32
    %v2464 = vadd.s32 %v2222, 32
    %v2465 = vadd.s32 %v2229, 32
    %v2466 = vadd.s32 %v2236, 32
    %v2467 = vadd.s32 %v2243, 32
    %v2468 = vadd.s32 %v2250, 32
    %v2469 = vadd.s32 %v2257, 32
    %v2470 = vadd.s32 %v2264, 32
    %v2471 = vadd.s32 %v2271, 32
    %v2472 = vadd.s32 %v2278, 32
    %v2473 = vadd.s32 %v2285, 32
    %v2474 = vadd.s32 %v2292, 32
    %v2475 = vadd.s32 %v2299, 32
    %v2476 = vadd.s32 %v2306, 32
    %v2477 = vadd.s32 %v2313, 32
    %v2478 = vadd.s32 %v2320, 32
    %v2479 = vadd.s32 %v2327, 32
    %v2480 = vadd.s32 %v2334, 32
    %v2481 = vadd.s32 %v2341, 32
    %v2482 = vadd.s32 %v2348, 32
    %v2483 = vadd.s32 %v2355, 32
    %v2484 = vsel %vm2420, %v2452, %v2138
    %v2485 = vsel %vm2421, %v2453, %v2145
    %v2486 = vsel %vm2422, %v2454, %v2152
    %v2487 = vsel %vm2423, %v2455, %v2159
    %v2488 = vsel %vm2424, %v2456, %v2166
    %v2489 = vsel %vm2425, %v2457, %v2173
    %v2490 = vsel %vm2426, %v2458, %v2180
    %v2491 = vsel %vm2427, %v2459, %v2187
    %v2492 = vsel %vm2428, %v2460, %v2194
    %v2493 = vsel %vm2429, %v2461, %v2201
    %v2494 = vsel %vm2430, %v2462, %v2208
    %v2495 = vsel %vm2431, %v2463, %v2215
    %v2496 = vsel %vm2432, %v2464, %v2222
    %v2497 = vsel %vm2433, %v2465, %v2229
    %v2498 = vsel %vm2434, %v2466, %v2236
    %v2499 = vsel %vm2435, %v2467, %v2243
    %v2500 = vsel %vm2436, %v2468, %v2250
    %v2501 = vsel %vm2437, %v2469, %v2257
    %v2502 = vsel %vm2438, %v2470, %v2264
    %v2503 = vsel %vm2439, %v2471, %v2271
    %v2504 = vsel %vm2440, %v2472, %v2278
    %v2505 = vsel %vm2441, %v2473, %v2285
    %v2506 = vsel %vm2442, %v2474, %v2292
    %v2507 = vsel %vm2443, %v2475, %v2299
    %v2508 = vsel %vm2444, %v2476, %v2306
    %v2509 = vsel %vm2445, %v2477, %v2313
    %v2510 = vsel %vm2446, %v2478, %v2320
    %v2511 = vsel %vm2447, %v2479, %v2327
    %v2512 = vsel %vm2448, %v2480, %v2334
    %v2513 = vsel %vm2449, %v2481, %v2341
    %v2514 = vsel %vm2450, %v2482, %v2348
    %v2515 = vsel %vm2451, %v2483, %v2355
    %vm2516 = vcmp.eq.s32.totalorder %v2484, %v213
    %vm2517 = vcmp.eq.s32.totalorder %v2485, %v213
    %vm2518 = vcmp.eq.s32.totalorder %v2486, %v213
    %vm2519 = vcmp.eq.s32.totalorder %v2487, %v213
    %vm2520 = vcmp.eq.s32.totalorder %v2488, %v213
    %vm2521 = vcmp.eq.s32.totalorder %v2489, %v213
    %vm2522 = vcmp.eq.s32.totalorder %v2490, %v213
    %vm2523 = vcmp.eq.s32.totalorder %v2491, %v213
    %vm2524 = vcmp.eq.s32.totalorder %v2492, %v213
    %vm2525 = vcmp.eq.s32.totalorder %v2493, %v213
    %vm2526 = vcmp.eq.s32.totalorder %v2494, %v213
    %vm2527 = vcmp.eq.s32.totalorder %v2495, %v213
    %vm2528 = vcmp.eq.s32.totalorder %v2496, %v213
    %vm2529 = vcmp.eq.s32.totalorder %v2497, %v213
    %vm2530 = vcmp.eq.s32.totalorder %v2498, %v213
    %vm2531 = vcmp.eq.s32.totalorder %v2499, %v213
    %vm2532 = vcmp.eq.s32.totalorder %v2500, %v213
    %vm2533 = vcmp.eq.s32.totalorder %v2501, %v213
    %vm2534 = vcmp.eq.s32.totalorder %v2502, %v213
    %vm2535 = vcmp.eq.s32.totalorder %v2503, %v213
    %vm2536 = vcmp.eq.s32.totalorder %v2504, %v213
    %vm2537 = vcmp.eq.s32.totalorder %v2505, %v213
    %vm2538 = vcmp.eq.s32.totalorder %v2506, %v213
    %vm2539 = vcmp.eq.s32.totalorder %v2507, %v213
    %vm2540 = vcmp.eq.s32.totalorder %v2508, %v213
    %vm2541 = vcmp.eq.s32.totalorder %v2509, %v213
    %vm2542 = vcmp.eq.s32.totalorder %v2510, %v213
    %vm2543 = vcmp.eq.s32.totalorder %v2511, %v213
    %vm2544 = vcmp.eq.s32.totalorder %v2512, %v213
    %vm2545 = vcmp.eq.s32.totalorder %v2513, %v213
    %vm2546 = vcmp.eq.s32.totalorder %v2514, %v213
    %vm2547 = vcmp.eq.s32.totalorder %v2515, %v213
    %v2548 = vsel %vm2516, 1.0, 0.0
    %v2549 = vsel %vm2517, 1.0, 0.0
    %v2550 = vsel %vm2518, 1.0, 0.0
    %v2551 = vsel %vm2519, 1.0, 0.0
    %v2552 = vsel %vm2520, 1.0, 0.0
    %v2553 = vsel %vm2521, 1.0, 0.0
    %v2554 = vsel %vm2522, 1.0, 0.0
    %v2555 = vsel %vm2523, 1.0, 0.0
    %v2556 = vsel %vm2524, 1.0, 0.0
    %v2557 = vsel %vm2525, 1.0, 0.0
    %v2558 = vsel %vm2526, 1.0, 0.0
    %v2559 = vsel %vm2527, 1.0, 0.0
    %v2560 = vsel %vm2528, 1.0, 0.0
    %v2561 = vsel %vm2529, 1.0, 0.0
    %v2562 = vsel %vm2530, 1.0, 0.0
    %v2563 = vsel %vm2531, 1.0, 0.0
    %v2564 = vsel %vm2532, 1.0, 0.0
    %v2565 = vsel %vm2533, 1.0, 0.0
    %v2566 = vsel %vm2534, 1.0, 0.0
    %v2567 = vsel %vm2535, 1.0, 0.0
    %v2568 = vsel %vm2536, 1.0, 0.0
    %v2569 = vsel %vm2537, 1.0, 0.0
    %v2570 = vsel %vm2538, 1.0, 0.0
    %v2571 = vsel %vm2539, 1.0, 0.0
    %v2572 = vsel %vm2540, 1.0, 0.0
    %v2573 = vsel %vm2541, 1.0, 0.0
    %v2574 = vsel %vm2542, 1.0, 0.0
    %v2575 = vsel %vm2543, 1.0, 0.0
    %v2576 = vsel %vm2544, 1.0, 0.0
    %v2577 = vsel %vm2545, 1.0, 0.0
    %v2578 = vsel %vm2546, 1.0, 0.0
    %v2579 = vsel %vm2547, 1.0, 0.0
    %vm2580 = vcmp.lt.s32.totalorder %v213, 0
    %v2581 = vsub.s32 0, %v213
    %v2582 = vsel %vm2580, %v2581, %v213
    %v2583 = vshrl.u32 %v2582, 5
    %v2584 = vand.u32 %v2582, 31
    %v2585 = vsub.s32 0, %v2584
    %v2586 = vsel %vm2580, %v2585, %v2584
    %vm2587 = vcmp.lt.s32.totalorder %v662, 0
    %v2588 = vsub.s32 0, %v662
    %v2589 = vsel %vm2587, %v2588, %v662
    %v2590 = vshrl.u32 %v2589, 5
    %v2591 = vand.u32 %v2589, 31
    %v2592 = vsub.s32 0, %v2591
    %v2593 = vsel %vm2587, %v2592, %v2591
    %vm2594 = vcmp.ne.s32.totalorder %v2586, 0
    %vm2595 = vcmp.ne.s32.totalorder %v2593, 0
    %vm2596 = vcmp.lt.s32.totalorder %v2586, 0
    %vm2597 = vcmp.lt.s32.totalorder %v2593, 0
    %vm2598 = vmand %vm2596, %vm2594
    %vm2599 = vmand %vm2597, %vm2595
    %v2600 = vadd.s32 %v2586, 32
    %v2601 = vadd.s32 %v2593, 32
    %v2602 = vsel %vm2598, %v2600, %v2586
    %v2603 = vsel %vm2599, %v2601, %v2593
    %vm2604 = vcmp.eq.s32.totalorder %v2602, %v180
    %vm2605 = vcmp.eq.s32.totalorder %v2603, %v180
    %vm2606 = vcmp.eq.s32.totalorder %v2602, %v181
    %vm2607 = vcmp.eq.s32.totalorder %v2603, %v181
    %vm2608 = vcmp.eq.s32.totalorder %v2602, %v182
    %vm2609 = vcmp.eq.s32.totalorder %v2603, %v182
    %vm2610 = vcmp.eq.s32.totalorder %v2602, %v183
    %vm2611 = vcmp.eq.s32.totalorder %v2603, %v183
    %v2612 = vsel %vm2604, 1.0, 0.0
    %v2613 = vsel %vm2605, 1.0, 0.0
    %v2614 = vsel %vm2606, 1.0, 0.0
    %v2615 = vsel %vm2607, 1.0, 0.0
    %v2616 = vsel %vm2608, 1.0, 0.0
    %v2617 = vsel %vm2609, 1.0, 0.0
    %v2618 = vsel %vm2610, 1.0, 0.0
    %v2619 = vsel %vm2611, 1.0, 0.0
    %v2620 = vsel %vm691, %v2128, 0.0
    %v2621 = vrot.slane %v2620, 4
    %v2622 = vadd.f32 %v2620, %v2621
    %v2623 = vrot.slane %v2622, 2
    %v2624 = vadd.f32 %v2622, %v2623
    %v2625 = vrot.slane %v2624, 1
    %v2626 = vadd.f32 %v2624, %v2625
    %v2627 = vsel %vm691, %v2130, 0.0
    %v2628 = vrot.slane %v2627, 4
    %v2629 = vadd.f32 %v2627, %v2628
    %v2630 = vrot.slane %v2629, 2
    %v2631 = vadd.f32 %v2629, %v2630
    %v2632 = vrot.slane %v2631, 1
    %v2633 = vadd.f32 %v2631, %v2632
    %2634 = vmatprep.subr.mxu0 0.0
    %2635 = vmatpush1.msra.mxu0 %v2548
    %2636 = vmatprep.subr.mxu0 0.0
    %2637 = vmatpush1.msra.mxu0 %v2549
    %2638 = vmatprep.subr.mxu0 0.0
    %2639 = vmatpush1.msra.mxu0 %v2550
    %2640 = vmatprep.subr.mxu0 0.0
    %2641 = vmatpush1.msra.mxu0 %v2551
    %2642 = vmatprep.subr.mxu0 0.0
    %2643 = vmatpush1.msra.mxu0 %v2552
    %2644 = vmatprep.subr.mxu0 0.0
    %2645 = vmatpush1.msra.mxu0 %v2553
    %2646 = vmatprep.subr.mxu0 0.0
    %2647 = vmatpush1.msra.mxu0 %v2554
    %2648 = vmatprep.subr.mxu0 0.0
    %2649 = vmatpush1.msra.mxu0 %v2555
    %2650 = vmatprep.subr.mxu0 0.0
    %2651 = vmatpush1.msra.mxu0 %v2556
    %2652 = vmatprep.subr.mxu0 0.0
    %2653 = vmatpush1.msra.mxu0 %v2557
    %2654 = vmatprep.subr.mxu0 0.0
    %2655 = vmatpush1.msra.mxu0 %v2558
    %2656 = vmatprep.subr.mxu0 0.0
    %2657 = vmatpush1.msra.mxu0 %v2559
    %2658 = vmatprep.subr.mxu0 0.0
    %2659 = vmatpush1.msra.mxu0 %v2560
    %2660 = vmatprep.subr.mxu0 0.0
    %2661 = vmatpush1.msra.mxu0 %v2561
    %2662 = vmatprep.subr.mxu0 0.0
    %2663 = vmatpush1.msra.mxu0 %v2562
    %2664 = vmatprep.subr.mxu0 0.0
    %2665 = vmatpush1.msra.mxu0 %v2563
    %2666 = vmatprep.subr.mxu0 0.0
    %2667 = vmatpush1.msra.mxu0 %v2564
    %2668 = vmatprep.subr.mxu0 0.0
    %2669 = vmatpush1.msra.mxu0 %v2565
    %2670 = vmatprep.subr.mxu0 0.0
    %2671 = vmatpush1.msra.mxu0 %v2566
    %2672 = vmatprep.subr.mxu0 0.0
    %2673 = vmatpush1.msra.mxu0 %v2567
    %2674 = vmatprep.subr.mxu0 0.0
    %2675 = vmatpush1.msra.mxu0 %v2568
    %2676 = vmatprep.subr.mxu0 0.0
    %2677 = vmatpush1.msra.mxu0 %v2569
    %2678 = vmatprep.subr.mxu0 0.0
    %2679 = vmatpush1.msra.mxu0 %v2570
    %2680 = vmatprep.subr.mxu0 0.0
    %2681 = vmatpush1.msra.mxu0 %v2571
    %2682 = vmatprep.subr.mxu0 0.0
    %2683 = vmatpush1.msra.mxu0 %v2572
    %2684 = vmatprep.subr.mxu0 0.0
    %2685 = vmatpush1.msra.mxu0 %v2573
    %2686 = vmatprep.subr.mxu0 0.0
    %2687 = vmatpush1.msra.mxu0 %v2574
    %2688 = vmatprep.subr.mxu0 0.0
    %2689 = vmatpush1.msra.mxu0 %v2575
    %2690 = vmatprep.subr.mxu0 0.0
    %2691 = vmatpush1.msra.mxu0 %v2576
    %2692 = vmatprep.subr.mxu0 0.0
    %2693 = vmatpush1.msra.mxu0 %v2577
    %2694 = vmatprep.subr.mxu0 0.0
    %2695 = vmatpush1.msra.mxu0 %v2578
    %2696 = vmatprep.subr.mxu0 0.0
    %2697 = vmatpush1.msra.mxu0 %v2579
    %2698 = vmatprep.mubr.f32.mxu0 %v2633
    %2699 = vmatmul.mubr.f32.gmra.mrb[0].mxu0 %v2626
    %v2700 = vpop.f32.mrb[0].mxu0
    %v2701 = vadd.f32 0.0, %v2700
    %v2702 = vpop.f32.mrb[0].mxu0
    %2703 = vdwg.mxu0
    %v2704 = vmul.f32 %v2701, 0.0625
    %vm2705 = vcmask 261120
    %v2707 = vsel %vm2705, %v2704, 0
    %2709 = vmatprep.subr.mxu0 %v2613
    %2710 = vmatpush1.msra.mxu0 %v2612
    %2711 = vmatprep.subr.mxu0 %v2615
    %2712 = vmatpush1.msra.mxu0 %v2614
    %2713 = vmatprep.subr.mxu0 %v2617
    %2714 = vmatpush1.msra.mxu0 %v2616
    %2715 = vmatprep.subr.mxu0 %v2619
    %2716 = vmatpush1.msra.mxu0 %v2618
    %2717 = vmatprep.subr.mxu0 0.0
    %2718 = vmatpush1.msra.mxu0 0.0
    %2719 = vmatprep.subr.mxu0 0.0
    %2720 = vmatpush1.msra.mxu0 0.0
    %2721 = vmatprep.subr.mxu0 0.0
    %2722 = vmatpush1.msra.mxu0 0.0
    %2723 = vmatprep.subr.mxu0 0.0
    %2724 = vmatpush1.msra.mxu0 0.0
    %2725 = vmatprep.subr.mxu0 0.0
    %2726 = vmatpush1.msra.mxu0 0.0
    %2727 = vmatprep.subr.mxu0 0.0
    %2728 = vmatpush1.msra.mxu0 0.0
    %2729 = vmatprep.subr.mxu0 0.0
    %2730 = vmatpush1.msra.mxu0 0.0
    %2731 = vmatprep.subr.mxu0 0.0
    %2732 = vmatpush1.msra.mxu0 0.0
    %2733 = vmatprep.subr.mxu0 0.0
    %2734 = vmatpush1.msra.mxu0 0.0
    %2735 = vmatprep.subr.mxu0 0.0
    %2736 = vmatpush1.msra.mxu0 0.0
    %2737 = vmatprep.subr.mxu0 0.0
    %2738 = vmatpush1.msra.mxu0 0.0
    %2739 = vmatprep.subr.mxu0 0.0
    %2740 = vmatpush1.msra.mxu0 0.0
    %2741 = vmatprep.subr.mxu0 0.0
    %2742 = vmatpush1.msra.mxu0 0.0
    %2743 = vmatprep.subr.mxu0 0.0
    %2744 = vmatpush1.msra.mxu0 0.0
    %2745 = vmatprep.subr.mxu0 0.0
    %2746 = vmatpush1.msra.mxu0 0.0
    %2747 = vmatprep.subr.mxu0 0.0
    %2748 = vmatpush1.msra.mxu0 0.0
    %2749 = vmatprep.subr.mxu0 0.0
    %2750 = vmatpush1.msra.mxu0 0.0
    %2751 = vmatprep.subr.mxu0 0.0
    %2752 = vmatpush1.msra.mxu0 0.0
    %2753 = vmatprep.subr.mxu0 0.0
    %2754 = vmatpush1.msra.mxu0 0.0
    %2755 = vmatprep.subr.mxu0 0.0
    %2756 = vmatpush1.msra.mxu0 0.0
    %2757 = vmatprep.subr.mxu0 0.0
    %2758 = vmatpush1.msra.mxu0 0.0
    %2759 = vmatprep.subr.mxu0 0.0
    %2760 = vmatpush1.msra.mxu0 0.0
    %2761 = vmatprep.subr.mxu0 0.0
    %2762 = vmatpush1.msra.mxu0 0.0
    %2763 = vmatprep.subr.mxu0 0.0
    %2764 = vmatpush1.msra.mxu0 0.0
    %2765 = vmatprep.subr.mxu0 0.0
    %2766 = vmatpush1.msra.mxu0 0.0
    %2767 = vmatprep.subr.mxu0 0.0
    %2768 = vmatpush1.msra.mxu0 0.0
    %2769 = vmatprep.subr.mxu0 0.0
    %2770 = vmatpush1.msra.mxu0 0.0
    %2771 = vmatprep.subr.mxu0 0.0
    %2772 = vmatpush1.msra.mxu0 0.0
    %2773 = vmatprep.mubr.f32.mxu0 0.0
    %2774 = vmatmul.mubr.f32.gmra.mrb[0].mxu0 %v2707
    %v2775 = vpop.f32.mrb[0].mxu0
    %v2776 = vadd.f32 0.0, %v2775
    %v2777 = vpop.f32.mrb[0].mxu0
    %v2778 = vadd.f32 0.0, %v2777
    %2779 = vdwg.mxu0
    %v2780 = vlaneseq
    %v2781 = vshrl.u32 %v2780, 7
    %v2782 = vsub.s32 0, %v2781
    %v2783 = vrot.slane %v2776, %v2782
    %v2784 = vlaneseq
    %v2785 = vshrl.u32 %v2784, 7
    %v2786 = vsub.s32 0, %v2785
    %v2787 = vrot.slane %v2778, %v2786
    %v2788 = vsub.f32 %v2128, %v2783
    %v2789 = vsub.f32 %v2130, %v2787
    %v2790 = vmul.f32 %v2788, %v2788
    %v2791 = vmul.f32 %v2789, %v2789
    %v2792 = vsel %vm691, %v2790, 0.0
    %v2793 = vrot.slane %v2792, 4
    %v2794 = vadd.f32 %v2792, %v2793
    %v2795 = vrot.slane %v2794, 2
    %v2796 = vadd.f32 %v2794, %v2795
    %v2797 = vrot.slane %v2796, 1
    %v2798 = vadd.f32 %v2796, %v2797
    %v2799 = vsel %vm691, %v2791, 0.0
    %v2800 = vrot.slane %v2799, 4
    %v2801 = vadd.f32 %v2799, %v2800
    %v2802 = vrot.slane %v2801, 2
    %v2803 = vadd.f32 %v2801, %v2802
    %v2804 = vrot.slane %v2803, 1
    %v2805 = vadd.f32 %v2803, %v2804
    %2806 = vmatprep.subr.mxu0 0.0
    %2807 = vmatpush1.msra.mxu0 %v2548
    %2808 = vmatprep.subr.mxu0 0.0
    %2809 = vmatpush1.msra.mxu0 %v2549
    %2810 = vmatprep.subr.mxu0 0.0
    %2811 = vmatpush1.msra.mxu0 %v2550
    %2812 = vmatprep.subr.mxu0 0.0
    %2813 = vmatpush1.msra.mxu0 %v2551
    %2814 = vmatprep.subr.mxu0 0.0
    %2815 = vmatpush1.msra.mxu0 %v2552
    %2816 = vmatprep.subr.mxu0 0.0
    %2817 = vmatpush1.msra.mxu0 %v2553
    %2818 = vmatprep.subr.mxu0 0.0
    %2819 = vmatpush1.msra.mxu0 %v2554
    %2820 = vmatprep.subr.mxu0 0.0
    %2821 = vmatpush1.msra.mxu0 %v2555
    %2822 = vmatprep.subr.mxu0 0.0
    %2823 = vmatpush1.msra.mxu0 %v2556
    %2824 = vmatprep.subr.mxu0 0.0
    %2825 = vmatpush1.msra.mxu0 %v2557
    %2826 = vmatprep.subr.mxu0 0.0
    %2827 = vmatpush1.msra.mxu0 %v2558
    %2828 = vmatprep.subr.mxu0 0.0
    %2829 = vmatpush1.msra.mxu0 %v2559
    %2830 = vmatprep.subr.mxu0 0.0
    %2831 = vmatpush1.msra.mxu0 %v2560
    %2832 = vmatprep.subr.mxu0 0.0
    %2833 = vmatpush1.msra.mxu0 %v2561
    %2834 = vmatprep.subr.mxu0 0.0
    %2835 = vmatpush1.msra.mxu0 %v2562
    %2836 = vmatprep.subr.mxu0 0.0
    %2837 = vmatpush1.msra.mxu0 %v2563
    %2838 = vmatprep.subr.mxu0 0.0
    %2839 = vmatpush1.msra.mxu0 %v2564
    %2840 = vmatprep.subr.mxu0 0.0
    %2841 = vmatpush1.msra.mxu0 %v2565
    %2842 = vmatprep.subr.mxu0 0.0
    %2843 = vmatpush1.msra.mxu0 %v2566
    %2844 = vmatprep.subr.mxu0 0.0
    %2845 = vmatpush1.msra.mxu0 %v2567
    %2846 = vmatprep.subr.mxu0 0.0
    %2847 = vmatpush1.msra.mxu0 %v2568
    %2848 = vmatprep.subr.mxu0 0.0
    %2849 = vmatpush1.msra.mxu0 %v2569
    %2850 = vmatprep.subr.mxu0 0.0
    %2851 = vmatpush1.msra.mxu0 %v2570
    %2852 = vmatprep.subr.mxu0 0.0
    %2853 = vmatpush1.msra.mxu0 %v2571
    %2854 = vmatprep.subr.mxu0 0.0
    %2855 = vmatpush1.msra.mxu0 %v2572
    %2856 = vmatprep.subr.mxu0 0.0
    %2857 = vmatpush1.msra.mxu0 %v2573
    %2858 = vmatprep.subr.mxu0 0.0
    %2859 = vmatpush1.msra.mxu0 %v2574
    %2860 = vmatprep.subr.mxu0 0.0
    %2861 = vmatpush1.msra.mxu0 %v2575
    %2862 = vmatprep.subr.mxu0 0.0
    %2863 = vmatpush1.msra.mxu0 %v2576
    %2864 = vmatprep.subr.mxu0 0.0
    %2865 = vmatpush1.msra.mxu0 %v2577
    %2866 = vmatprep.subr.mxu0 0.0
    %2867 = vmatpush1.msra.mxu0 %v2578
    %2868 = vmatprep.subr.mxu0 0.0
    %2869 = vmatpush1.msra.mxu0 %v2579
    %2870 = vmatprep.mubr.f32.mxu0 %v2805
    %2871 = vmatmul.mubr.f32.gmra.mrb[0].mxu0 %v2798
    %v2872 = vpop.f32.mrb[0].mxu0
    %v2873 = vadd.f32 0.0, %v2872
    %v2874 = vpop.f32.mrb[0].mxu0
    %2875 = vdwg.mxu0
    %v2876 = vmul.f32 %v2873, 0.0625
    %v2877 = vadd.f32 %v2876, 1e-05
    %v2878 = vrsqrt.pop %v2877
    %v2880 = vsel %vm2705, %v2878, 0
    %2882 = vmatprep.subr.mxu0 %v2613
    %2883 = vmatpush1.msra.mxu0 %v2612
    %2884 = vmatprep.subr.mxu0 %v2615
    %2885 = vmatpush1.msra.mxu0 %v2614
    %2886 = vmatprep.subr.mxu0 %v2617
    %2887 = vmatpush1.msra.mxu0 %v2616
    %2888 = vmatprep.subr.mxu0 %v2619
    %2889 = vmatpush1.msra.mxu0 %v2618
    %2890 = vmatprep.subr.mxu0 0.0
    %2891 = vmatpush1.msra.mxu0 0.0
    %2892 = vmatprep.subr.mxu0 0.0
    %2893 = vmatpush1.msra.mxu0 0.0
    %2894 = vmatprep.subr.mxu0 0.0
    %2895 = vmatpush1.msra.mxu0 0.0
    %2896 = vmatprep.subr.mxu0 0.0
    %2897 = vmatpush1.msra.mxu0 0.0
    %2898 = vmatprep.subr.mxu0 0.0
    %2899 = vmatpush1.msra.mxu0 0.0
    %2900 = vmatprep.subr.mxu0 0.0
    %2901 = vmatpush1.msra.mxu0 0.0
    %2902 = vmatprep.subr.mxu0 0.0
    %2903 = vmatpush1.msra.mxu0 0.0
    %2904 = vmatprep.subr.mxu0 0.0
    %2905 = vmatpush1.msra.mxu0 0.0
    %2906 = vmatprep.subr.mxu0 0.0
    %2907 = vmatpush1.msra.mxu0 0.0
    %2908 = vmatprep.subr.mxu0 0.0
    %2909 = vmatpush1.msra.mxu0 0.0
    %2910 = vmatprep.subr.mxu0 0.0
    %2911 = vmatpush1.msra.mxu0 0.0
    %2912 = vmatprep.subr.mxu0 0.0
    %2913 = vmatpush1.msra.mxu0 0.0
    %2914 = vmatprep.subr.mxu0 0.0
    %2915 = vmatpush1.msra.mxu0 0.0
    %2916 = vmatprep.subr.mxu0 0.0
    %2917 = vmatpush1.msra.mxu0 0.0
    %2918 = vmatprep.subr.mxu0 0.0
    %2919 = vmatpush1.msra.mxu0 0.0
    %2920 = vmatprep.subr.mxu0 0.0
    %2921 = vmatpush1.msra.mxu0 0.0
    %2922 = vmatprep.subr.mxu0 0.0
    %2923 = vmatpush1.msra.mxu0 0.0
    %2924 = vmatprep.subr.mxu0 0.0
    %2925 = vmatpush1.msra.mxu0 0.0
    %2926 = vmatprep.subr.mxu0 0.0
    %2927 = vmatpush1.msra.mxu0 0.0
    %2928 = vmatprep.subr.mxu0 0.0
    %2929 = vmatpush1.msra.mxu0 0.0
    %2930 = vmatprep.subr.mxu0 0.0
    %2931 = vmatpush1.msra.mxu0 0.0
    %2932 = vmatprep.subr.mxu0 0.0
    %2933 = vmatpush1.msra.mxu0 0.0
    %2934 = vmatprep.subr.mxu0 0.0
    %2935 = vmatpush1.msra.mxu0 0.0
    %2936 = vmatprep.subr.mxu0 0.0
    %2937 = vmatpush1.msra.mxu0 0.0
    %2938 = vmatprep.subr.mxu0 0.0
    %2939 = vmatpush1.msra.mxu0 0.0
    %2940 = vmatprep.subr.mxu0 0.0
    %2941 = vmatpush1.msra.mxu0 0.0
    %2942 = vmatprep.subr.mxu0 0.0
    %2943 = vmatpush1.msra.mxu0 0.0
    %2944 = vmatprep.subr.mxu0 0.0
    %2945 = vmatpush1.msra.mxu0 0.0
    %2946 = vmatprep.mubr.f32.mxu0 0.0
    %2947 = vmatmul.mubr.f32.gmra.mrb[0].mxu0 %v2880
    %v2948 = vpop.f32.mrb[0].mxu0
    %v2949 = vadd.f32 0.0, %v2948
    %v2950 = vpop.f32.mrb[0].mxu0
    %v2951 = vadd.f32 0.0, %v2950
    %2952 = vdwg.mxu0
    %v2953 = vlaneseq
    %v2954 = vshrl.u32 %v2953, 7
    %v2955 = vsub.s32 0, %v2954
    %v2956 = vrot.slane %v2949, %v2955
    %v2957 = vlaneseq
    %v2958 = vshrl.u32 %v2957, 7
    %v2959 = vsub.s32 0, %v2958
    %v2960 = vrot.slane %v2951, %v2959
    %v2961 = vmul.f32 %v2788, %v2956
    %v2962 = vmul.f32 %v2789, %v2960
    %v2963 = vmax.f32 %v2961, 0.0
    %v2964 = vmax.f32 %v2962, 0.0
    %v2965 = vld [vmem:[#allocation10] sm:$0xff]
    %v2966 = vld [vmem:[#allocation10 + $0x8] sm:$0xff]
    %v2967 = vld [vmem:[#allocation10 + $0x10] sm:$0xff]
    %v2968 = vld [vmem:[#allocation10 + $0x18] sm:$0xff]
    %v2969 = vld [vmem:[#allocation10 + $0x20] sm:$0xff]
    %v2970 = vld [vmem:[#allocation10 + $0x28] sm:$0xff]
    %v2971 = vld [vmem:[#allocation10 + $0x30] sm:$0xff]
    %v2972 = vld [vmem:[#allocation10 + $0x38] sm:$0xff]
    %v2973 = vld [vmem:[#allocation10 + $0x40] sm:$0xff]
    %v2974 = vld [vmem:[#allocation10 + $0x48] sm:$0xff]
    %v2975 = vld [vmem:[#allocation10 + $0x50] sm:$0xff]
    %v2976 = vld [vmem:[#allocation10 + $0x58] sm:$0xff]
    %v2977 = vld [vmem:[#allocation10 + $0x60] sm:$0xff]
    %v2978 = vld [vmem:[#allocation10 + $0x68] sm:$0xff]
    %v2979 = vld [vmem:[#allocation10 + $0x70] sm:$0xff]
    %v2980 = vld [vmem:[#allocation10 + $0x78] sm:$0xff]
    %v2981 = vld [vmem:[#allocation10 + $0x80] sm:$0xff]
    %v2982 = vld [vmem:[#allocation10 + $0x88] sm:$0xff]
    %v2983 = vld [vmem:[#allocation10 + $0x90] sm:$0xff]
    %v2984 = vld [vmem:[#allocation10 + $0x98] sm:$0xff]
    %v2985 = vld [vmem:[#allocation10 + $0xa0] sm:$0xff]
    %v2986 = vld [vmem:[#allocation10 + $0xa8] sm:$0xff]
    %v2987 = vld [vmem:[#allocation10 + $0xb0] sm:$0xff]
    %v2988 = vld [vmem:[#allocation10 + $0xb8] sm:$0xff]
    %v2989 = vld [vmem:[#allocation10 + $0xc0] sm:$0xff]
    %v2990 = vld [vmem:[#allocation10 + $0xc8] sm:$0xff]
    %v2991 = vld [vmem:[#allocation10 + $0xd0] sm:$0xff]
    %v2992 = vld [vmem:[#allocation10 + $0xd8] sm:$0xff]
    %v2993 = vld [vmem:[#allocation10 + $0xe0] sm:$0xff]
    %v2994 = vld [vmem:[#allocation10 + $0xe8] sm:$0xff]
    %v2995 = vld [vmem:[#allocation10 + $0xf0] sm:$0xff]
    %v2996 = vld [vmem:[#allocation10 + $0xf8] sm:$0xff]
    %v2997 = vld [vmem:[#allocation10 + $0x100] sm:$0xff]
    %v2998 = vld [vmem:[#allocation10 + $0x108] sm:$0xff]
    %v2999 = vld [vmem:[#allocation10 + $0x110] sm:$0xff]
    %v3000 = vld [vmem:[#allocation10 + $0x118] sm:$0xff]
    %v3001 = vld [vmem:[#allocation10 + $0x120] sm:$0xff]
    %v3002 = vld [vmem:[#allocation10 + $0x128] sm:$0xff]
    %v3003 = vld [vmem:[#allocation10 + $0x130] sm:$0xff]
    %v3004 = vld [vmem:[#allocation10 + $0x138] sm:$0xff]
    %v3005 = vld [vmem:[#allocation10 + $0x140] sm:$0xff]
    %v3006 = vld [vmem:[#allocation10 + $0x148] sm:$0xff]
    %v3007 = vld [vmem:[#allocation10 + $0x150] sm:$0xff]
    %v3008 = vld [vmem:[#allocation10 + $0x158] sm:$0xff]
    %v3009 = vld [vmem:[#allocation10 + $0x160] sm:$0xff]
    %v3010 = vld [vmem:[#allocation10 + $0x168] sm:$0xff]
    %v3011 = vld [vmem:[#allocation10 + $0x170] sm:$0xff]
    %v3012 = vld [vmem:[#allocation10 + $0x178] sm:$0xff]
    %v3013 = vld [vmem:[#allocation10 + $0x180] sm:$0xff]
    %v3014 = vld [vmem:[#allocation10 + $0x188] sm:$0xff]
    %v3015 = vld [vmem:[#allocation10 + $0x190] sm:$0xff]
    %v3016 = vld [vmem:[#allocation10 + $0x198] sm:$0xff]
    %v3017 = vld [vmem:[#allocation10 + $0x1a0] sm:$0xff]
    %v3018 = vld [vmem:[#allocation10 + $0x1a8] sm:$0xff]
    %v3019 = vld [vmem:[#allocation10 + $0x1b0] sm:$0xff]
    %v3020 = vld [vmem:[#allocation10 + $0x1b8] sm:$0xff]
    %v3021 = vld [vmem:[#allocation10 + $0x1c0] sm:$0xff]
    %v3022 = vld [vmem:[#allocation10 + $0x1c8] sm:$0xff]
    %v3023 = vld [vmem:[#allocation10 + $0x1d0] sm:$0xff]
    %v3024 = vld [vmem:[#allocation10 + $0x1d8] sm:$0xff]
    %v3025 = vld [vmem:[#allocation10 + $0x1e0] sm:$0xff]
    %v3026 = vld [vmem:[#allocation10 + $0x1e8] sm:$0xff]
    %v3027 = vld [vmem:[#allocation10 + $0x1f0] sm:$0xff]
    %v3028 = vld [vmem:[#allocation10 + $0x1f8] sm:$0xff]
    %3029 = vmatprep.subr.mxu0 %v2966
    %3030 = vmatpush1.msra.mxu0 %v2965
    %3031 = vmatprep.subr.mxu0 %v2968
    %3032 = vmatpush1.msra.mxu0 %v2967
    %3033 = vmatprep.subr.mxu0 %v2970
    %3034 = vmatpush1.msra.mxu0 %v2969
    %3035 = vmatprep.subr.mxu0 %v2972
    %3036 = vmatpush1.msra.mxu0 %v2971
    %3037 = vmatprep.subr.mxu0 %v2974
    %3038 = vmatpush1.msra.mxu0 %v2973
    %3039 = vmatprep.subr.mxu0 %v2976
    %3040 = vmatpush1.msra.mxu0 %v2975
    %3041 = vmatprep.subr.mxu0 %v2978
    %3042 = vmatpush1.msra.mxu0 %v2977
    %3043 = vmatprep.subr.mxu0 %v2980
    %3044 = vmatpush1.msra.mxu0 %v2979
    %3045 = vmatprep.subr.mxu0 %v2982
    %3046 = vmatpush1.msra.mxu0 %v2981
    %3047 = vmatprep.subr.mxu0 %v2984
    %3048 = vmatpush1.msra.mxu0 %v2983
    %3049 = vmatprep.subr.mxu0 %v2986
    %3050 = vmatpush1.msra.mxu0 %v2985
    %3051 = vmatprep.subr.mxu0 %v2988
    %3052 = vmatpush1.msra.mxu0 %v2987
    %3053 = vmatprep.subr.mxu0 %v2990
    %3054 = vmatpush1.msra.mxu0 %v2989
    %3055 = vmatprep.subr.mxu0 %v2992
    %3056 = vmatpush1.msra.mxu0 %v2991
    %3057 = vmatprep.subr.mxu0 %v2994
    %3058 = vmatpush1.msra.mxu0 %v2993
    %3059 = vmatprep.subr.mxu0 %v2996
    %3060 = vmatpush1.msra.mxu0 %v2995
    %3061 = vmatprep.subr.mxu0 %v2998
    %3062 = vmatpush1.msra.mxu0 %v2997
    %3063 = vmatprep.subr.mxu0 %v3000
    %3064 = vmatpush1.msra.mxu0 %v2999
    %3065 = vmatprep.subr.mxu0 %v3002
    %3066 = vmatpush1.msra.mxu0 %v3001
    %3067 = vmatprep.subr.mxu0 %v3004
    %3068 = vmatpush1.msra.mxu0 %v3003
    %3069 = vmatprep.subr.mxu0 %v3006
    %3070 = vmatpush1.msra.mxu0 %v3005
    %3071 = vmatprep.subr.mxu0 %v3008
    %3072 = vmatpush1.msra.mxu0 %v3007
    %3073 = vmatprep.subr.mxu0 %v3010
    %3074 = vmatpush1.msra.mxu0 %v3009
    %3075 = vmatprep.subr.mxu0 %v3012
    %3076 = vmatpush1.msra.mxu0 %v3011
    %3077 = vmatprep.subr.mxu0 %v3014
    %3078 = vmatpush1.msra.mxu0 %v3013
    %3079 = vmatprep.subr.mxu0 %v3016
    %3080 = vmatpush1.msra.mxu0 %v3015
    %3081 = vmatprep.subr.mxu0 %v3018
    %3082 = vmatpush1.msra.mxu0 %v3017
    %3083 = vmatprep.subr.mxu0 %v3020
    %3084 = vmatpush1.msra.mxu0 %v3019
    %3085 = vmatprep.subr.mxu0 %v3022
    %3086 = vmatpush1.msra.mxu0 %v3021
    %3087 = vmatprep.subr.mxu0 %v3024
    %3088 = vmatpush1.msra.mxu0 %v3023
    %3089 = vmatprep.subr.mxu0 %v3026
    %3090 = vmatpush1.msra.mxu0 %v3025
    %3091 = vmatprep.subr.mxu0 %v3028
    %3092 = vmatpush1.msra.mxu0 %v3027
    %3093 = vmatprep.mubr.f32.mxu0 %v2964
    %3094 = vmatmul.mubr.f32.gmra.mrb[0].mxu0 %v2963
    %v3095 = vpop.f32.mrb[0].mxu0
    %v3096 = vadd.f32 0.0, %v3095
    %v3097 = vpop.f32.mrb[0].mxu0
    %v3098 = vadd.f32 0.0, %v3097
    %3099 = vdwg.mxu0
    %vm3100 = vcmp.lt.s32.totalorder %v180, 0
    %v3101 = vsub.s32 0, %v180
    %v3102 = vsel %vm3100, %v3101, %v180
    %v3103 = vshrl.u32 %v3102, 6
    %v3104 = vand.u32 %v3102, 63
    %v3105 = vsub.s32 0, %v3104
    %v3106 = vsel %vm3100, %v3105, %v3104
    %vm3107 = vcmp.lt.s32.totalorder %v181, 0
    %v3108 = vsub.s32 0, %v181
    %v3109 = vsel %vm3107, %v3108, %v181
    %v3110 = vshrl.u32 %v3109, 6
    %v3111 = vand.u32 %v3109, 63
    %v3112 = vsub.s32 0, %v3111
    %v3113 = vsel %vm3107, %v3112, %v3111
    %vm3114 = vcmp.lt.s32.totalorder %v182, 0
    %v3115 = vsub.s32 0, %v182
    %v3116 = vsel %vm3114, %v3115, %v182
    %v3117 = vshrl.u32 %v3116, 6
    %v3118 = vand.u32 %v3116, 63
    %v3119 = vsub.s32 0, %v3118
    %v3120 = vsel %vm3114, %v3119, %v3118
    %vm3121 = vcmp.lt.s32.totalorder %v183, 0
    %v3122 = vsub.s32 0, %v183
    %v3123 = vsel %vm3121, %v3122, %v183
    %v3124 = vshrl.u32 %v3123, 6
    %v3125 = vand.u32 %v3123, 63
    %v3126 = vsub.s32 0, %v3125
    %v3127 = vsel %vm3121, %v3126, %v3125
    %vm3128 = vcmp.lt.s32.totalorder %v184, 0
    %v3129 = vsub.s32 0, %v184
    %v3130 = vsel %vm3128, %v3129, %v184
    %v3131 = vshrl.u32 %v3130, 6
    %v3132 = vand.u32 %v3130, 63
    %v3133 = vsub.s32 0, %v3132
    %v3134 = vsel %vm3128, %v3133, %v3132
    %vm3135 = vcmp.lt.s32.totalorder %v185, 0
    %v3136 = vsub.s32 0, %v185
    %v3137 = vsel %vm3135, %v3136, %v185
    %v3138 = vshrl.u32 %v3137, 6
    %v3139 = vand.u32 %v3137, 63
    %v3140 = vsub.s32 0, %v3139
    %v3141 = vsel %vm3135, %v3140, %v3139
    %vm3142 = vcmp.lt.s32.totalorder %v186, 0
    %v3143 = vsub.s32 0, %v186
    %v3144 = vsel %vm3142, %v3143, %v186
    %v3145 = vshrl.u32 %v3144, 6
    %v3146 = vand.u32 %v3144, 63
    %v3147 = vsub.s32 0, %v3146
    %v3148 = vsel %vm3142, %v3147, %v3146
    %vm3149 = vcmp.lt.s32.totalorder %v187, 0
    %v3150 = vsub.s32 0, %v187
    %v3151 = vsel %vm3149, %v3150, %v187
    %v3152 = vshrl.u32 %v3151, 6
    %v3153 = vand.u32 %v3151, 63
    %v3154 = vsub.s32 0, %v3153
    %v3155 = vsel %vm3149, %v3154, %v3153
    %vm3156 = vcmp.lt.s32.totalorder %v188, 0
    %v3157 = vsub.s32 0, %v188
    %v3158 = vsel %vm3156, %v3157, %v188
    %v3159 = vshrl.u32 %v3158, 6
    %v3160 = vand.u32 %v3158, 63
    %v3161 = vsub.s32 0, %v3160
    %v3162 = vsel %vm3156, %v3161, %v3160
    %vm3163 = vcmp.lt.s32.totalorder %v189, 0
    %v3164 = vsub.s32 0, %v189
    %v3165 = vsel %vm3163, %v3164, %v189
    %v3166 = vshrl.u32 %v3165, 6
    %v3167 = vand.u32 %v3165, 63
    %v3168 = vsub.s32 0, %v3167
    %v3169 = vsel %vm3163, %v3168, %v3167
    %vm3170 = vcmp.lt.s32.totalorder %v190, 0
    %v3171 = vsub.s32 0, %v190
    %v3172 = vsel %vm3170, %v3171, %v190
    %v3173 = vshrl.u32 %v3172, 6
    %v3174 = vand.u32 %v3172, 63
    %v3175 = vsub.s32 0, %v3174
    %v3176 = vsel %vm3170, %v3175, %v3174
    %vm3177 = vcmp.lt.s32.totalorder %v191, 0
    %v3178 = vsub.s32 0, %v191
    %v3179 = vsel %vm3177, %v3178, %v191
    %v3180 = vshrl.u32 %v3179, 6
    %v3181 = vand.u32 %v3179, 63
    %v3182 = vsub.s32 0, %v3181
    %v3183 = vsel %vm3177, %v3182, %v3181
    %vm3184 = vcmp.lt.s32.totalorder %v192, 0
    %v3185 = vsub.s32 0, %v192
    %v3186 = vsel %vm3184, %v3185, %v192
    %v3187 = vshrl.u32 %v3186, 6
    %v3188 = vand.u32 %v3186, 63
    %v3189 = vsub.s32 0, %v3188
    %v3190 = vsel %vm3184, %v3189, %v3188
    %vm3191 = vcmp.lt.s32.totalorder %v193, 0
    %v3192 = vsub.s32 0, %v193
    %v3193 = vsel %vm3191, %v3192, %v193
    %v3194 = vshrl.u32 %v3193, 6
    %v3195 = vand.u32 %v3193, 63
    %v3196 = vsub.s32 0, %v3195
    %v3197 = vsel %vm3191, %v3196, %v3195
    %vm3198 = vcmp.lt.s32.totalorder %v194, 0
    %v3199 = vsub.s32 0, %v194
    %v3200 = vsel %vm3198, %v3199, %v194
    %v3201 = vshrl.u32 %v3200, 6
    %v3202 = vand.u32 %v3200, 63
    %v3203 = vsub.s32 0, %v3202
    %v3204 = vsel %vm3198, %v3203, %v3202
    %vm3205 = vcmp.lt.s32.totalorder %v195, 0
    %v3206 = vsub.s32 0, %v195
    %v3207 = vsel %vm3205, %v3206, %v195
    %v3208 = vshrl.u32 %v3207, 6
    %v3209 = vand.u32 %v3207, 63
    %v3210 = vsub.s32 0, %v3209
    %v3211 = vsel %vm3205, %v3210, %v3209
    %vm3212 = vcmp.lt.s32.totalorder %v196, 0
    %v3213 = vsub.s32 0, %v196
    %v3214 = vsel %vm3212, %v3213, %v196
    %v3215 = vshrl.u32 %v3214, 6
    %v3216 = vand.u32 %v3214, 63
    %v3217 = vsub.s32 0, %v3216
    %v3218 = vsel %vm3212, %v3217, %v3216
    %vm3219 = vcmp.lt.s32.totalorder %v197, 0
    %v3220 = vsub.s32 0, %v197
    %v3221 = vsel %vm3219, %v3220, %v197
    %v3222 = vshrl.u32 %v3221, 6
    %v3223 = vand.u32 %v3221, 63
    %v3224 = vsub.s32 0, %v3223
    %v3225 = vsel %vm3219, %v3224, %v3223
    %vm3226 = vcmp.lt.s32.totalorder %v198, 0
    %v3227 = vsub.s32 0, %v198
    %v3228 = vsel %vm3226, %v3227, %v198
    %v3229 = vshrl.u32 %v3228, 6
    %v3230 = vand.u32 %v3228, 63
    %v3231 = vsub.s32 0, %v3230
    %v3232 = vsel %vm3226, %v3231, %v3230
    %vm3233 = vcmp.lt.s32.totalorder %v199, 0
    %v3234 = vsub.s32 0, %v199
    %v3235 = vsel %vm3233, %v3234, %v199
    %v3236 = vshrl.u32 %v3235, 6
    %v3237 = vand.u32 %v3235, 63
    %v3238 = vsub.s32 0, %v3237
    %v3239 = vsel %vm3233, %v3238, %v3237
    %vm3240 = vcmp.lt.s32.totalorder %v200, 0
    %v3241 = vsub.s32 0, %v200
    %v3242 = vsel %vm3240, %v3241, %v200
    %v3243 = vshrl.u32 %v3242, 6
    %v3244 = vand.u32 %v3242, 63
    %v3245 = vsub.s32 0, %v3244
    %v3246 = vsel %vm3240, %v3245, %v3244
    %vm3247 = vcmp.lt.s32.totalorder %v201, 0
    %v3248 = vsub.s32 0, %v201
    %v3249 = vsel %vm3247, %v3248, %v201
    %v3250 = vshrl.u32 %v3249, 6
    %v3251 = vand.u32 %v3249, 63
    %v3252 = vsub.s32 0, %v3251
    %v3253 = vsel %vm3247, %v3252, %v3251
    %vm3254 = vcmp.lt.s32.totalorder %v202, 0
    %v3255 = vsub.s32 0, %v202
    %v3256 = vsel %vm3254, %v3255, %v202
    %v3257 = vshrl.u32 %v3256, 6
    %v3258 = vand.u32 %v3256, 63
    %v3259 = vsub.s32 0, %v3258
    %v3260 = vsel %vm3254, %v3259, %v3258
    %vm3261 = vcmp.lt.s32.totalorder %v203, 0
    %v3262 = vsub.s32 0, %v203
    %v3263 = vsel %vm3261, %v3262, %v203
    %v3264 = vshrl.u32 %v3263, 6
    %v3265 = vand.u32 %v3263, 63
    %v3266 = vsub.s32 0, %v3265
    %v3267 = vsel %vm3261, %v3266, %v3265
    %vm3268 = vcmp.lt.s32.totalorder %v204, 0
    %v3269 = vsub.s32 0, %v204
    %v3270 = vsel %vm3268, %v3269, %v204
    %v3271 = vshrl.u32 %v3270, 6
    %v3272 = vand.u32 %v3270, 63
    %v3273 = vsub.s32 0, %v3272
    %v3274 = vsel %vm3268, %v3273, %v3272
    %vm3275 = vcmp.lt.s32.totalorder %v205, 0
    %v3276 = vsub.s32 0, %v205
    %v3277 = vsel %vm3275, %v3276, %v205
    %v3278 = vshrl.u32 %v3277, 6
    %v3279 = vand.u32 %v3277, 63
    %v3280 = vsub.s32 0, %v3279
    %v3281 = vsel %vm3275, %v3280, %v3279
    %vm3282 = vcmp.lt.s32.totalorder %v206, 0
    %v3283 = vsub.s32 0, %v206
    %v3284 = vsel %vm3282, %v3283, %v206
    %v3285 = vshrl.u32 %v3284, 6
    %v3286 = vand.u32 %v3284, 63
    %v3287 = vsub.s32 0, %v3286
    %v3288 = vsel %vm3282, %v3287, %v3286
    %vm3289 = vcmp.lt.s32.totalorder %v207, 0
    %v3290 = vsub.s32 0, %v207
    %v3291 = vsel %vm3289, %v3290, %v207
    %v3292 = vshrl.u32 %v3291, 6
    %v3293 = vand.u32 %v3291, 63
    %v3294 = vsub.s32 0, %v3293
    %v3295 = vsel %vm3289, %v3294, %v3293
    %vm3296 = vcmp.lt.s32.totalorder %v208, 0
    %v3297 = vsub.s32 0, %v208
    %v3298 = vsel %vm3296, %v3297, %v208
    %v3299 = vshrl.u32 %v3298, 6
    %v3300 = vand.u32 %v3298, 63
    %v3301 = vsub.s32 0, %v3300
    %v3302 = vsel %vm3296, %v3301, %v3300
    %vm3303 = vcmp.lt.s32.totalorder %v209, 0
    %v3304 = vsub.s32 0, %v209
    %v3305 = vsel %vm3303, %v3304, %v209
    %v3306 = vshrl.u32 %v3305, 6
    %v3307 = vand.u32 %v3305, 63
    %v3308 = vsub.s32 0, %v3307
    %v3309 = vsel %vm3303, %v3308, %v3307
    %vm3310 = vcmp.lt.s32.totalorder %v210, 0
    %v3311 = vsub.s32 0, %v210
    %v3312 = vsel %vm3310, %v3311, %v210
    %v3313 = vshrl.u32 %v3312, 6
    %v3314 = vand.u32 %v3312, 63
    %v3315 = vsub.s32 0, %v3314
    %v3316 = vsel %vm3310, %v3315, %v3314
    %vm3317 = vcmp.lt.s32.totalorder %v211, 0
    %v3318 = vsub.s32 0, %v211
    %v3319 = vsel %vm3317, %v3318, %v211
    %v3320 = vshrl.u32 %v3319, 6
    %v3321 = vand.u32 %v3319, 63
    %v3322 = vsub.s32 0, %v3321
    %v3323 = vsel %vm3317, %v3322, %v3321
    %vm3324 = vcmp.ne.s32.totalorder %v3106, 0
    %vm3325 = vcmp.ne.s32.totalorder %v3113, 0
    %vm3326 = vcmp.ne.s32.totalorder %v3120, 0
    %vm3327 = vcmp.ne.s32.totalorder %v3127, 0
    %vm3328 = vcmp.ne.s32.totalorder %v3134, 0
    %vm3329 = vcmp.ne.s32.totalorder %v3141, 0
    %vm3330 = vcmp.ne.s32.totalorder %v3148, 0
    %vm3331 = vcmp.ne.s32.totalorder %v3155, 0
    %vm3332 = vcmp.ne.s32.totalorder %v3162, 0
    %vm3333 = vcmp.ne.s32.totalorder %v3169, 0
    %vm3334 = vcmp.ne.s32.totalorder %v3176, 0
    %vm3335 = vcmp.ne.s32.totalorder %v3183, 0
    %vm3336 = vcmp.ne.s32.totalorder %v3190, 0
    %vm3337 = vcmp.ne.s32.totalorder %v3197, 0
    %vm3338 = vcmp.ne.s32.totalorder %v3204, 0
    %vm3339 = vcmp.ne.s32.totalorder %v3211, 0
    %vm3340 = vcmp.ne.s32.totalorder %v3218, 0
    %vm3341 = vcmp.ne.s32.totalorder %v3225, 0
    %vm3342 = vcmp.ne.s32.totalorder %v3232, 0
    %vm3343 = vcmp.ne.s32.totalorder %v3239, 0
    %vm3344 = vcmp.ne.s32.totalorder %v3246, 0
    %vm3345 = vcmp.ne.s32.totalorder %v3253, 0
    %vm3346 = vcmp.ne.s32.totalorder %v3260, 0
    %vm3347 = vcmp.ne.s32.totalorder %v3267, 0
    %vm3348 = vcmp.ne.s32.totalorder %v3274, 0
    %vm3349 = vcmp.ne.s32.totalorder %v3281, 0
    %vm3350 = vcmp.ne.s32.totalorder %v3288, 0
    %vm3351 = vcmp.ne.s32.totalorder %v3295, 0
    %vm3352 = vcmp.ne.s32.totalorder %v3302, 0
    %vm3353 = vcmp.ne.s32.totalorder %v3309, 0
    %vm3354 = vcmp.ne.s32.totalorder %v3316, 0
    %vm3355 = vcmp.ne.s32.totalorder %v3323, 0
    %vm3356 = vcmp.lt.s32.totalorder %v3106, 0
    %vm3357 = vcmp.lt.s32.totalorder %v3113, 0
    %vm3358 = vcmp.lt.s32.totalorder %v3120, 0
    %vm3359 = vcmp.lt.s32.totalorder %v3127, 0
    %vm3360 = vcmp.lt.s32.totalorder %v3134, 0
    %vm3361 = vcmp.lt.s32.totalorder %v3141, 0
    %vm3362 = vcmp.lt.s32.totalorder %v3148, 0
    %vm3363 = vcmp.lt.s32.totalorder %v3155, 0
    %vm3364 = vcmp.lt.s32.totalorder %v3162, 0
    %vm3365 = vcmp.lt.s32.totalorder %v3169, 0
    %vm3366 = vcmp.lt.s32.totalorder %v3176, 0
    %vm3367 = vcmp.lt.s32.totalorder %v3183, 0
    %vm3368 = vcmp.lt.s32.totalorder %v3190, 0
    %vm3369 = vcmp.lt.s32.totalorder %v3197, 0
    %vm3370 = vcmp.lt.s32.totalorder %v3204, 0
    %vm3371 = vcmp.lt.s32.totalorder %v3211, 0
    %vm3372 = vcmp.lt.s32.totalorder %v3218, 0
    %vm3373 = vcmp.lt.s32.totalorder %v3225, 0
    %vm3374 = vcmp.lt.s32.totalorder %v3232, 0
    %vm3375 = vcmp.lt.s32.totalorder %v3239, 0
    %vm3376 = vcmp.lt.s32.totalorder %v3246, 0
    %vm3377 = vcmp.lt.s32.totalorder %v3253, 0
    %vm3378 = vcmp.lt.s32.totalorder %v3260, 0
    %vm3379 = vcmp.lt.s32.totalorder %v3267, 0
    %vm3380 = vcmp.lt.s32.totalorder %v3274, 0
    %vm3381 = vcmp.lt.s32.totalorder %v3281, 0
    %vm3382 = vcmp.lt.s32.totalorder %v3288, 0
    %vm3383 = vcmp.lt.s32.totalorder %v3295, 0
    %vm3384 = vcmp.lt.s32.totalorder %v3302, 0
    %vm3385 = vcmp.lt.s32.totalorder %v3309, 0
    %vm3386 = vcmp.lt.s32.totalorder %v3316, 0
    %vm3387 = vcmp.lt.s32.totalorder %v3323, 0
    %vm3388 = vmand %vm3356, %vm3324
    %vm3389 = vmand %vm3357, %vm3325
    %vm3390 = vmand %vm3358, %vm3326
    %vm3391 = vmand %vm3359, %vm3327
    %vm3392 = vmand %vm3360, %vm3328
    %vm3393 = vmand %vm3361, %vm3329
    %vm3394 = vmand %vm3362, %vm3330
    %vm3395 = vmand %vm3363, %vm3331
    %vm3396 = vmand %vm3364, %vm3332
    %vm3397 = vmand %vm3365, %vm3333
    %vm3398 = vmand %vm3366, %vm3334
    %vm3399 = vmand %vm3367, %vm3335
    %vm3400 = vmand %vm3368, %vm3336
    %vm3401 = vmand %vm3369, %vm3337
    %vm3402 = vmand %vm3370, %vm3338
    %vm3403 = vmand %vm3371, %vm3339
    %vm3404 = vmand %vm3372, %vm3340
    %vm3405 = vmand %vm3373, %vm3341
    %vm3406 = vmand %vm3374, %vm3342
    %vm3407 = vmand %vm3375, %vm3343
    %vm3408 = vmand %vm3376, %vm3344
    %vm3409 = vmand %vm3377, %vm3345
    %vm3410 = vmand %vm3378, %vm3346
    %vm3411 = vmand %vm3379, %vm3347
    %vm3412 = vmand %vm3380, %vm3348
    %vm3413 = vmand %vm3381, %vm3349
    %vm3414 = vmand %vm3382, %vm3350
    %vm3415 = vmand %vm3383, %vm3351
    %vm3416 = vmand %vm3384, %vm3352
    %vm3417 = vmand %vm3385, %vm3353
    %vm3418 = vmand %vm3386, %vm3354
    %vm3419 = vmand %vm3387, %vm3355
    %v3420 = vadd.s32 %v3106, 64
    %v3421 = vadd.s32 %v3113, 64
    %v3422 = vadd.s32 %v3120, 64
    %v3423 = vadd.s32 %v3127, 64
    %v3424 = vadd.s32 %v3134, 64
    %v3425 = vadd.s32 %v3141, 64
    %v3426 = vadd.s32 %v3148, 64
    %v3427 = vadd.s32 %v3155, 64
    %v3428 = vadd.s32 %v3162, 64
    %v3429 = vadd.s32 %v3169, 64
    %v3430 = vadd.s32 %v3176, 64
    %v3431 = vadd.s32 %v3183, 64
    %v3432 = vadd.s32 %v3190, 64
    %v3433 = vadd.s32 %v3197, 64
    %v3434 = vadd.s32 %v3204, 64
    %v3435 = vadd.s32 %v3211, 64
    %v3436 = vadd.s32 %v3218, 64
    %v3437 = vadd.s32 %v3225, 64
    %v3438 = vadd.s32 %v3232, 64
    %v3439 = vadd.s32 %v3239, 64
    %v3440 = vadd.s32 %v3246, 64
    %v3441 = vadd.s32 %v3253, 64
    %v3442 = vadd.s32 %v3260, 64
    %v3443 = vadd.s32 %v3267, 64
    %v3444 = vadd.s32 %v3274, 64
    %v3445 = vadd.s32 %v3281, 64
    %v3446 = vadd.s32 %v3288, 64
    %v3447 = vadd.s32 %v3295, 64
    %v3448 = vadd.s32 %v3302, 64
    %v3449 = vadd.s32 %v3309, 64
    %v3450 = vadd.s32 %v3316, 64
    %v3451 = vadd.s32 %v3323, 64
    %v3452 = vsel %vm3388, %v3420, %v3106
    %v3453 = vsel %vm3389, %v3421, %v3113
    %v3454 = vsel %vm3390, %v3422, %v3120
    %v3455 = vsel %vm3391, %v3423, %v3127
    %v3456 = vsel %vm3392, %v3424, %v3134
    %v3457 = vsel %vm3393, %v3425, %v3141
    %v3458 = vsel %vm3394, %v3426, %v3148
    %v3459 = vsel %vm3395, %v3427, %v3155
    %v3460 = vsel %vm3396, %v3428, %v3162
    %v3461 = vsel %vm3397, %v3429, %v3169
    %v3462 = vsel %vm3398, %v3430, %v3176
    %v3463 = vsel %vm3399, %v3431, %v3183
    %v3464 = vsel %vm3400, %v3432, %v3190
    %v3465 = vsel %vm3401, %v3433, %v3197
    %v3466 = vsel %vm3402, %v3434, %v3204
    %v3467 = vsel %vm3403, %v3435, %v3211
    %v3468 = vsel %vm3404, %v3436, %v3218
    %v3469 = vsel %vm3405, %v3437, %v3225
    %v3470 = vsel %vm3406, %v3438, %v3232
    %v3471 = vsel %vm3407, %v3439, %v3239
    %v3472 = vsel %vm3408, %v3440, %v3246
    %v3473 = vsel %vm3409, %v3441, %v3253
    %v3474 = vsel %vm3410, %v3442, %v3260
    %v3475 = vsel %vm3411, %v3443, %v3267
    %v3476 = vsel %vm3412, %v3444, %v3274
    %v3477 = vsel %vm3413, %v3445, %v3281
    %v3478 = vsel %vm3414, %v3446, %v3288
    %v3479 = vsel %vm3415, %v3447, %v3295
    %v3480 = vsel %vm3416, %v3448, %v3302
    %v3481 = vsel %vm3417, %v3449, %v3309
    %v3482 = vsel %vm3418, %v3450, %v3316
    %v3483 = vsel %vm3419, %v3451, %v3323
    %vm3484 = vcmp.eq.s32.totalorder %v3452, %v213
    %vm3485 = vcmp.eq.s32.totalorder %v3453, %v213
    %vm3486 = vcmp.eq.s32.totalorder %v3454, %v213
    %vm3487 = vcmp.eq.s32.totalorder %v3455, %v213
    %vm3488 = vcmp.eq.s32.totalorder %v3456, %v213
    %vm3489 = vcmp.eq.s32.totalorder %v3457, %v213
    %vm3490 = vcmp.eq.s32.totalorder %v3458, %v213
    %vm3491 = vcmp.eq.s32.totalorder %v3459, %v213
    %vm3492 = vcmp.eq.s32.totalorder %v3460, %v213
    %vm3493 = vcmp.eq.s32.totalorder %v3461, %v213
    %vm3494 = vcmp.eq.s32.totalorder %v3462, %v213
    %vm3495 = vcmp.eq.s32.totalorder %v3463, %v213
    %vm3496 = vcmp.eq.s32.totalorder %v3464, %v213
    %vm3497 = vcmp.eq.s32.totalorder %v3465, %v213
    %vm3498 = vcmp.eq.s32.totalorder %v3466, %v213
    %vm3499 = vcmp.eq.s32.totalorder %v3467, %v213
    %vm3500 = vcmp.eq.s32.totalorder %v3468, %v213
    %vm3501 = vcmp.eq.s32.totalorder %v3469, %v213
    %vm3502 = vcmp.eq.s32.totalorder %v3470, %v213
    %vm3503 = vcmp.eq.s32.totalorder %v3471, %v213
    %vm3504 = vcmp.eq.s32.totalorder %v3472, %v213
    %vm3505 = vcmp.eq.s32.totalorder %v3473, %v213
    %vm3506 = vcmp.eq.s32.totalorder %v3474, %v213
    %vm3507 = vcmp.eq.s32.totalorder %v3475, %v213
    %vm3508 = vcmp.eq.s32.totalorder %v3476, %v213
    %vm3509 = vcmp.eq.s32.totalorder %v3477, %v213
    %vm3510 = vcmp.eq.s32.totalorder %v3478, %v213
    %vm3511 = vcmp.eq.s32.totalorder %v3479, %v213
    %vm3512 = vcmp.eq.s32.totalorder %v3480, %v213
    %vm3513 = vcmp.eq.s32.totalorder %v3481, %v213
    %vm3514 = vcmp.eq.s32.totalorder %v3482, %v213
    %vm3515 = vcmp.eq.s32.totalorder %v3483, %v213
    %v3516 = vsel %vm3484, 1.0, 0.0
    %v3517 = vsel %vm3485, 1.0, 0.0
    %v3518 = vsel %vm3486, 1.0, 0.0
    %v3519 = vsel %vm3487, 1.0, 0.0
    %v3520 = vsel %vm3488, 1.0, 0.0
    %v3521 = vsel %vm3489, 1.0, 0.0
    %v3522 = vsel %vm3490, 1.0, 0.0
    %v3523 = vsel %vm3491, 1.0, 0.0
    %v3524 = vsel %vm3492, 1.0, 0.0
    %v3525 = vsel %vm3493, 1.0, 0.0
    %v3526 = vsel %vm3494, 1.0, 0.0
    %v3527 = vsel %vm3495, 1.0, 0.0
    %v3528 = vsel %vm3496, 1.0, 0.0
    %v3529 = vsel %vm3497, 1.0, 0.0
    %v3530 = vsel %vm3498, 1.0, 0.0
    %v3531 = vsel %vm3499, 1.0, 0.0
    %v3532 = vsel %vm3500, 1.0, 0.0
    %v3533 = vsel %vm3501, 1.0, 0.0
    %v3534 = vsel %vm3502, 1.0, 0.0
    %v3535 = vsel %vm3503, 1.0, 0.0
    %v3536 = vsel %vm3504, 1.0, 0.0
    %v3537 = vsel %vm3505, 1.0, 0.0
    %v3538 = vsel %vm3506, 1.0, 0.0
    %v3539 = vsel %vm3507, 1.0, 0.0
    %v3540 = vsel %vm3508, 1.0, 0.0
    %v3541 = vsel %vm3509, 1.0, 0.0
    %v3542 = vsel %vm3510, 1.0, 0.0
    %v3543 = vsel %vm3511, 1.0, 0.0
    %v3544 = vsel %vm3512, 1.0, 0.0
    %v3545 = vsel %vm3513, 1.0, 0.0
    %v3546 = vsel %vm3514, 1.0, 0.0
    %v3547 = vsel %vm3515, 1.0, 0.0
    %vm3548 = vcmp.lt.s32.totalorder %v213, 0
    %v3549 = vsub.s32 0, %v213
    %v3550 = vsel %vm3548, %v3549, %v213
    %v3551 = vshrl.u32 %v3550, 6
    %v3552 = vand.u32 %v3550, 63
    %v3553 = vsub.s32 0, %v3552
    %v3554 = vsel %vm3548, %v3553, %v3552
    %vm3555 = vcmp.lt.s32.totalorder %v662, 0
    %v3556 = vsub.s32 0, %v662
    %v3557 = vsel %vm3555, %v3556, %v662
    %v3558 = vshrl.u32 %v3557, 6
    %v3559 = vand.u32 %v3557, 63
    %v3560 = vsub.s32 0, %v3559
    %v3561 = vsel %vm3555, %v3560, %v3559
    %vm3562 = vcmp.ne.s32.totalorder %v3554, 0
    %vm3563 = vcmp.ne.s32.totalorder %v3561, 0
    %vm3564 = vcmp.lt.s32.totalorder %v3554, 0
    %vm3565 = vcmp.lt.s32.totalorder %v3561, 0
    %vm3566 = vmand %vm3564, %vm3562
    %vm3567 = vmand %vm3565, %vm3563
    %v3568 = vadd.s32 %v3554, 64
    %v3569 = vadd.s32 %v3561, 64
    %v3570 = vsel %vm3566, %v3568, %v3554
    %v3571 = vsel %vm3567, %v3569, %v3561
    %vm3572 = vcmp.eq.s32.totalorder %v3570, %v180
    %vm3573 = vcmp.eq.s32.totalorder %v3571, %v180
    %vm3574 = vcmp.eq.s32.totalorder %v3570, %v181
    %vm3575 = vcmp.eq.s32.totalorder %v3571, %v181
    %vm3576 = vcmp.eq.s32.totalorder %v3570, %v182
    %vm3577 = vcmp.eq.s32.totalorder %v3571, %v182
    %vm3578 = vcmp.eq.s32.totalorder %v3570, %v183
    %vm3579 = vcmp.eq.s32.totalorder %v3571, %v183
    %vm3580 = vcmp.eq.s32.totalorder %v3570, %v184
    %vm3581 = vcmp.eq.s32.totalorder %v3571, %v184
    %vm3582 = vcmp.eq.s32.totalorder %v3570, %v185
    %vm3583 = vcmp.eq.s32.totalorder %v3571, %v185
    %vm3584 = vcmp.eq.s32.totalorder %v3570, %v186
    %vm3585 = vcmp.eq.s32.totalorder %v3571, %v186
    %vm3586 = vcmp.eq.s32.totalorder %v3570, %v187
    %vm3587 = vcmp.eq.s32.totalorder %v3571, %v187
    %v3588 = vsel %vm3572, 1.0, 0.0
    %v3589 = vsel %vm3573, 1.0, 0.0
    %v3590 = vsel %vm3574, 1.0, 0.0
    %v3591 = vsel %vm3575, 1.0, 0.0
    %v3592 = vsel %vm3576, 1.0, 0.0
    %v3593 = vsel %vm3577, 1.0, 0.0
    %v3594 = vsel %vm3578, 1.0, 0.0
    %v3595 = vsel %vm3579, 1.0, 0.0
    %v3596 = vsel %vm3580, 1.0, 0.0
    %v3597 = vsel %vm3581, 1.0, 0.0
    %v3598 = vsel %vm3582, 1.0, 0.0
    %v3599 = vsel %vm3583, 1.0, 0.0
    %v3600 = vsel %vm3584, 1.0, 0.0
    %v3601 = vsel %vm3585, 1.0, 0.0
    %v3602 = vsel %vm3586, 1.0, 0.0
    %v3603 = vsel %vm3587, 1.0, 0.0
    %v3604 = vsel %vm691, %v3096, 0.0
    %v3605 = vrot.slane %v3604, 4
    %v3606 = vadd.f32 %v3604, %v3605
    %v3607 = vrot.slane %v3606, 2
    %v3608 = vadd.f32 %v3606, %v3607
    %v3609 = vrot.slane %v3608, 1
    %v3610 = vadd.f32 %v3608, %v3609
    %v3611 = vsel %vm691, %v3098, 0.0
    %v3612 = vrot.slane %v3611, 4
    %v3613 = vadd.f32 %v3611, %v3612
    %v3614 = vrot.slane %v3613, 2
    %v3615 = vadd.f32 %v3613, %v3614
    %v3616 = vrot.slane %v3615, 1
    %v3617 = vadd.f32 %v3615, %v3616
    %3618 = vmatprep.subr.mxu0 0.0
    %3619 = vmatpush1.msra.mxu0 %v3516
    %3620 = vmatprep.subr.mxu0 0.0
    %3621 = vmatpush1.msra.mxu0 %v3517
    %3622 = vmatprep.subr.mxu0 0.0
    %3623 = vmatpush1.msra.mxu0 %v3518
    %3624 = vmatprep.subr.mxu0 0.0
    %3625 = vmatpush1.msra.mxu0 %v3519
    %3626 = vmatprep.subr.mxu0 0.0
    %3627 = vmatpush1.msra.mxu0 %v3520
    %3628 = vmatprep.subr.mxu0 0.0
    %3629 = vmatpush1.msra.mxu0 %v3521
    %3630 = vmatprep.subr.mxu0 0.0
    %3631 = vmatpush1.msra.mxu0 %v3522
    %3632 = vmatprep.subr.mxu0 0.0
    %3633 = vmatpush1.msra.mxu0 %v3523
    %3634 = vmatprep.subr.mxu0 0.0
    %3635 = vmatpush1.msra.mxu0 %v3524
    %3636 = vmatprep.subr.mxu0 0.0
    %3637 = vmatpush1.msra.mxu0 %v3525
    %3638 = vmatprep.subr.mxu0 0.0
    %3639 = vmatpush1.msra.mxu0 %v3526
    %3640 = vmatprep.subr.mxu0 0.0
    %3641 = vmatpush1.msra.mxu0 %v3527
    %3642 = vmatprep.subr.mxu0 0.0
    %3643 = vmatpush1.msra.mxu0 %v3528
    %3644 = vmatprep.subr.mxu0 0.0
    %3645 = vmatpush1.msra.mxu0 %v3529
    %3646 = vmatprep.subr.mxu0 0.0
    %3647 = vmatpush1.msra.mxu0 %v3530
    %3648 = vmatprep.subr.mxu0 0.0
    %3649 = vmatpush1.msra.mxu0 %v3531
    %3650 = vmatprep.subr.mxu0 0.0
    %3651 = vmatpush1.msra.mxu0 %v3532
    %3652 = vmatprep.subr.mxu0 0.0
    %3653 = vmatpush1.msra.mxu0 %v3533
    %3654 = vmatprep.subr.mxu0 0.0
    %3655 = vmatpush1.msra.mxu0 %v3534
    %3656 = vmatprep.subr.mxu0 0.0
    %3657 = vmatpush1.msra.mxu0 %v3535
    %3658 = vmatprep.subr.mxu0 0.0
    %3659 = vmatpush1.msra.mxu0 %v3536
    %3660 = vmatprep.subr.mxu0 0.0
    %3661 = vmatpush1.msra.mxu0 %v3537
    %3662 = vmatprep.subr.mxu0 0.0
    %3663 = vmatpush1.msra.mxu0 %v3538
    %3664 = vmatprep.subr.mxu0 0.0
    %3665 = vmatpush1.msra.mxu0 %v3539
    %3666 = vmatprep.subr.mxu0 0.0
    %3667 = vmatpush1.msra.mxu0 %v3540
    %3668 = vmatprep.subr.mxu0 0.0
    %3669 = vmatpush1.msra.mxu0 %v3541
    %3670 = vmatprep.subr.mxu0 0.0
    %3671 = vmatpush1.msra.mxu0 %v3542
    %3672 = vmatprep.subr.mxu0 0.0
    %3673 = vmatpush1.msra.mxu0 %v3543
    %3674 = vmatprep.subr.mxu0 0.0
    %3675 = vmatpush1.msra.mxu0 %v3544
    %3676 = vmatprep.subr.mxu0 0.0
    %3677 = vmatpush1.msra.mxu0 %v3545
    %3678 = vmatprep.subr.mxu0 0.0
    %3679 = vmatpush1.msra.mxu0 %v3546
    %3680 = vmatprep.subr.mxu0 0.0
    %3681 = vmatpush1.msra.mxu0 %v3547
    %3682 = vmatprep.mubr.f32.mxu0 %v3617
    %3683 = vmatmul.mubr.f32.gmra.mrb[0].mxu0 %v3610
    %v3684 = vpop.f32.mrb[0].mxu0
    %v3685 = vadd.f32 0.0, %v3684
    %v3686 = vpop.f32.mrb[0].mxu0
    %3687 = vdwg.mxu0
    %v3688 = vmul.f32 %v3685, 0.125
    %v3690 = vsel %vm104, %v3688, 0
    %3692 = vmatprep.subr.mxu0 %v3589
    %3693 = vmatpush1.msra.mxu0 %v3588
    %3694 = vmatprep.subr.mxu0 %v3591
    %3695 = vmatpush1.msra.mxu0 %v3590
    %3696 = vmatprep.subr.mxu0 %v3593
    %3697 = vmatpush1.msra.mxu0 %v3592
    %3698 = vmatprep.subr.mxu0 %v3595
    %3699 = vmatpush1.msra.mxu0 %v3594
    %3700 = vmatprep.subr.mxu0 %v3597
    %3701 = vmatpush1.msra.mxu0 %v3596
    %3702 = vmatprep.subr.mxu0 %v3599
    %3703 = vmatpush1.msra.mxu0 %v3598
    %3704 = vmatprep.subr.mxu0 %v3601
    %3705 = vmatpush1.msra.mxu0 %v3600
    %3706 = vmatprep.subr.mxu0 %v3603
    %3707 = vmatpush1.msra.mxu0 %v3602
    %3708 = vmatprep.subr.mxu0 0.0
    %3709 = vmatpush1.msra.mxu0 0.0
    %3710 = vmatprep.subr.mxu0 0.0
    %3711 = vmatpush1.msra.mxu0 0.0
    %3712 = vmatprep.subr.mxu0 0.0
    %3713 = vmatpush1.msra.mxu0 0.0
    %3714 = vmatprep.subr.mxu0 0.0
    %3715 = vmatpush1.msra.mxu0 0.0
    %3716 = vmatprep.subr.mxu0 0.0
    %3717 = vmatpush1.msra.mxu0 0.0
    %3718 = vmatprep.subr.mxu0 0.0
    %3719 = vmatpush1.msra.mxu0 0.0
    %3720 = vmatprep.subr.mxu0 0.0
    %3721 = vmatpush1.msra.mxu0 0.0
    %3722 = vmatprep.subr.mxu0 0.0
    %3723 = vmatpush1.msra.mxu0 0.0
    %3724 = vmatprep.subr.mxu0 0.0
    %3725 = vmatpush1.msra.mxu0 0.0
    %3726 = vmatprep.subr.mxu0 0.0
    %3727 = vmatpush1.msra.mxu0 0.0
    %3728 = vmatprep.subr.mxu0 0.0
    %3729 = vmatpush1.msra.mxu0 0.0
    %3730 = vmatprep.subr.mxu0 0.0
    %3731 = vmatpush1.msra.mxu0 0.0
    %3732 = vmatprep.subr.mxu0 0.0
    %3733 = vmatpush1.msra.mxu0 0.0
    %3734 = vmatprep.subr.mxu0 0.0
    %3735 = vmatpush1.msra.mxu0 0.0
    %3736 = vmatprep.subr.mxu0 0.0
    %3737 = vmatpush1.msra.mxu0 0.0
    %3738 = vmatprep.subr.mxu0 0.0
    %3739 = vmatpush1.msra.mxu0 0.0
    %3740 = vmatprep.subr.mxu0 0.0
    %3741 = vmatpush1.msra.mxu0 0.0
    %3742 = vmatprep.subr.mxu0 0.0
    %3743 = vmatpush1.msra.mxu0 0.0
    %3744 = vmatprep.subr.mxu0 0.0
    %3745 = vmatpush1.msra.mxu0 0.0
    %3746 = vmatprep.subr.mxu0 0.0
    %3747 = vmatpush1.msra.mxu0 0.0
    %3748 = vmatprep.subr.mxu0 0.0
    %3749 = vmatpush1.msra.mxu0 0.0
    %3750 = vmatprep.subr.mxu0 0.0
    %3751 = vmatpush1.msra.mxu0 0.0
    %3752 = vmatprep.subr.mxu0 0.0
    %3753 = vmatpush1.msra.mxu0 0.0
    %3754 = vmatprep.subr.mxu0 0.0
    %3755 = vmatpush1.msra.mxu0 0.0
    %3756 = vmatprep.mubr.f32.mxu0 0.0
    %3757 = vmatmul.mubr.f32.gmra.mrb[0].mxu0 %v3690
    %v3758 = vpop.f32.mrb[0].mxu0
    %v3759 = vadd.f32 0.0, %v3758
    %v3760 = vpop.f32.mrb[0].mxu0
    %v3761 = vadd.f32 0.0, %v3760
    %3762 = vdwg.mxu0
    %v3763 = vlaneseq
    %v3764 = vshrl.u32 %v3763, 7
    %v3765 = vsub.s32 0, %v3764
    %v3766 = vrot.slane %v3759, %v3765
    %v3767 = vlaneseq
    %v3768 = vshrl.u32 %v3767, 7
    %v3769 = vsub.s32 0, %v3768
    %v3770 = vrot.slane %v3761, %v3769
    %v3771 = vsub.f32 %v3096, %v3766
    %v3772 = vsub.f32 %v3098, %v3770
    %v3773 = vmul.f32 %v3771, %v3771
    %v3774 = vmul.f32 %v3772, %v3772
    %v3775 = vsel %vm691, %v3773, 0.0
    %v3776 = vrot.slane %v3775, 4
    %v3777 = vadd.f32 %v3775, %v3776
    %v3778 = vrot.slane %v3777, 2
    %v3779 = vadd.f32 %v3777, %v3778
    %v3780 = vrot.slane %v3779, 1
    %v3781 = vadd.f32 %v3779, %v3780
    %v3782 = vsel %vm691, %v3774, 0.0
    %v3783 = vrot.slane %v3782, 4
    %v3784 = vadd.f32 %v3782, %v3783
    %v3785 = vrot.slane %v3784, 2
    %v3786 = vadd.f32 %v3784, %v3785
    %v3787 = vrot.slane %v3786, 1
    %v3788 = vadd.f32 %v3786, %v3787
    %3789 = vmatprep.subr.mxu0 0.0
    %3790 = vmatpush1.msra.mxu0 %v3516
    %3791 = vmatprep.subr.mxu0 0.0
    %3792 = vmatpush1.msra.mxu0 %v3517
    %3793 = vmatprep.subr.mxu0 0.0
    %3794 = vmatpush1.msra.mxu0 %v3518
    %3795 = vmatprep.subr.mxu0 0.0
    %3796 = vmatpush1.msra.mxu0 %v3519
    %3797 = vmatprep.subr.mxu0 0.0
    %3798 = vmatpush1.msra.mxu0 %v3520
    %3799 = vmatprep.subr.mxu0 0.0
    %3800 = vmatpush1.msra.mxu0 %v3521
    %3801 = vmatprep.subr.mxu0 0.0
    %3802 = vmatpush1.msra.mxu0 %v3522
    %3803 = vmatprep.subr.mxu0 0.0
    %3804 = vmatpush1.msra.mxu0 %v3523
    %3805 = vmatprep.subr.mxu0 0.0
    %3806 = vmatpush1.msra.mxu0 %v3524
    %3807 = vmatprep.subr.mxu0 0.0
    %3808 = vmatpush1.msra.mxu0 %v3525
    %3809 = vmatprep.subr.mxu0 0.0
    %3810 = vmatpush1.msra.mxu0 %v3526
    %3811 = vmatprep.subr.mxu0 0.0
    %3812 = vmatpush1.msra.mxu0 %v3527
    %3813 = vmatprep.subr.mxu0 0.0
    %3814 = vmatpush1.msra.mxu0 %v3528
    %3815 = vmatprep.subr.mxu0 0.0
    %3816 = vmatpush1.msra.mxu0 %v3529
    %3817 = vmatprep.subr.mxu0 0.0
    %3818 = vmatpush1.msra.mxu0 %v3530
    %3819 = vmatprep.subr.mxu0 0.0
    %3820 = vmatpush1.msra.mxu0 %v3531
    %3821 = vmatprep.subr.mxu0 0.0
    %3822 = vmatpush1.msra.mxu0 %v3532
    %3823 = vmatprep.subr.mxu0 0.0
    %3824 = vmatpush1.msra.mxu0 %v3533
    %3825 = vmatprep.subr.mxu0 0.0
    %3826 = vmatpush1.msra.mxu0 %v3534
    %3827 = vmatprep.subr.mxu0 0.0
    %3828 = vmatpush1.msra.mxu0 %v3535
    %3829 = vmatprep.subr.mxu0 0.0
    %3830 = vmatpush1.msra.mxu0 %v3536
    %3831 = vmatprep.subr.mxu0 0.0
    %3832 = vmatpush1.msra.mxu0 %v3537
    %3833 = vmatprep.subr.mxu0 0.0
    %3834 = vmatpush1.msra.mxu0 %v3538
    %3835 = vmatprep.subr.mxu0 0.0
    %3836 = vmatpush1.msra.mxu0 %v3539
    %3837 = vmatprep.subr.mxu0 0.0
    %3838 = vmatpush1.msra.mxu0 %v3540
    %3839 = vmatprep.subr.mxu0 0.0
    %3840 = vmatpush1.msra.mxu0 %v3541
    %3841 = vmatprep.subr.mxu0 0.0
    %3842 = vmatpush1.msra.mxu0 %v3542
    %3843 = vmatprep.subr.mxu0 0.0
    %3844 = vmatpush1.msra.mxu0 %v3543
    %3845 = vmatprep.subr.mxu0 0.0
    %3846 = vmatpush1.msra.mxu0 %v3544
    %3847 = vmatprep.subr.mxu0 0.0
    %3848 = vmatpush1.msra.mxu0 %v3545
    %3849 = vmatprep.subr.mxu0 0.0
    %3850 = vmatpush1.msra.mxu0 %v3546
    %3851 = vmatprep.subr.mxu0 0.0
    %3852 = vmatpush1.msra.mxu0 %v3547
    %3853 = vmatprep.mubr.f32.mxu0 %v3788
    %3854 = vmatmul.mubr.f32.gmra.mrb[0].mxu0 %v3781
    %v3855 = vpop.f32.mrb[0].mxu0
    %v3856 = vadd.f32 0.0, %v3855
    %v3857 = vpop.f32.mrb[0].mxu0
    %3858 = vdwg.mxu0
    %v3859 = vmul.f32 %v3856, 0.125
    %v3860 = vadd.f32 %v3859, 1e-05
    %v3861 = vrsqrt.pop %v3860
    %v3863 = vsel %vm104, %v3861, 0
    %3865 = vmatprep.subr.mxu0 %v3589
    %3866 = vmatpush1.msra.mxu0 %v3588
    %3867 = vmatprep.subr.mxu0 %v3591
    %3868 = vmatpush1.msra.mxu0 %v3590
    %3869 = vmatprep.subr.mxu0 %v3593
    %3870 = vmatpush1.msra.mxu0 %v3592
    %3871 = vmatprep.subr.mxu0 %v3595
    %3872 = vmatpush1.msra.mxu0 %v3594
    %3873 = vmatprep.subr.mxu0 %v3597
    %3874 = vmatpush1.msra.mxu0 %v3596
    %3875 = vmatprep.subr.mxu0 %v3599
    %3876 = vmatpush1.msra.mxu0 %v3598
    %3877 = vmatprep.subr.mxu0 %v3601
    %3878 = vmatpush1.msra.mxu0 %v3600
    %3879 = vmatprep.subr.mxu0 %v3603
    %3880 = vmatpush1.msra.mxu0 %v3602
    %3881 = vmatprep.subr.mxu0 0.0
    %3882 = vmatpush1.msra.mxu0 0.0
    %3883 = vmatprep.subr.mxu0 0.0
    %3884 = vmatpush1.msra.mxu0 0.0
    %3885 = vmatprep.subr.mxu0 0.0
    %3886 = vmatpush1.msra.mxu0 0.0
    %3887 = vmatprep.subr.mxu0 0.0
    %3888 = vmatpush1.msra.mxu0 0.0
    %3889 = vmatprep.subr.mxu0 0.0
    %3890 = vmatpush1.msra.mxu0 0.0
    %3891 = vmatprep.subr.mxu0 0.0
    %3892 = vmatpush1.msra.mxu0 0.0
    %3893 = vmatprep.subr.mxu0 0.0
    %3894 = vmatpush1.msra.mxu0 0.0
    %3895 = vmatprep.subr.mxu0 0.0
    %3896 = vmatpush1.msra.mxu0 0.0
    %3897 = vmatprep.subr.mxu0 0.0
    %3898 = vmatpush1.msra.mxu0 0.0
    %3899 = vmatprep.subr.mxu0 0.0
    %3900 = vmatpush1.msra.mxu0 0.0
    %3901 = vmatprep.subr.mxu0 0.0
    %3902 = vmatpush1.msra.mxu0 0.0
    %3903 = vmatprep.subr.mxu0 0.0
    %3904 = vmatpush1.msra.mxu0 0.0
    %3905 = vmatprep.subr.mxu0 0.0
    %3906 = vmatpush1.msra.mxu0 0.0
    %3907 = vmatprep.subr.mxu0 0.0
    %3908 = vmatpush1.msra.mxu0 0.0
    %3909 = vmatprep.subr.mxu0 0.0
    %3910 = vmatpush1.msra.mxu0 0.0
    %3911 = vmatprep.subr.mxu0 0.0
    %3912 = vmatpush1.msra.mxu0 0.0
    %3913 = vmatprep.subr.mxu0 0.0
    %3914 = vmatpush1.msra.mxu0 0.0
    %3915 = vmatprep.subr.mxu0 0.0
    %3916 = vmatpush1.msra.mxu0 0.0
    %3917 = vmatprep.subr.mxu0 0.0
    %3918 = vmatpush1.msra.mxu0 0.0
    %3919 = vmatprep.subr.mxu0 0.0
    %3920 = vmatpush1.msra.mxu0 0.0
    %3921 = vmatprep.subr.mxu0 0.0
    %3922 = vmatpush1.msra.mxu0 0.0
    %3923 = vmatprep.subr.mxu0 0.0
    %3924 = vmatpush1.msra.mxu0 0.0
    %3925 = vmatprep.subr.mxu0 0.0
    %3926 = vmatpush1.msra.mxu0 0.0
    %3927 = vmatprep.subr.mxu0 0.0
    %3928 = vmatpush1.msra.mxu0 0.0
    %3929 = vmatprep.mubr.f32.mxu0 0.0
    %3930 = vmatmul.mubr.f32.gmra.mrb[0].mxu0 %v3863
    %v3931 = vpop.f32.mrb[0].mxu0
    %v3932 = vadd.f32 0.0, %v3931
    %v3933 = vpop.f32.mrb[0].mxu0
    %v3934 = vadd.f32 0.0, %v3933
    %3935 = vdwg.mxu0
    %v3936 = vlaneseq
    %v3937 = vshrl.u32 %v3936, 7
    %v3938 = vsub.s32 0, %v3937
    %v3939 = vrot.slane %v3932, %v3938
    %v3940 = vlaneseq
    %v3941 = vshrl.u32 %v3940, 7
    %v3942 = vsub.s32 0, %v3941
    %v3943 = vrot.slane %v3934, %v3942
    %v3944 = vmul.f32 %v3771, %v3939
    %v3945 = vmul.f32 %v3772, %v3943
    %v3946 = vmax.f32 %v3944, 0.0
    %v3947 = vmax.f32 %v3945, 0.0
    %3948 = vmatprep.subr.mxu0 0.0
    %3949 = vmatpush1.msra.mxu0 %v3516
    %3950 = vmatprep.subr.mxu0 0.0
    %3951 = vmatpush1.msra.mxu0 %v3517
    %3952 = vmatprep.subr.mxu0 0.0
    %3953 = vmatpush1.msra.mxu0 %v3518
    %3954 = vmatprep.subr.mxu0 0.0
    %3955 = vmatpush1.msra.mxu0 %v3519
    %3956 = vmatprep.subr.mxu0 0.0
    %3957 = vmatpush1.msra.mxu0 %v3520
    %3958 = vmatprep.subr.mxu0 0.0
    %3959 = vmatpush1.msra.mxu0 %v3521
    %3960 = vmatprep.subr.mxu0 0.0
    %3961 = vmatpush1.msra.mxu0 %v3522
    %3962 = vmatprep.subr.mxu0 0.0
    %3963 = vmatpush1.msra.mxu0 %v3523
    %3964 = vmatprep.subr.mxu0 0.0
    %3965 = vmatpush1.msra.mxu0 %v3524
    %3966 = vmatprep.subr.mxu0 0.0
    %3967 = vmatpush1.msra.mxu0 %v3525
    %3968 = vmatprep.subr.mxu0 0.0
    %3969 = vmatpush1.msra.mxu0 %v3526
    %3970 = vmatprep.subr.mxu0 0.0
    %3971 = vmatpush1.msra.mxu0 %v3527
    %3972 = vmatprep.subr.mxu0 0.0
    %3973 = vmatpush1.msra.mxu0 %v3528
    %3974 = vmatprep.subr.mxu0 0.0
    %3975 = vmatpush1.msra.mxu0 %v3529
    %3976 = vmatprep.subr.mxu0 0.0
    %3977 = vmatpush1.msra.mxu0 %v3530
    %3978 = vmatprep.subr.mxu0 0.0
    %3979 = vmatpush1.msra.mxu0 %v3531
    %3980 = vmatprep.subr.mxu0 0.0
    %3981 = vmatpush1.msra.mxu0 %v3532
    %3982 = vmatprep.subr.mxu0 0.0
    %3983 = vmatpush1.msra.mxu0 %v3533
    %3984 = vmatprep.subr.mxu0 0.0
    %3985 = vmatpush1.msra.mxu0 %v3534
    %3986 = vmatprep.subr.mxu0 0.0
    %3987 = vmatpush1.msra.mxu0 %v3535
    %3988 = vmatprep.subr.mxu0 0.0
    %3989 = vmatpush1.msra.mxu0 %v3536
    %3990 = vmatprep.subr.mxu0 0.0
    %3991 = vmatpush1.msra.mxu0 %v3537
    %3992 = vmatprep.subr.mxu0 0.0
    %3993 = vmatpush1.msra.mxu0 %v3538
    %3994 = vmatprep.subr.mxu0 0.0
    %3995 = vmatpush1.msra.mxu0 %v3539
    %3996 = vmatprep.subr.mxu0 0.0
    %3997 = vmatpush1.msra.mxu0 %v3540
    %3998 = vmatprep.subr.mxu0 0.0
    %3999 = vmatpush1.msra.mxu0 %v3541
    %4000 = vmatprep.subr.mxu0 0.0
    %4001 = vmatpush1.msra.mxu0 %v3542
    %4002 = vmatprep.subr.mxu0 0.0
    %4003 = vmatpush1.msra.mxu0 %v3543
    %4004 = vmatprep.subr.mxu0 0.0
    %4005 = vmatpush1.msra.mxu0 %v3544
    %4006 = vmatprep.subr.mxu0 0.0
    %4007 = vmatpush1.msra.mxu0 %v3545
    %4008 = vmatprep.subr.mxu0 0.0
    %4009 = vmatpush1.msra.mxu0 %v3546
    %4010 = vmatprep.subr.mxu0 0.0
    %4011 = vmatpush1.msra.mxu0 %v3547
    %4012 = vmatprep.mubr.f32.mxu0 %v3947
    %4013 = vmatmul.mubr.f32.gmra.mrb[0].mxu0 %v3946
    %v4014 = vpop.f32.mrb[0].mxu0
    %v4015 = vadd.f32 0.0, %v4014
    %v4016 = vpop.f32.mrb[0].mxu0
    %4017 = vdwg.mxu0
    %v4018 = vmul.f32 %v4015, 0.25
    %vm4019 = vcmask 517120
    %4020 = vst.msk [vmem:[#allocation11] sm:$0x3] %vm4019, %v4018
    // Predicated region
    $region42: #{_lambda_.1} parent=1 // pred_check
      _
    $region43: #{_lambda_.1} parent=1 // pred_check_branch
      %4022 = sbr.rel (0) target = $region45
    $region44: #{_lambda_.1} parent=1 // pred_region
      %s4024 = ssub.s32 32, 32
      %4025 = vsyncadd [#allocation4], %s4024
      %s4027 = sshll.u32 [#allocation11], 4
      %s4028 = int_to_ptr.vmem [resolvable:$true] %s4027
      %4030 = dma.vmem_to_hbm [thread:$0]  %s4028, 32, %s5, [#allocation4]
    $region45: #{_lambda_.1} parent=1 // pred_fallthru
      _
    // Predicated region
    $region46: #{_lambda_.1} parent=1 // pred_check
      _
    $region47: #{_lambda_.1} parent=1 // pred_check_branch
      %4032 = sbr.rel (0) target = $region49
    $region48: #{_lambda_.1} parent=1 // pred_region
      %4033 = dma.done [#allocation4], 32
    $region49: #{_lambda_.1} parent=1 // pred_fallthru
      _
    %4034 = vsyncpa [#allocation3], 1
    %4035 = vsyncpa [#allocation6], 1
    %4036 = vsyncpa [#allocation9], 1
    %4037 = vsyncpa [#allocation4], 1

</llo_original>
